<compile_context>
chip_gen: v5e
topology: v5e:2x2
jax: 0.10.0
libtpu: 0.0.40
codegen_flags: <defaults>
</compile_context>

<pallas_src>
import jax
import jax.numpy as jnp
from jax.experimental import pallas as pl
from jax.experimental.pallas import tpu as pltpu


_LANE = 128  # TPU vreg lane width


def _round_up(n: int, m: int) -> int:
    return ((n + m - 1) // m) * m


def linear_kernel(x_ref, w_ref, b_ref, o_ref):
    """One batch tile of y = x @ W.T + b, written lane-dense.

    x_ref: (TILE_B, K)    VMEM  -- natural row-major batch tile (contiguous DMA)
    w_ref: (1, K)         VMEM  -- torch-layout weight row, constant across grid
    b_ref: (1, 1)         SMEM  -- bias scalar
    o_ref: (1, 1, TILE_B) VMEM  -- batch mapped onto the 128-lane axis
    """
    # (1, K) x (TILE_B, K)^T -> (1, TILE_B): does the K=10 reduction and puts
    # the batch dimension on lanes in a single op (hidden under the HBM DMA).
    acc = jax.lax.dot_general(
        w_ref[...], x_ref[...],
        dimension_numbers=(((1,), (1,)), ((), ())),
        preferred_element_type=jnp.float32,
    )
    # Scalar bias broadcast straight from SMEM; full-width (unmasked) store.
    o_ref[0] = (acc + b_ref[0, 0]).astype(o_ref.dtype)


def simple_net_forward(x, w, b, *, tile_b: int = 8192):
    """SimpleNet forward: y = x @ W.T + b.

    x: (B, 10) f32, w: (1, 10) f32 (torch (out, in) layout), b: (1,) f32.
    Returns (B, 1) f32.
    """
    B, K = x.shape
    N, K_w = w.shape
    assert K_w == K and N == 1, "SimpleNet is Linear(10 -> 1)"

    x = x.astype(jnp.float32)
    w = w.astype(jnp.float32)
    b2 = jnp.asarray(b, jnp.float32).reshape(1, 1)

    # Batch tile: multiple of the 128-lane width, no bigger than (padded) B.
    # 8192 rows x (10 -> 128 lane-padded) f32 = 4 MiB per pipeline buffer, so
    # the double-buffered footprint (~8.5 MiB) fits the default scoped-VMEM
    # limit on v5e (16 MiB), v6e (32 MiB) and v7x (32 of 64 MiB physical).
    # Re-sweep per generation; raise vmem_limit_bytes for larger tiles.
    tile = _round_up(max(1, tile_b), _LANE)
    tile = min(tile, _round_up(B, _LANE))
    b_padded = _round_up(B, tile)
    if b_padded != B:
        x = jnp.pad(x, ((0, b_padded - B), (0, 0)))
    grid_b = b_padded // tile

    out = pl.pallas_call(
        linear_kernel,
        out_shape=jax.ShapeDtypeStruct((grid_b, 1, tile), jnp.float32),
        grid=(grid_b,),
        in_specs=[
            # Batch tile of x: contiguous HBM read, pipelined across the grid.
            pl.BlockSpec((tile, K), lambda i: (i, 0)),
            # Weight row: constant block index -> copied into VMEM only once.
            pl.BlockSpec((1, K), lambda i: (0, 0)),
            # Bias: whole (1, 1) array lives in SMEM, read as a scalar.
            pl.BlockSpec(memory_space=pltpu.MemorySpace.SMEM),
        ],
        # Lane-dense output: each grid step owns one (1, tile) row slab.
        out_specs=pl.BlockSpec((1, 1, tile), lambda i: (i, 0, 0)),
        compiler_params=pltpu.CompilerParams(
            # Independent batch tiles: shard across TensorCores (2 on v7x).
            dimension_semantics=("parallel",),
        ),
    )(x, w, b2)

    # (grid_b, 1, tile) is batch-contiguous -> free view back to (B, 1).
    return out.reshape(b_padded, 1)[:B]


if __name__ == "__main__":
    key = jax.random.PRNGKey(0)
    kx, kw, kb = jax.random.split(key, 3)

    IN, OUT = 10, 1

    # torch.nn.Linear default init: U(-1/sqrt(in), +1/sqrt(in)).
    bound = 1.0 / jnp.sqrt(jnp.float32(IN))
    w = jax.random.uniform(kw, (OUT, IN), jnp.float32, -bound, bound)  # (out, in)
    b = jax.random.uniform(kb, (OUT,), jnp.float32, -bound, bound)

    # Main check: batch big enough to exercise the tiled, pipelined grid
    # (2 grid steps at the default 8192-row tile), still tiny in bytes.
    B = 16384
    x = jax.random.normal(kx, (B, IN), jnp.float32)
    out = jax.block_until_ready(simple_net_forward(x, w, b))
    ref = x @ w.T + b
    assert out.shape == (B, OUT)
    assert jnp.allclose(out, ref, atol=1e-5, rtol=1e-5)

    # The literal shipped shape (B=8): correct via lane padding, though at this
    # size a standalone Pallas kernel should not be used in practice (launch +
    # grid-step overhead dwarfs ~160 flops -- fuse it or leave it to XLA).
    x_small = jax.random.normal(kx, (8, IN), jnp.float32)
    out_small = jax.block_until_ready(simple_net_forward(x_small, w, b))
    ref_small = x_small @ w.T + b
    assert out_small.shape == (8, OUT)
    assert jnp.allclose(out_small, ref_small, atol=1e-5, rtol=1e-5)

    print("KERNEL_OK")
</pallas_src>

<mosaic_0001>
module attributes {stable_mosaic.version = 11 : i64} {
  func.func @linear_kernel(%arg0: i32, %arg1: memref<8192x10xf32, #tpu.memory_space<vmem>>, %arg2: memref<1x10xf32, #tpu.memory_space<vmem>>, %arg3: memref<1x1xf32, #tpu.memory_space<smem>>, %arg4: memref<1x1x8192xf32, #tpu.memory_space<vmem>>) attributes {dimension_semantics = [#tpu.dimension_semantics<parallel>], iteration_bounds = array<i64: 2>, scalar_prefetch = 0 : i64, scratch_operands = 0 : i64, tpu.core_type = #tpu.core_type<tc>, window_params = [{transform_indices = @transform_0, window_bounds = array<i64: 8192, 10>}, {pipeline_mode = #tpu.pipeline_mode<synchronous>, transform_indices = @transform_1, window_bounds = array<i64: 1, 10>}, {transform_indices = @transform_2, window_bounds = array<i64: 1, 1>}, {transform_indices = @transform_3, window_bounds = array<i64: 1, 1, 8192>}]} {
    %c0 = arith.constant 0 : index
    %c0_0 = arith.constant 0 : index
    %0 = vector.load %arg2[%c0, %c0_0] : memref<1x10xf32, #tpu.memory_space<vmem>>, vector<1x10xf32>
    %c0_1 = arith.constant 0 : index
    %c0_2 = arith.constant 0 : index
    %1 = vector.load %arg1[%c0_1, %c0_2] : memref<8192x10xf32, #tpu.memory_space<vmem>>, vector<8192x10xf32>
    %cst = arith.constant dense<0.000000e+00> : vector<1x8192xf32>
    %2 = tpu.matmul %0, %1, %cst {dimension_numbers = #tpu.dot_dimension_numbers<[1], [1], [0], [0], [0, 0, 1, 0], [], []>} : vector<1x10xf32>, vector<8192x10xf32>, vector<1x8192xf32> -> vector<1x8192xf32>
    %c0_3 = arith.constant 0 : index
    %c0_4 = arith.constant 0 : index
    %3 = memref.load %arg3[%c0_3, %c0_4] : memref<1x1xf32, #tpu.memory_space<smem>>
    %4 = vector.broadcast %3 : f32 to vector<1x8192xf32>
    %5 = arith.addf %2, %4 : vector<1x8192xf32>
    %c0_5 = arith.constant 0 : index
    %c0_6 = arith.constant 0 : index
    %c0_7 = arith.constant 0 : index
    %6 = vector.load %arg4[%c0_5, %c0_6, %c0_7] : memref<1x1x8192xf32, #tpu.memory_space<vmem>>, vector<1x1x8192xf32>
    %7 = vector.shape_cast %6 : vector<1x1x8192xf32> to vector<1x8192xf32>
    %8 = vector.shape_cast %5 : vector<1x8192xf32> to vector<1x1x8192xf32>
    tpu.vector_store %arg4[%c0_5, %c0_6, %c0_7], %8 {strides = array<i32>} : memref<1x1x8192xf32, #tpu.memory_space<vmem>>, vector<1x1x8192xf32>,
    return
  }
  func.func @transform_0(%arg0: i32) -> (i32, i32) {
    %c0_i32 = arith.constant 0 : i32
    %c0_i32_0 = arith.constant 0 : i32
    return %arg0, %c0_i32 : i32, i32
  }
  func.func @transform_1(%arg0: i32) -> (i32, i32) {
    %c0_i32 = arith.constant 0 : i32
    %c0_i32_0 = arith.constant 0 : i32
    %c0_i32_1 = arith.constant 0 : i32
    return %c0_i32, %c0_i32_0 : i32, i32
  }
  func.func @transform_2(%arg0: i32) -> (i32, i32) {
    %c0_i32 = arith.constant 0 : i32
    %c0_i32_0 = arith.constant 0 : i32
    %c0_i32_1 = arith.constant 0 : i32
    return %c0_i32, %c0_i32_0 : i32, i32
  }
  func.func @transform_3(%arg0: i32) -> (i32, i32, i32) {
    %c0_i32 = arith.constant 0 : i32
    %c0_i32_0 = arith.constant 0 : i32
    %c0_i32_1 = arith.constant 0 : i32
    return %arg0, %c0_i32, %c0_i32_0 : i32, i32, i32
  }
}

</mosaic_0001>

<llo_original>
// kernel: tpu_custom_call.1
$region0: #{tpu_custom_call.1}
  #allocation0 [shape = 'u32[]', space=smem, size = 0x4, offset = 0x4, fixed_abs, tag = 'smem constant byte address 0x4 - core index']
  #allocation1 [shape = 'u32[72,128]{1,0:T(1,128)}', space=vmem, size = 0x9000, scoped, tag = 'internal scratch']
  #allocation2 [shape = 'f32[1,1]{1,0:T(1,128)S(6)}', space=smem, size = 0x200, scoped, tag = 'scoped memory for tpu_custom_call.1']
  %s0 = inlined_call_operand.vmem [shape: f32[16384,10], index: 0, kind: input, shape index: {}]
  %s1 = inlined_call_operand.vmem [shape: f32[1,10], index: 1, kind: input, shape index: {}]
  %s2 = inlined_call_operand.<no memory space> [shape: f32[1,1], index: 2, kind: input, shape index: {}]
  %s3 = inlined_call_operand.hbm [shape: f32[2,1,8192], index: 3, kind: output, shape index: {}]
  %s4 = sld [smem:[#allocation0]]
  $region45: #{tpu_custom_call.1} parent=0
    _
  %s6 = ssub.s32 1, %s4
  %s7 = scalar_select 0, %s6, %s4
  %8 = sst [smem:[#allocation2]] %s2
  $region1: #{tpu_custom_call.1} parent=0
    #allocation3 [shape = 'u8[65536]{0}', space=vmem, size = 0x10000, scoped, tag = 'output window, operand 0']
    #allocation4 [shape = 's32[2]{0}', space=sflag, size = 0x8, scoped, tag = 'scoped memory for tpu_custom_call.1']
    %9 = vsyncpa [#allocation4], 0
    %s10 = scalar_lea.sflag [#allocation4], 1
    %11 = vsyncpa %s10, 0
    loop: start=0, step=1, limit=4
    $region2: #{tpu_custom_call.1} parent=1 // loop_pre_header
      _
    $region3: #{tpu_custom_call.1} parent=1 // loop_header
      %s13 = sphi 0, %s17
      %p14 = scmp.ge.s32.totalorder %s13, 4
      %s23 = sphi 0, %s25
      %s26 = sphi 0, %s23
      %s27 = sphi 0, %s26
      %s43 = sphi 0, %s27
      %s47 = sphi 0, %s47
      %s49 = sphi 0, %s47
      %s50 = sphi 0, %s49
      %s64 = sphi 0, %s50
      %s68 = sphi 0, %s68
      %s70 = sphi 0, %s68
      %s71 = sphi 0, %s70
      %s85 = sphi 0, %s71
      %s91 = sphi 0, %s93
      %s94 = sphi 0, %s91
      %s95 = sphi 0, %s94
      %s111 = sphi 0, %s95
    $region4: #{tpu_custom_call.1} parent=1 // loop_header_branch
      %16 = sbr.rel (%p14) target = $region8
    $region5: #{tpu_custom_call.1} parent=1 // loop_body
      %s18 = ssub.s32 %s13, 1
      %s19 = ssub.s32 %s13, 2
      %s20 = sadd.s32 %s13, 1
      %s21 = ssub.s32 %s13, %s20
      %p22 = scmp.eq.s32.totalorder %s21, 0
      %s24 = sadd.s32 %s23, 1
      %s25 = scalar_select %p22, %s23, %s24
      %p28 = pneg %p22
      %p29 = scmp.eq.s32.totalorder %s13, 1
      %p30 = por %p28, %p29
      %p31 = scmp.ne.s32.totalorder %s23, %s26
      %p32 = scmp.eq.s32.totalorder %s13, 0
      %p33 = por %p31, %p32
      %p34 = scmp.ne.s32.totalorder %s23, %s26
      %p35 = scmp.eq.s32.totalorder %s18, 1
      %p36 = por %p34, %p35
      %p37 = scmp.ne.s32.totalorder %s26, %s27
      %p38 = scmp.eq.s32.totalorder %s18, 0
      %p39 = por %p37, %p38
      %p40 = scmp.ne.s32.totalorder %s26, %s27
      %p41 = scmp.eq.s32.totalorder %s19, 1
      %p42 = por %p40, %p41
      %p44 = scmp.ne.s32.totalorder %s27, %s43
      %p45 = scmp.eq.s32.totalorder %s19, 0
      %p46 = por %p44, %p45
      %s48 = sadd.s32 %s47, 1
      %p51 = scmp.eq.s32.totalorder %s13, 1
      %p52 = scmp.ne.s32.totalorder %s47, %s49
      %p53 = scmp.eq.s32.totalorder %s13, 0
      %p54 = por %p52, %p53
      %p55 = scmp.ne.s32.totalorder %s47, %s49
      %p56 = scmp.eq.s32.totalorder %s18, 1
      %p57 = por %p55, %p56
      %p58 = scmp.ne.s32.totalorder %s49, %s50
      %p59 = scmp.eq.s32.totalorder %s18, 0
      %p60 = por %p58, %p59
      %p61 = scmp.ne.s32.totalorder %s49, %s50
      %p62 = scmp.eq.s32.totalorder %s19, 1
      %p63 = por %p61, %p62
      %p65 = scmp.ne.s32.totalorder %s50, %s64
      %p66 = scmp.eq.s32.totalorder %s19, 0
      %p67 = por %p65, %p66
      %s69 = sadd.s32 %s68, 1
      %p72 = scmp.eq.s32.totalorder %s13, 1
      %p73 = scmp.ne.s32.totalorder %s68, %s70
      %p74 = scmp.eq.s32.totalorder %s13, 0
      %p75 = por %p73, %p74
      %p76 = scmp.ne.s32.totalorder %s68, %s70
      %p77 = scmp.eq.s32.totalorder %s18, 1
      %p78 = por %p76, %p77
      %p79 = scmp.ne.s32.totalorder %s70, %s71
      %p80 = scmp.eq.s32.totalorder %s18, 0
      %p81 = por %p79, %p80
      %p82 = scmp.ne.s32.totalorder %s70, %s71
      %p83 = scmp.eq.s32.totalorder %s19, 1
      %p84 = por %p82, %p83
      %p86 = scmp.ne.s32.totalorder %s71, %s85
      %p87 = scmp.eq.s32.totalorder %s19, 0
      %p88 = por %p86, %p87
      %s89 = ssub.s32 %s13, %s20
      %p90 = scmp.eq.s32.totalorder %s89, 0
      %s92 = sadd.s32 %s91, 1
      %s93 = scalar_select %p90, %s91, %s92
      %p96 = pneg %p90
      %p97 = scmp.eq.s32.totalorder %s13, 1
      %p98 = por %p96, %p97
      %p99 = scmp.ne.s32.totalorder %s91, %s94
      %p100 = scmp.eq.s32.totalorder %s13, 0
      %p101 = por %p99, %p100
      %p102 = scmp.ne.s32.totalorder %s91, %s94
      %p103 = scmp.eq.s32.totalorder %s18, 1
      %p104 = por %p102, %p103
      %p105 = scmp.ne.s32.totalorder %s94, %s95
      %p106 = scmp.eq.s32.totalorder %s18, 0
      %p107 = por %p105, %p106
      %p108 = scmp.ne.s32.totalorder %s94, %s95
      %p109 = scmp.eq.s32.totalorder %s19, 1
      %p110 = por %p108, %p109
      %p112 = scmp.ne.s32.totalorder %s95, %s111
      %p113 = scmp.eq.s32.totalorder %s19, 0
      %p114 = por %p112, %p113
      %p115 = scmp.le.s32.totalorder 1, %s13
      %p116 = scmp.lt.s32.totalorder %s13, 3
      %p117 = pnand %p115, %p116
      %p118 = pneg %p117
      // Predicated region
      $region9: #{tpu_custom_call.1} parent=5 // pred_check
        _
      $region10: #{tpu_custom_call.1} parent=5 // pred_check_branch
        %120 = sbr.rel (%p117) target = $region12
      $region11: #{tpu_custom_call.1} parent=5 // pred_region
        %s121 = ssub.s32 %s13, 1
        // Predicated region
        $region13: #{tpu_custom_call.1} parent=11 // pred_check
          %p122 = pneg %p60
        $region14: #{tpu_custom_call.1} parent=11 // pred_check_branch
          %124 = sbr.rel (%p122) target = $region16
        $region15: #{tpu_custom_call.1} parent=11 // pred_region
          _
        $region16: #{tpu_custom_call.1} parent=11 // pred_fallthru
          _
        // Predicated region
        $region17: #{tpu_custom_call.1} parent=11 // pred_check
          %p125 = pneg %p81
        $region18: #{tpu_custom_call.1} parent=11 // pred_check_branch
          %127 = sbr.rel (%p125) target = $region20
        $region19: #{tpu_custom_call.1} parent=11 // pred_region
          _
        $region20: #{tpu_custom_call.1} parent=11 // pred_fallthru
          _
      $region12: #{tpu_custom_call.1} parent=5 // pred_fallthru
        _
      %p128 = scmp.lt.s32.totalorder %s13, 2
      // Predicated region
      $region21: #{tpu_custom_call.1} parent=5 // pred_check
        %p129 = pneg %p128
      $region22: #{tpu_custom_call.1} parent=5 // pred_check_branch
        %131 = sbr.rel (%p129) target = $region24
      $region23: #{tpu_custom_call.1} parent=5 // pred_region
        // Predicated region
        $region25: #{tpu_custom_call.1} parent=23 // pred_check
          %p132 = pneg %p33
        $region26: #{tpu_custom_call.1} parent=23 // pred_check_branch
          %134 = sbr.rel (%p132) target = $region28
        $region27: #{tpu_custom_call.1} parent=23 // pred_region
          %s135 = smul.u32 1024, %s13
          %p136 = scmp.lt.s32.totalorder %s135, 2047
          %s137 = scalar_select %p136, %s135, 2047
          %s138 = smul.addr %s137, 8
          %s139 = scalar_lea.vmem %s0, %s138
          %s140 = smul.u32 1024, %s13
        $region28: #{tpu_custom_call.1} parent=23 // pred_fallthru
          _
      $region24: #{tpu_custom_call.1} parent=5 // pred_fallthru
        _
      %p141 = scmp.le.s32.totalorder 1, %s13
      %p142 = scmp.lt.s32.totalorder %s13, 3
      %p143 = pnand %p141, %p142
      %p144 = pneg %p143
      // Predicated region
      $region29: #{tpu_custom_call.1} parent=5 // pred_check
        _
      $region30: #{tpu_custom_call.1} parent=5 // pred_check_branch
        %146 = sbr.rel (%p143) target = $region32
      $region31: #{tpu_custom_call.1} parent=5 // pred_region
        %s147 = ssub.s32 %s13, 1
        %s148 = smul.u32 1024, %s18
        %p149 = scmp.lt.s32.totalorder %s148, 2047
        %s150 = scalar_select %p149, %s148, 2047
        %s151 = smul.addr %s150, 8
        %s152 = scalar_lea.vmem %s0, %s151
        %p153 = pneg %p39
        %p154 = pneg %p36
        %p155 = pneg %p60
        %p156 = pneg %p57
        %p157 = pneg %p81
        %p158 = pneg %p78
        %p159 = pneg %p107
        %p160 = pneg %p104
        %s161 = sand.u32 %s94, 1
        %s162 = scalar_lea.sflag [#allocation4], %s161
        %s163 = sand.u32 %s94, 1
        %s164 = smul.addr %s163, 64
        %s165 = scalar_lea.vmem [#allocation3], %s164
        %s166 = smul.u32 1024, %s18
        %p167 = scmp.lt.s32.totalorder %s166, 2047
        %s168 = scalar_select %p167, %s166, 2047
        %s169 = smul.addr %s168, 8
        %s170 = scalar_lea.vmem %s0, %s169
        %s171 = smul.u32 1024, %s18
        %v172 = vld [vmem:[%s1] sm:$0x1]
        %v173 = vld [vmem:[%s170] sm:$0xff]
        %v174 = vld [vmem:[%s170 + $0x8] sm:$0xff]
        %v175 = vld [vmem:[%s170 + $0x10] sm:$0xff]
        %v176 = vld [vmem:[%s170 + $0x18] sm:$0xff]
        %v177 = vld [vmem:[%s170 + $0x20] sm:$0xff]
        %v178 = vld [vmem:[%s170 + $0x28] sm:$0xff]
        %v179 = vld [vmem:[%s170 + $0x30] sm:$0xff]
        %v180 = vld [vmem:[%s170 + $0x38] sm:$0xff]
        %v181 = vld [vmem:[%s170 + $0x40] sm:$0xff]
        %v182 = vld [vmem:[%s170 + $0x48] sm:$0xff]
        %v183 = vld [vmem:[%s170 + $0x50] sm:$0xff]
        %v184 = vld [vmem:[%s170 + $0x58] sm:$0xff]
        %v185 = vld [vmem:[%s170 + $0x60] sm:$0xff]
        %v186 = vld [vmem:[%s170 + $0x68] sm:$0xff]
        %v187 = vld [vmem:[%s170 + $0x70] sm:$0xff]
        %v188 = vld [vmem:[%s170 + $0x78] sm:$0xff]
        %v189 = vld [vmem:[%s170 + $0x80] sm:$0xff]
        %v190 = vld [vmem:[%s170 + $0x88] sm:$0xff]
        %v191 = vld [vmem:[%s170 + $0x90] sm:$0xff]
        %v192 = vld [vmem:[%s170 + $0x98] sm:$0xff]
        %v193 = vld [vmem:[%s170 + $0xa0] sm:$0xff]
        %v194 = vld [vmem:[%s170 + $0xa8] sm:$0xff]
        %v195 = vld [vmem:[%s170 + $0xb0] sm:$0xff]
        %v196 = vld [vmem:[%s170 + $0xb8] sm:$0xff]
        %v197 = vld [vmem:[%s170 + $0xc0] sm:$0xff]
        %v198 = vld [vmem:[%s170 + $0xc8] sm:$0xff]
        %v199 = vld [vmem:[%s170 + $0xd0] sm:$0xff]
        %v200 = vld [vmem:[%s170 + $0xd8] sm:$0xff]
        %v201 = vld [vmem:[%s170 + $0xe0] sm:$0xff]
        %v202 = vld [vmem:[%s170 + $0xe8] sm:$0xff]
        %v203 = vld [vmem:[%s170 + $0xf0] sm:$0xff]
        %v204 = vld [vmem:[%s170 + $0xf8] sm:$0xff]
        %v205 = vld [vmem:[%s170 + $0x100] sm:$0xff]
        %v206 = vld [vmem:[%s170 + $0x108] sm:$0xff]
        %v207 = vld [vmem:[%s170 + $0x110] sm:$0xff]
        %v208 = vld [vmem:[%s170 + $0x118] sm:$0xff]
        %v209 = vld [vmem:[%s170 + $0x120] sm:$0xff]
        %v210 = vld [vmem:[%s170 + $0x128] sm:$0xff]
        %v211 = vld [vmem:[%s170 + $0x130] sm:$0xff]
        %v212 = vld [vmem:[%s170 + $0x138] sm:$0xff]
        %v213 = vld [vmem:[%s170 + $0x140] sm:$0xff]
        %v214 = vld [vmem:[%s170 + $0x148] sm:$0xff]
        %v215 = vld [vmem:[%s170 + $0x150] sm:$0xff]
        %v216 = vld [vmem:[%s170 + $0x158] sm:$0xff]
        %v217 = vld [vmem:[%s170 + $0x160] sm:$0xff]
        %v218 = vld [vmem:[%s170 + $0x168] sm:$0xff]
        %v219 = vld [vmem:[%s170 + $0x170] sm:$0xff]
        %v220 = vld [vmem:[%s170 + $0x178] sm:$0xff]
        %v221 = vld [vmem:[%s170 + $0x180] sm:$0xff]
        %v222 = vld [vmem:[%s170 + $0x188] sm:$0xff]
        %v223 = vld [vmem:[%s170 + $0x190] sm:$0xff]
        %v224 = vld [vmem:[%s170 + $0x198] sm:$0xff]
        %v225 = vld [vmem:[%s170 + $0x1a0] sm:$0xff]
        %v226 = vld [vmem:[%s170 + $0x1a8] sm:$0xff]
        %v227 = vld [vmem:[%s170 + $0x1b0] sm:$0xff]
        %v228 = vld [vmem:[%s170 + $0x1b8] sm:$0xff]
        %v229 = vld [vmem:[%s170 + $0x1c0] sm:$0xff]
        %v230 = vld [vmem:[%s170 + $0x1c8] sm:$0xff]
        %v231 = vld [vmem:[%s170 + $0x1d0] sm:$0xff]
        %v232 = vld [vmem:[%s170 + $0x1d8] sm:$0xff]
        %v233 = vld [vmem:[%s170 + $0x1e0] sm:$0xff]
        %v234 = vld [vmem:[%s170 + $0x1e8] sm:$0xff]
        %v235 = vld [vmem:[%s170 + $0x1f0] sm:$0xff]
        %v236 = vld [vmem:[%s170 + $0x1f8] sm:$0xff]
        %v237 = vld [vmem:[%s170 + $0x200] sm:$0xff]
        %v238 = vld [vmem:[%s170 + $0x208] sm:$0xff]
        %v239 = vld [vmem:[%s170 + $0x210] sm:$0xff]
        %v240 = vld [vmem:[%s170 + $0x218] sm:$0xff]
        %v241 = vld [vmem:[%s170 + $0x220] sm:$0xff]
        %v242 = vld [vmem:[%s170 + $0x228] sm:$0xff]
        %v243 = vld [vmem:[%s170 + $0x230] sm:$0xff]
        %v244 = vld [vmem:[%s170 + $0x238] sm:$0xff]
        %v245 = vld [vmem:[%s170 + $0x240] sm:$0xff]
        %v246 = vld [vmem:[%s170 + $0x248] sm:$0xff]
        %v247 = vld [vmem:[%s170 + $0x250] sm:$0xff]
        %v248 = vld [vmem:[%s170 + $0x258] sm:$0xff]
        %v249 = vld [vmem:[%s170 + $0x260] sm:$0xff]
        %v250 = vld [vmem:[%s170 + $0x268] sm:$0xff]
        %v251 = vld [vmem:[%s170 + $0x270] sm:$0xff]
        %v252 = vld [vmem:[%s170 + $0x278] sm:$0xff]
        %v253 = vld [vmem:[%s170 + $0x280] sm:$0xff]
        %v254 = vld [vmem:[%s170 + $0x288] sm:$0xff]
        %v255 = vld [vmem:[%s170 + $0x290] sm:$0xff]
        %v256 = vld [vmem:[%s170 + $0x298] sm:$0xff]
        %v257 = vld [vmem:[%s170 + $0x2a0] sm:$0xff]
        %v258 = vld [vmem:[%s170 + $0x2a8] sm:$0xff]
        %v259 = vld [vmem:[%s170 + $0x2b0] sm:$0xff]
        %v260 = vld [vmem:[%s170 + $0x2b8] sm:$0xff]
        %v261 = vld [vmem:[%s170 + $0x2c0] sm:$0xff]
        %v262 = vld [vmem:[%s170 + $0x2c8] sm:$0xff]
        %v263 = vld [vmem:[%s170 + $0x2d0] sm:$0xff]
        %v264 = vld [vmem:[%s170 + $0x2d8] sm:$0xff]
        %v265 = vld [vmem:[%s170 + $0x2e0] sm:$0xff]
        %v266 = vld [vmem:[%s170 + $0x2e8] sm:$0xff]
        %v267 = vld [vmem:[%s170 + $0x2f0] sm:$0xff]
        %v268 = vld [vmem:[%s170 + $0x2f8] sm:$0xff]
        %v269 = vld [vmem:[%s170 + $0x300] sm:$0xff]
        %v270 = vld [vmem:[%s170 + $0x308] sm:$0xff]
        %v271 = vld [vmem:[%s170 + $0x310] sm:$0xff]
        %v272 = vld [vmem:[%s170 + $0x318] sm:$0xff]
        %v273 = vld [vmem:[%s170 + $0x320] sm:$0xff]
        %v274 = vld [vmem:[%s170 + $0x328] sm:$0xff]
        %v275 = vld [vmem:[%s170 + $0x330] sm:$0xff]
        %v276 = vld [vmem:[%s170 + $0x338] sm:$0xff]
        %v277 = vld [vmem:[%s170 + $0x340] sm:$0xff]
        %v278 = vld [vmem:[%s170 + $0x348] sm:$0xff]
        %v279 = vld [vmem:[%s170 + $0x350] sm:$0xff]
        %v280 = vld [vmem:[%s170 + $0x358] sm:$0xff]
        %v281 = vld [vmem:[%s170 + $0x360] sm:$0xff]
        %v282 = vld [vmem:[%s170 + $0x368] sm:$0xff]
        %v283 = vld [vmem:[%s170 + $0x370] sm:$0xff]
        %v284 = vld [vmem:[%s170 + $0x378] sm:$0xff]
        %v285 = vld [vmem:[%s170 + $0x380] sm:$0xff]
        %v286 = vld [vmem:[%s170 + $0x388] sm:$0xff]
        %v287 = vld [vmem:[%s170 + $0x390] sm:$0xff]
        %v288 = vld [vmem:[%s170 + $0x398] sm:$0xff]
        %v289 = vld [vmem:[%s170 + $0x3a0] sm:$0xff]
        %v290 = vld [vmem:[%s170 + $0x3a8] sm:$0xff]
        %v291 = vld [vmem:[%s170 + $0x3b0] sm:$0xff]
        %v292 = vld [vmem:[%s170 + $0x3b8] sm:$0xff]
        %v293 = vld [vmem:[%s170 + $0x3c0] sm:$0xff]
        %v294 = vld [vmem:[%s170 + $0x3c8] sm:$0xff]
        %v295 = vld [vmem:[%s170 + $0x3d0] sm:$0xff]
        %v296 = vld [vmem:[%s170 + $0x3d8] sm:$0xff]
        %v297 = vld [vmem:[%s170 + $0x3e0] sm:$0xff]
        %v298 = vld [vmem:[%s170 + $0x3e8] sm:$0xff]
        %v299 = vld [vmem:[%s170 + $0x3f0] sm:$0xff]
        %v300 = vld [vmem:[%s170 + $0x3f8] sm:$0xff]
        %v301 = vld [vmem:[%s170 + $0x400] sm:$0xff]
        %v302 = vld [vmem:[%s170 + $0x408] sm:$0xff]
        %v303 = vld [vmem:[%s170 + $0x410] sm:$0xff]
        %v304 = vld [vmem:[%s170 + $0x418] sm:$0xff]
        %v305 = vld [vmem:[%s170 + $0x420] sm:$0xff]
        %v306 = vld [vmem:[%s170 + $0x428] sm:$0xff]
        %v307 = vld [vmem:[%s170 + $0x430] sm:$0xff]
        %v308 = vld [vmem:[%s170 + $0x438] sm:$0xff]
        %v309 = vld [vmem:[%s170 + $0x440] sm:$0xff]
        %v310 = vld [vmem:[%s170 + $0x448] sm:$0xff]
        %v311 = vld [vmem:[%s170 + $0x450] sm:$0xff]
        %v312 = vld [vmem:[%s170 + $0x458] sm:$0xff]
        %v313 = vld [vmem:[%s170 + $0x460] sm:$0xff]
        %v314 = vld [vmem:[%s170 + $0x468] sm:$0xff]
        %v315 = vld [vmem:[%s170 + $0x470] sm:$0xff]
        %v316 = vld [vmem:[%s170 + $0x478] sm:$0xff]
        %v317 = vld [vmem:[%s170 + $0x480] sm:$0xff]
        %v318 = vld [vmem:[%s170 + $0x488] sm:$0xff]
        %v319 = vld [vmem:[%s170 + $0x490] sm:$0xff]
        %v320 = vld [vmem:[%s170 + $0x498] sm:$0xff]
        %v321 = vld [vmem:[%s170 + $0x4a0] sm:$0xff]
        %v322 = vld [vmem:[%s170 + $0x4a8] sm:$0xff]
        %v323 = vld [vmem:[%s170 + $0x4b0] sm:$0xff]
        %v324 = vld [vmem:[%s170 + $0x4b8] sm:$0xff]
        %v325 = vld [vmem:[%s170 + $0x4c0] sm:$0xff]
        %v326 = vld [vmem:[%s170 + $0x4c8] sm:$0xff]
        %v327 = vld [vmem:[%s170 + $0x4d0] sm:$0xff]
        %v328 = vld [vmem:[%s170 + $0x4d8] sm:$0xff]
        %v329 = vld [vmem:[%s170 + $0x4e0] sm:$0xff]
        %v330 = vld [vmem:[%s170 + $0x4e8] sm:$0xff]
        %v331 = vld [vmem:[%s170 + $0x4f0] sm:$0xff]
        %v332 = vld [vmem:[%s170 + $0x4f8] sm:$0xff]
        %v333 = vld [vmem:[%s170 + $0x500] sm:$0xff]
        %v334 = vld [vmem:[%s170 + $0x508] sm:$0xff]
        %v335 = vld [vmem:[%s170 + $0x510] sm:$0xff]
        %v336 = vld [vmem:[%s170 + $0x518] sm:$0xff]
        %v337 = vld [vmem:[%s170 + $0x520] sm:$0xff]
        %v338 = vld [vmem:[%s170 + $0x528] sm:$0xff]
        %v339 = vld [vmem:[%s170 + $0x530] sm:$0xff]
        %v340 = vld [vmem:[%s170 + $0x538] sm:$0xff]
        %v341 = vld [vmem:[%s170 + $0x540] sm:$0xff]
        %v342 = vld [vmem:[%s170 + $0x548] sm:$0xff]
        %v343 = vld [vmem:[%s170 + $0x550] sm:$0xff]
        %v344 = vld [vmem:[%s170 + $0x558] sm:$0xff]
        %v345 = vld [vmem:[%s170 + $0x560] sm:$0xff]
        %v346 = vld [vmem:[%s170 + $0x568] sm:$0xff]
        %v347 = vld [vmem:[%s170 + $0x570] sm:$0xff]
        %v348 = vld [vmem:[%s170 + $0x578] sm:$0xff]
        %v349 = vld [vmem:[%s170 + $0x580] sm:$0xff]
        %v350 = vld [vmem:[%s170 + $0x588] sm:$0xff]
        %v351 = vld [vmem:[%s170 + $0x590] sm:$0xff]
        %v352 = vld [vmem:[%s170 + $0x598] sm:$0xff]
        %v353 = vld [vmem:[%s170 + $0x5a0] sm:$0xff]
        %v354 = vld [vmem:[%s170 + $0x5a8] sm:$0xff]
        %v355 = vld [vmem:[%s170 + $0x5b0] sm:$0xff]
        %v356 = vld [vmem:[%s170 + $0x5b8] sm:$0xff]
        %v357 = vld [vmem:[%s170 + $0x5c0] sm:$0xff]
        %v358 = vld [vmem:[%s170 + $0x5c8] sm:$0xff]
        %v359 = vld [vmem:[%s170 + $0x5d0] sm:$0xff]
        %v360 = vld [vmem:[%s170 + $0x5d8] sm:$0xff]
        %v361 = vld [vmem:[%s170 + $0x5e0] sm:$0xff]
        %v362 = vld [vmem:[%s170 + $0x5e8] sm:$0xff]
        %v363 = vld [vmem:[%s170 + $0x5f0] sm:$0xff]
        %v364 = vld [vmem:[%s170 + $0x5f8] sm:$0xff]
        %v365 = vld [vmem:[%s170 + $0x600] sm:$0xff]
        %v366 = vld [vmem:[%s170 + $0x608] sm:$0xff]
        %v367 = vld [vmem:[%s170 + $0x610] sm:$0xff]
        %v368 = vld [vmem:[%s170 + $0x618] sm:$0xff]
        %v369 = vld [vmem:[%s170 + $0x620] sm:$0xff]
        %v370 = vld [vmem:[%s170 + $0x628] sm:$0xff]
        %v371 = vld [vmem:[%s170 + $0x630] sm:$0xff]
        %v372 = vld [vmem:[%s170 + $0x638] sm:$0xff]
        %v373 = vld [vmem:[%s170 + $0x640] sm:$0xff]
        %v374 = vld [vmem:[%s170 + $0x648] sm:$0xff]
        %v375 = vld [vmem:[%s170 + $0x650] sm:$0xff]
        %v376 = vld [vmem:[%s170 + $0x658] sm:$0xff]
        %v377 = vld [vmem:[%s170 + $0x660] sm:$0xff]
        %v378 = vld [vmem:[%s170 + $0x668] sm:$0xff]
        %v379 = vld [vmem:[%s170 + $0x670] sm:$0xff]
        %v380 = vld [vmem:[%s170 + $0x678] sm:$0xff]
        %v381 = vld [vmem:[%s170 + $0x680] sm:$0xff]
        %v382 = vld [vmem:[%s170 + $0x688] sm:$0xff]
        %v383 = vld [vmem:[%s170 + $0x690] sm:$0xff]
        %v384 = vld [vmem:[%s170 + $0x698] sm:$0xff]
        %v385 = vld [vmem:[%s170 + $0x6a0] sm:$0xff]
        %v386 = vld [vmem:[%s170 + $0x6a8] sm:$0xff]
        %v387 = vld [vmem:[%s170 + $0x6b0] sm:$0xff]
        %v388 = vld [vmem:[%s170 + $0x6b8] sm:$0xff]
        %v389 = vld [vmem:[%s170 + $0x6c0] sm:$0xff]
        %v390 = vld [vmem:[%s170 + $0x6c8] sm:$0xff]
        %v391 = vld [vmem:[%s170 + $0x6d0] sm:$0xff]
        %v392 = vld [vmem:[%s170 + $0x6d8] sm:$0xff]
        %v393 = vld [vmem:[%s170 + $0x6e0] sm:$0xff]
        %v394 = vld [vmem:[%s170 + $0x6e8] sm:$0xff]
        %v395 = vld [vmem:[%s170 + $0x6f0] sm:$0xff]
        %v396 = vld [vmem:[%s170 + $0x6f8] sm:$0xff]
        %v397 = vld [vmem:[%s170 + $0x700] sm:$0xff]
        %v398 = vld [vmem:[%s170 + $0x708] sm:$0xff]
        %v399 = vld [vmem:[%s170 + $0x710] sm:$0xff]
        %v400 = vld [vmem:[%s170 + $0x718] sm:$0xff]
        %v401 = vld [vmem:[%s170 + $0x720] sm:$0xff]
        %v402 = vld [vmem:[%s170 + $0x728] sm:$0xff]
        %v403 = vld [vmem:[%s170 + $0x730] sm:$0xff]
        %v404 = vld [vmem:[%s170 + $0x738] sm:$0xff]
        %v405 = vld [vmem:[%s170 + $0x740] sm:$0xff]
        %v406 = vld [vmem:[%s170 + $0x748] sm:$0xff]
        %v407 = vld [vmem:[%s170 + $0x750] sm:$0xff]
        %v408 = vld [vmem:[%s170 + $0x758] sm:$0xff]
        %v409 = vld [vmem:[%s170 + $0x760] sm:$0xff]
        %v410 = vld [vmem:[%s170 + $0x768] sm:$0xff]
        %v411 = vld [vmem:[%s170 + $0x770] sm:$0xff]
        %v412 = vld [vmem:[%s170 + $0x778] sm:$0xff]
        %v413 = vld [vmem:[%s170 + $0x780] sm:$0xff]
        %v414 = vld [vmem:[%s170 + $0x788] sm:$0xff]
        %v415 = vld [vmem:[%s170 + $0x790] sm:$0xff]
        %v416 = vld [vmem:[%s170 + $0x798] sm:$0xff]
        %v417 = vld [vmem:[%s170 + $0x7a0] sm:$0xff]
        %v418 = vld [vmem:[%s170 + $0x7a8] sm:$0xff]
        %v419 = vld [vmem:[%s170 + $0x7b0] sm:$0xff]
        %v420 = vld [vmem:[%s170 + $0x7b8] sm:$0xff]
        %v421 = vld [vmem:[%s170 + $0x7c0] sm:$0xff]
        %v422 = vld [vmem:[%s170 + $0x7c8] sm:$0xff]
        %v423 = vld [vmem:[%s170 + $0x7d0] sm:$0xff]
        %v424 = vld [vmem:[%s170 + $0x7d8] sm:$0xff]
        %v425 = vld [vmem:[%s170 + $0x7e0] sm:$0xff]
        %v426 = vld [vmem:[%s170 + $0x7e8] sm:$0xff]
        %v427 = vld [vmem:[%s170 + $0x7f0] sm:$0xff]
        %v428 = vld [vmem:[%s170 + $0x7f8] sm:$0xff]
        %v429 = vld [vmem:[%s170 + $0x800] sm:$0xff]
        %v430 = vld [vmem:[%s170 + $0x808] sm:$0xff]
        %v431 = vld [vmem:[%s170 + $0x810] sm:$0xff]
        %v432 = vld [vmem:[%s170 + $0x818] sm:$0xff]
        %v433 = vld [vmem:[%s170 + $0x820] sm:$0xff]
        %v434 = vld [vmem:[%s170 + $0x828] sm:$0xff]
        %v435 = vld [vmem:[%s170 + $0x830] sm:$0xff]
        %v436 = vld [vmem:[%s170 + $0x838] sm:$0xff]
        %v437 = vld [vmem:[%s170 + $0x840] sm:$0xff]
        %v438 = vld [vmem:[%s170 + $0x848] sm:$0xff]
        %v439 = vld [vmem:[%s170 + $0x850] sm:$0xff]
        %v440 = vld [vmem:[%s170 + $0x858] sm:$0xff]
        %v441 = vld [vmem:[%s170 + $0x860] sm:$0xff]
        %v442 = vld [vmem:[%s170 + $0x868] sm:$0xff]
        %v443 = vld [vmem:[%s170 + $0x870] sm:$0xff]
        %v444 = vld [vmem:[%s170 + $0x878] sm:$0xff]
        %v445 = vld [vmem:[%s170 + $0x880] sm:$0xff]
        %v446 = vld [vmem:[%s170 + $0x888] sm:$0xff]
        %v447 = vld [vmem:[%s170 + $0x890] sm:$0xff]
        %v448 = vld [vmem:[%s170 + $0x898] sm:$0xff]
        %v449 = vld [vmem:[%s170 + $0x8a0] sm:$0xff]
        %v450 = vld [vmem:[%s170 + $0x8a8] sm:$0xff]
        %v451 = vld [vmem:[%s170 + $0x8b0] sm:$0xff]
        %v452 = vld [vmem:[%s170 + $0x8b8] sm:$0xff]
        %v453 = vld [vmem:[%s170 + $0x8c0] sm:$0xff]
        %v454 = vld [vmem:[%s170 + $0x8c8] sm:$0xff]
        %v455 = vld [vmem:[%s170 + $0x8d0] sm:$0xff]
        %v456 = vld [vmem:[%s170 + $0x8d8] sm:$0xff]
        %v457 = vld [vmem:[%s170 + $0x8e0] sm:$0xff]
        %v458 = vld [vmem:[%s170 + $0x8e8] sm:$0xff]
        %v459 = vld [vmem:[%s170 + $0x8f0] sm:$0xff]
        %v460 = vld [vmem:[%s170 + $0x8f8] sm:$0xff]
        %v461 = vld [vmem:[%s170 + $0x900] sm:$0xff]
        %v462 = vld [vmem:[%s170 + $0x908] sm:$0xff]
        %v463 = vld [vmem:[%s170 + $0x910] sm:$0xff]
        %v464 = vld [vmem:[%s170 + $0x918] sm:$0xff]
        %v465 = vld [vmem:[%s170 + $0x920] sm:$0xff]
        %v466 = vld [vmem:[%s170 + $0x928] sm:$0xff]
        %v467 = vld [vmem:[%s170 + $0x930] sm:$0xff]
        %v468 = vld [vmem:[%s170 + $0x938] sm:$0xff]
        %v469 = vld [vmem:[%s170 + $0x940] sm:$0xff]
        %v470 = vld [vmem:[%s170 + $0x948] sm:$0xff]
        %v471 = vld [vmem:[%s170 + $0x950] sm:$0xff]
        %v472 = vld [vmem:[%s170 + $0x958] sm:$0xff]
        %v473 = vld [vmem:[%s170 + $0x960] sm:$0xff]
        %v474 = vld [vmem:[%s170 + $0x968] sm:$0xff]
        %v475 = vld [vmem:[%s170 + $0x970] sm:$0xff]
        %v476 = vld [vmem:[%s170 + $0x978] sm:$0xff]
        %v477 = vld [vmem:[%s170 + $0x980] sm:$0xff]
        %v478 = vld [vmem:[%s170 + $0x988] sm:$0xff]
        %v479 = vld [vmem:[%s170 + $0x990] sm:$0xff]
        %v480 = vld [vmem:[%s170 + $0x998] sm:$0xff]
        %v481 = vld [vmem:[%s170 + $0x9a0] sm:$0xff]
        %v482 = vld [vmem:[%s170 + $0x9a8] sm:$0xff]
        %v483 = vld [vmem:[%s170 + $0x9b0] sm:$0xff]
        %v484 = vld [vmem:[%s170 + $0x9b8] sm:$0xff]
        %v485 = vld [vmem:[%s170 + $0x9c0] sm:$0xff]
        %v486 = vld [vmem:[%s170 + $0x9c8] sm:$0xff]
        %v487 = vld [vmem:[%s170 + $0x9d0] sm:$0xff]
        %v488 = vld [vmem:[%s170 + $0x9d8] sm:$0xff]
        %v489 = vld [vmem:[%s170 + $0x9e0] sm:$0xff]
        %v490 = vld [vmem:[%s170 + $0x9e8] sm:$0xff]
        %v491 = vld [vmem:[%s170 + $0x9f0] sm:$0xff]
        %v492 = vld [vmem:[%s170 + $0x9f8] sm:$0xff]
        %v493 = vld [vmem:[%s170 + $0xa00] sm:$0xff]
        %v494 = vld [vmem:[%s170 + $0xa08] sm:$0xff]
        %v495 = vld [vmem:[%s170 + $0xa10] sm:$0xff]
        %v496 = vld [vmem:[%s170 + $0xa18] sm:$0xff]
        %v497 = vld [vmem:[%s170 + $0xa20] sm:$0xff]
        %v498 = vld [vmem:[%s170 + $0xa28] sm:$0xff]
        %v499 = vld [vmem:[%s170 + $0xa30] sm:$0xff]
        %v500 = vld [vmem:[%s170 + $0xa38] sm:$0xff]
        %v501 = vld [vmem:[%s170 + $0xa40] sm:$0xff]
        %v502 = vld [vmem:[%s170 + $0xa48] sm:$0xff]
        %v503 = vld [vmem:[%s170 + $0xa50] sm:$0xff]
        %v504 = vld [vmem:[%s170 + $0xa58] sm:$0xff]
        %v505 = vld [vmem:[%s170 + $0xa60] sm:$0xff]
        %v506 = vld [vmem:[%s170 + $0xa68] sm:$0xff]
        %v507 = vld [vmem:[%s170 + $0xa70] sm:$0xff]
        %v508 = vld [vmem:[%s170 + $0xa78] sm:$0xff]
        %v509 = vld [vmem:[%s170 + $0xa80] sm:$0xff]
        %v510 = vld [vmem:[%s170 + $0xa88] sm:$0xff]
        %v511 = vld [vmem:[%s170 + $0xa90] sm:$0xff]
        %v512 = vld [vmem:[%s170 + $0xa98] sm:$0xff]
        %v513 = vld [vmem:[%s170 + $0xaa0] sm:$0xff]
        %v514 = vld [vmem:[%s170 + $0xaa8] sm:$0xff]
        %v515 = vld [vmem:[%s170 + $0xab0] sm:$0xff]
        %v516 = vld [vmem:[%s170 + $0xab8] sm:$0xff]
        %v517 = vld [vmem:[%s170 + $0xac0] sm:$0xff]
        %v518 = vld [vmem:[%s170 + $0xac8] sm:$0xff]
        %v519 = vld [vmem:[%s170 + $0xad0] sm:$0xff]
        %v520 = vld [vmem:[%s170 + $0xad8] sm:$0xff]
        %v521 = vld [vmem:[%s170 + $0xae0] sm:$0xff]
        %v522 = vld [vmem:[%s170 + $0xae8] sm:$0xff]
        %v523 = vld [vmem:[%s170 + $0xaf0] sm:$0xff]
        %v524 = vld [vmem:[%s170 + $0xaf8] sm:$0xff]
        %v525 = vld [vmem:[%s170 + $0xb00] sm:$0xff]
        %v526 = vld [vmem:[%s170 + $0xb08] sm:$0xff]
        %v527 = vld [vmem:[%s170 + $0xb10] sm:$0xff]
        %v528 = vld [vmem:[%s170 + $0xb18] sm:$0xff]
        %v529 = vld [vmem:[%s170 + $0xb20] sm:$0xff]
        %v530 = vld [vmem:[%s170 + $0xb28] sm:$0xff]
        %v531 = vld [vmem:[%s170 + $0xb30] sm:$0xff]
        %v532 = vld [vmem:[%s170 + $0xb38] sm:$0xff]
        %v533 = vld [vmem:[%s170 + $0xb40] sm:$0xff]
        %v534 = vld [vmem:[%s170 + $0xb48] sm:$0xff]
        %v535 = vld [vmem:[%s170 + $0xb50] sm:$0xff]
        %v536 = vld [vmem:[%s170 + $0xb58] sm:$0xff]
        %v537 = vld [vmem:[%s170 + $0xb60] sm:$0xff]
        %v538 = vld [vmem:[%s170 + $0xb68] sm:$0xff]
        %v539 = vld [vmem:[%s170 + $0xb70] sm:$0xff]
        %v540 = vld [vmem:[%s170 + $0xb78] sm:$0xff]
        %v541 = vld [vmem:[%s170 + $0xb80] sm:$0xff]
        %v542 = vld [vmem:[%s170 + $0xb88] sm:$0xff]
        %v543 = vld [vmem:[%s170 + $0xb90] sm:$0xff]
        %v544 = vld [vmem:[%s170 + $0xb98] sm:$0xff]
        %v545 = vld [vmem:[%s170 + $0xba0] sm:$0xff]
        %v546 = vld [vmem:[%s170 + $0xba8] sm:$0xff]
        %v547 = vld [vmem:[%s170 + $0xbb0] sm:$0xff]
        %v548 = vld [vmem:[%s170 + $0xbb8] sm:$0xff]
        %v549 = vld [vmem:[%s170 + $0xbc0] sm:$0xff]
        %v550 = vld [vmem:[%s170 + $0xbc8] sm:$0xff]
        %v551 = vld [vmem:[%s170 + $0xbd0] sm:$0xff]
        %v552 = vld [vmem:[%s170 + $0xbd8] sm:$0xff]
        %v553 = vld [vmem:[%s170 + $0xbe0] sm:$0xff]
        %v554 = vld [vmem:[%s170 + $0xbe8] sm:$0xff]
        %v555 = vld [vmem:[%s170 + $0xbf0] sm:$0xff]
        %v556 = vld [vmem:[%s170 + $0xbf8] sm:$0xff]
        %v557 = vld [vmem:[%s170 + $0xc00] sm:$0xff]
        %v558 = vld [vmem:[%s170 + $0xc08] sm:$0xff]
        %v559 = vld [vmem:[%s170 + $0xc10] sm:$0xff]
        %v560 = vld [vmem:[%s170 + $0xc18] sm:$0xff]
        %v561 = vld [vmem:[%s170 + $0xc20] sm:$0xff]
        %v562 = vld [vmem:[%s170 + $0xc28] sm:$0xff]
        %v563 = vld [vmem:[%s170 + $0xc30] sm:$0xff]
        %v564 = vld [vmem:[%s170 + $0xc38] sm:$0xff]
        %v565 = vld [vmem:[%s170 + $0xc40] sm:$0xff]
        %v566 = vld [vmem:[%s170 + $0xc48] sm:$0xff]
        %v567 = vld [vmem:[%s170 + $0xc50] sm:$0xff]
        %v568 = vld [vmem:[%s170 + $0xc58] sm:$0xff]
        %v569 = vld [vmem:[%s170 + $0xc60] sm:$0xff]
        %v570 = vld [vmem:[%s170 + $0xc68] sm:$0xff]
        %v571 = vld [vmem:[%s170 + $0xc70] sm:$0xff]
        %v572 = vld [vmem:[%s170 + $0xc78] sm:$0xff]
        %v573 = vld [vmem:[%s170 + $0xc80] sm:$0xff]
        %v574 = vld [vmem:[%s170 + $0xc88] sm:$0xff]
        %v575 = vld [vmem:[%s170 + $0xc90] sm:$0xff]
        %v576 = vld [vmem:[%s170 + $0xc98] sm:$0xff]
        %v577 = vld [vmem:[%s170 + $0xca0] sm:$0xff]
        %v578 = vld [vmem:[%s170 + $0xca8] sm:$0xff]
        %v579 = vld [vmem:[%s170 + $0xcb0] sm:$0xff]
        %v580 = vld [vmem:[%s170 + $0xcb8] sm:$0xff]
        %v581 = vld [vmem:[%s170 + $0xcc0] sm:$0xff]
        %v582 = vld [vmem:[%s170 + $0xcc8] sm:$0xff]
        %v583 = vld [vmem:[%s170 + $0xcd0] sm:$0xff]
        %v584 = vld [vmem:[%s170 + $0xcd8] sm:$0xff]
        %v585 = vld [vmem:[%s170 + $0xce0] sm:$0xff]
        %v586 = vld [vmem:[%s170 + $0xce8] sm:$0xff]
        %v587 = vld [vmem:[%s170 + $0xcf0] sm:$0xff]
        %v588 = vld [vmem:[%s170 + $0xcf8] sm:$0xff]
        %v589 = vld [vmem:[%s170 + $0xd00] sm:$0xff]
        %v590 = vld [vmem:[%s170 + $0xd08] sm:$0xff]
        %v591 = vld [vmem:[%s170 + $0xd10] sm:$0xff]
        %v592 = vld [vmem:[%s170 + $0xd18] sm:$0xff]
        %v593 = vld [vmem:[%s170 + $0xd20] sm:$0xff]
        %v594 = vld [vmem:[%s170 + $0xd28] sm:$0xff]
        %v595 = vld [vmem:[%s170 + $0xd30] sm:$0xff]
        %v596 = vld [vmem:[%s170 + $0xd38] sm:$0xff]
        %v597 = vld [vmem:[%s170 + $0xd40] sm:$0xff]
        %v598 = vld [vmem:[%s170 + $0xd48] sm:$0xff]
        %v599 = vld [vmem:[%s170 + $0xd50] sm:$0xff]
        %v600 = vld [vmem:[%s170 + $0xd58] sm:$0xff]
        %v601 = vld [vmem:[%s170 + $0xd60] sm:$0xff]
        %v602 = vld [vmem:[%s170 + $0xd68] sm:$0xff]
        %v603 = vld [vmem:[%s170 + $0xd70] sm:$0xff]
        %v604 = vld [vmem:[%s170 + $0xd78] sm:$0xff]
        %v605 = vld [vmem:[%s170 + $0xd80] sm:$0xff]
        %v606 = vld [vmem:[%s170 + $0xd88] sm:$0xff]
        %v607 = vld [vmem:[%s170 + $0xd90] sm:$0xff]
        %v608 = vld [vmem:[%s170 + $0xd98] sm:$0xff]
        %v609 = vld [vmem:[%s170 + $0xda0] sm:$0xff]
        %v610 = vld [vmem:[%s170 + $0xda8] sm:$0xff]
        %v611 = vld [vmem:[%s170 + $0xdb0] sm:$0xff]
        %v612 = vld [vmem:[%s170 + $0xdb8] sm:$0xff]
        %v613 = vld [vmem:[%s170 + $0xdc0] sm:$0xff]
        %v614 = vld [vmem:[%s170 + $0xdc8] sm:$0xff]
        %v615 = vld [vmem:[%s170 + $0xdd0] sm:$0xff]
        %v616 = vld [vmem:[%s170 + $0xdd8] sm:$0xff]
        %v617 = vld [vmem:[%s170 + $0xde0] sm:$0xff]
        %v618 = vld [vmem:[%s170 + $0xde8] sm:$0xff]
        %v619 = vld [vmem:[%s170 + $0xdf0] sm:$0xff]
        %v620 = vld [vmem:[%s170 + $0xdf8] sm:$0xff]
        %v621 = vld [vmem:[%s170 + $0xe00] sm:$0xff]
        %v622 = vld [vmem:[%s170 + $0xe08] sm:$0xff]
        %v623 = vld [vmem:[%s170 + $0xe10] sm:$0xff]
        %v624 = vld [vmem:[%s170 + $0xe18] sm:$0xff]
        %v625 = vld [vmem:[%s170 + $0xe20] sm:$0xff]
        %v626 = vld [vmem:[%s170 + $0xe28] sm:$0xff]
        %v627 = vld [vmem:[%s170 + $0xe30] sm:$0xff]
        %v628 = vld [vmem:[%s170 + $0xe38] sm:$0xff]
        %v629 = vld [vmem:[%s170 + $0xe40] sm:$0xff]
        %v630 = vld [vmem:[%s170 + $0xe48] sm:$0xff]
        %v631 = vld [vmem:[%s170 + $0xe50] sm:$0xff]
        %v632 = vld [vmem:[%s170 + $0xe58] sm:$0xff]
        %v633 = vld [vmem:[%s170 + $0xe60] sm:$0xff]
        %v634 = vld [vmem:[%s170 + $0xe68] sm:$0xff]
        %v635 = vld [vmem:[%s170 + $0xe70] sm:$0xff]
        %v636 = vld [vmem:[%s170 + $0xe78] sm:$0xff]
        %v637 = vld [vmem:[%s170 + $0xe80] sm:$0xff]
        %v638 = vld [vmem:[%s170 + $0xe88] sm:$0xff]
        %v639 = vld [vmem:[%s170 + $0xe90] sm:$0xff]
        %v640 = vld [vmem:[%s170 + $0xe98] sm:$0xff]
        %v641 = vld [vmem:[%s170 + $0xea0] sm:$0xff]
        %v642 = vld [vmem:[%s170 + $0xea8] sm:$0xff]
        %v643 = vld [vmem:[%s170 + $0xeb0] sm:$0xff]
        %v644 = vld [vmem:[%s170 + $0xeb8] sm:$0xff]
        %v645 = vld [vmem:[%s170 + $0xec0] sm:$0xff]
        %v646 = vld [vmem:[%s170 + $0xec8] sm:$0xff]
        %v647 = vld [vmem:[%s170 + $0xed0] sm:$0xff]
        %v648 = vld [vmem:[%s170 + $0xed8] sm:$0xff]
        %v649 = vld [vmem:[%s170 + $0xee0] sm:$0xff]
        %v650 = vld [vmem:[%s170 + $0xee8] sm:$0xff]
        %v651 = vld [vmem:[%s170 + $0xef0] sm:$0xff]
        %v652 = vld [vmem:[%s170 + $0xef8] sm:$0xff]
        %v653 = vld [vmem:[%s170 + $0xf00] sm:$0xff]
        %v654 = vld [vmem:[%s170 + $0xf08] sm:$0xff]
        %v655 = vld [vmem:[%s170 + $0xf10] sm:$0xff]
        %v656 = vld [vmem:[%s170 + $0xf18] sm:$0xff]
        %v657 = vld [vmem:[%s170 + $0xf20] sm:$0xff]
        %v658 = vld [vmem:[%s170 + $0xf28] sm:$0xff]
        %v659 = vld [vmem:[%s170 + $0xf30] sm:$0xff]
        %v660 = vld [vmem:[%s170 + $0xf38] sm:$0xff]
        %v661 = vld [vmem:[%s170 + $0xf40] sm:$0xff]
        %v662 = vld [vmem:[%s170 + $0xf48] sm:$0xff]
        %v663 = vld [vmem:[%s170 + $0xf50] sm:$0xff]
        %v664 = vld [vmem:[%s170 + $0xf58] sm:$0xff]
        %v665 = vld [vmem:[%s170 + $0xf60] sm:$0xff]
        %v666 = vld [vmem:[%s170 + $0xf68] sm:$0xff]
        %v667 = vld [vmem:[%s170 + $0xf70] sm:$0xff]
        %v668 = vld [vmem:[%s170 + $0xf78] sm:$0xff]
        %v669 = vld [vmem:[%s170 + $0xf80] sm:$0xff]
        %v670 = vld [vmem:[%s170 + $0xf88] sm:$0xff]
        %v671 = vld [vmem:[%s170 + $0xf90] sm:$0xff]
        %v672 = vld [vmem:[%s170 + $0xf98] sm:$0xff]
        %v673 = vld [vmem:[%s170 + $0xfa0] sm:$0xff]
        %v674 = vld [vmem:[%s170 + $0xfa8] sm:$0xff]
        %v675 = vld [vmem:[%s170 + $0xfb0] sm:$0xff]
        %v676 = vld [vmem:[%s170 + $0xfb8] sm:$0xff]
        %v677 = vld [vmem:[%s170 + $0xfc0] sm:$0xff]
        %v678 = vld [vmem:[%s170 + $0xfc8] sm:$0xff]
        %v679 = vld [vmem:[%s170 + $0xfd0] sm:$0xff]
        %v680 = vld [vmem:[%s170 + $0xfd8] sm:$0xff]
        %v681 = vld [vmem:[%s170 + $0xfe0] sm:$0xff]
        %v682 = vld [vmem:[%s170 + $0xfe8] sm:$0xff]
        %v683 = vld [vmem:[%s170 + $0xff0] sm:$0xff]
        %v684 = vld [vmem:[%s170 + $0xff8] sm:$0xff]
        %v685 = vld [vmem:[%s170 + $0x1000] sm:$0xff]
        %v686 = vld [vmem:[%s170 + $0x1008] sm:$0xff]
        %v687 = vld [vmem:[%s170 + $0x1010] sm:$0xff]
        %v688 = vld [vmem:[%s170 + $0x1018] sm:$0xff]
        %v689 = vld [vmem:[%s170 + $0x1020] sm:$0xff]
        %v690 = vld [vmem:[%s170 + $0x1028] sm:$0xff]
        %v691 = vld [vmem:[%s170 + $0x1030] sm:$0xff]
        %v692 = vld [vmem:[%s170 + $0x1038] sm:$0xff]
        %v693 = vld [vmem:[%s170 + $0x1040] sm:$0xff]
        %v694 = vld [vmem:[%s170 + $0x1048] sm:$0xff]
        %v695 = vld [vmem:[%s170 + $0x1050] sm:$0xff]
        %v696 = vld [vmem:[%s170 + $0x1058] sm:$0xff]
        %v697 = vld [vmem:[%s170 + $0x1060] sm:$0xff]
        %v698 = vld [vmem:[%s170 + $0x1068] sm:$0xff]
        %v699 = vld [vmem:[%s170 + $0x1070] sm:$0xff]
        %v700 = vld [vmem:[%s170 + $0x1078] sm:$0xff]
        %v701 = vld [vmem:[%s170 + $0x1080] sm:$0xff]
        %v702 = vld [vmem:[%s170 + $0x1088] sm:$0xff]
        %v703 = vld [vmem:[%s170 + $0x1090] sm:$0xff]
        %v704 = vld [vmem:[%s170 + $0x1098] sm:$0xff]
        %v705 = vld [vmem:[%s170 + $0x10a0] sm:$0xff]
        %v706 = vld [vmem:[%s170 + $0x10a8] sm:$0xff]
        %v707 = vld [vmem:[%s170 + $0x10b0] sm:$0xff]
        %v708 = vld [vmem:[%s170 + $0x10b8] sm:$0xff]
        %v709 = vld [vmem:[%s170 + $0x10c0] sm:$0xff]
        %v710 = vld [vmem:[%s170 + $0x10c8] sm:$0xff]
        %v711 = vld [vmem:[%s170 + $0x10d0] sm:$0xff]
        %v712 = vld [vmem:[%s170 + $0x10d8] sm:$0xff]
        %v713 = vld [vmem:[%s170 + $0x10e0] sm:$0xff]
        %v714 = vld [vmem:[%s170 + $0x10e8] sm:$0xff]
        %v715 = vld [vmem:[%s170 + $0x10f0] sm:$0xff]
        %v716 = vld [vmem:[%s170 + $0x10f8] sm:$0xff]
        %v717 = vld [vmem:[%s170 + $0x1100] sm:$0xff]
        %v718 = vld [vmem:[%s170 + $0x1108] sm:$0xff]
        %v719 = vld [vmem:[%s170 + $0x1110] sm:$0xff]
        %v720 = vld [vmem:[%s170 + $0x1118] sm:$0xff]
        %v721 = vld [vmem:[%s170 + $0x1120] sm:$0xff]
        %v722 = vld [vmem:[%s170 + $0x1128] sm:$0xff]
        %v723 = vld [vmem:[%s170 + $0x1130] sm:$0xff]
        %v724 = vld [vmem:[%s170 + $0x1138] sm:$0xff]
        %v725 = vld [vmem:[%s170 + $0x1140] sm:$0xff]
        %v726 = vld [vmem:[%s170 + $0x1148] sm:$0xff]
        %v727 = vld [vmem:[%s170 + $0x1150] sm:$0xff]
        %v728 = vld [vmem:[%s170 + $0x1158] sm:$0xff]
        %v729 = vld [vmem:[%s170 + $0x1160] sm:$0xff]
        %v730 = vld [vmem:[%s170 + $0x1168] sm:$0xff]
        %v731 = vld [vmem:[%s170 + $0x1170] sm:$0xff]
        %v732 = vld [vmem:[%s170 + $0x1178] sm:$0xff]
        %v733 = vld [vmem:[%s170 + $0x1180] sm:$0xff]
        %v734 = vld [vmem:[%s170 + $0x1188] sm:$0xff]
        %v735 = vld [vmem:[%s170 + $0x1190] sm:$0xff]
        %v736 = vld [vmem:[%s170 + $0x1198] sm:$0xff]
        %v737 = vld [vmem:[%s170 + $0x11a0] sm:$0xff]
        %v738 = vld [vmem:[%s170 + $0x11a8] sm:$0xff]
        %v739 = vld [vmem:[%s170 + $0x11b0] sm:$0xff]
        %v740 = vld [vmem:[%s170 + $0x11b8] sm:$0xff]
        %v741 = vld [vmem:[%s170 + $0x11c0] sm:$0xff]
        %v742 = vld [vmem:[%s170 + $0x11c8] sm:$0xff]
        %v743 = vld [vmem:[%s170 + $0x11d0] sm:$0xff]
        %v744 = vld [vmem:[%s170 + $0x11d8] sm:$0xff]
        %v745 = vld [vmem:[%s170 + $0x11e0] sm:$0xff]
        %v746 = vld [vmem:[%s170 + $0x11e8] sm:$0xff]
        %v747 = vld [vmem:[%s170 + $0x11f0] sm:$0xff]
        %v748 = vld [vmem:[%s170 + $0x11f8] sm:$0xff]
        %v749 = vld [vmem:[%s170 + $0x1200] sm:$0xff]
        %v750 = vld [vmem:[%s170 + $0x1208] sm:$0xff]
        %v751 = vld [vmem:[%s170 + $0x1210] sm:$0xff]
        %v752 = vld [vmem:[%s170 + $0x1218] sm:$0xff]
        %v753 = vld [vmem:[%s170 + $0x1220] sm:$0xff]
        %v754 = vld [vmem:[%s170 + $0x1228] sm:$0xff]
        %v755 = vld [vmem:[%s170 + $0x1230] sm:$0xff]
        %v756 = vld [vmem:[%s170 + $0x1238] sm:$0xff]
        %v757 = vld [vmem:[%s170 + $0x1240] sm:$0xff]
        %v758 = vld [vmem:[%s170 + $0x1248] sm:$0xff]
        %v759 = vld [vmem:[%s170 + $0x1250] sm:$0xff]
        %v760 = vld [vmem:[%s170 + $0x1258] sm:$0xff]
        %v761 = vld [vmem:[%s170 + $0x1260] sm:$0xff]
        %v762 = vld [vmem:[%s170 + $0x1268] sm:$0xff]
        %v763 = vld [vmem:[%s170 + $0x1270] sm:$0xff]
        %v764 = vld [vmem:[%s170 + $0x1278] sm:$0xff]
        %v765 = vld [vmem:[%s170 + $0x1280] sm:$0xff]
        %v766 = vld [vmem:[%s170 + $0x1288] sm:$0xff]
        %v767 = vld [vmem:[%s170 + $0x1290] sm:$0xff]
        %v768 = vld [vmem:[%s170 + $0x1298] sm:$0xff]
        %v769 = vld [vmem:[%s170 + $0x12a0] sm:$0xff]
        %v770 = vld [vmem:[%s170 + $0x12a8] sm:$0xff]
        %v771 = vld [vmem:[%s170 + $0x12b0] sm:$0xff]
        %v772 = vld [vmem:[%s170 + $0x12b8] sm:$0xff]
        %v773 = vld [vmem:[%s170 + $0x12c0] sm:$0xff]
        %v774 = vld [vmem:[%s170 + $0x12c8] sm:$0xff]
        %v775 = vld [vmem:[%s170 + $0x12d0] sm:$0xff]
        %v776 = vld [vmem:[%s170 + $0x12d8] sm:$0xff]
        %v777 = vld [vmem:[%s170 + $0x12e0] sm:$0xff]
        %v778 = vld [vmem:[%s170 + $0x12e8] sm:$0xff]
        %v779 = vld [vmem:[%s170 + $0x12f0] sm:$0xff]
        %v780 = vld [vmem:[%s170 + $0x12f8] sm:$0xff]
        %v781 = vld [vmem:[%s170 + $0x1300] sm:$0xff]
        %v782 = vld [vmem:[%s170 + $0x1308] sm:$0xff]
        %v783 = vld [vmem:[%s170 + $0x1310] sm:$0xff]
        %v784 = vld [vmem:[%s170 + $0x1318] sm:$0xff]
        %v785 = vld [vmem:[%s170 + $0x1320] sm:$0xff]
        %v786 = vld [vmem:[%s170 + $0x1328] sm:$0xff]
        %v787 = vld [vmem:[%s170 + $0x1330] sm:$0xff]
        %v788 = vld [vmem:[%s170 + $0x1338] sm:$0xff]
        %v789 = vld [vmem:[%s170 + $0x1340] sm:$0xff]
        %v790 = vld [vmem:[%s170 + $0x1348] sm:$0xff]
        %v791 = vld [vmem:[%s170 + $0x1350] sm:$0xff]
        %v792 = vld [vmem:[%s170 + $0x1358] sm:$0xff]
        %v793 = vld [vmem:[%s170 + $0x1360] sm:$0xff]
        %v794 = vld [vmem:[%s170 + $0x1368] sm:$0xff]
        %v795 = vld [vmem:[%s170 + $0x1370] sm:$0xff]
        %v796 = vld [vmem:[%s170 + $0x1378] sm:$0xff]
        %v797 = vld [vmem:[%s170 + $0x1380] sm:$0xff]
        %v798 = vld [vmem:[%s170 + $0x1388] sm:$0xff]
        %v799 = vld [vmem:[%s170 + $0x1390] sm:$0xff]
        %v800 = vld [vmem:[%s170 + $0x1398] sm:$0xff]
        %v801 = vld [vmem:[%s170 + $0x13a0] sm:$0xff]
        %v802 = vld [vmem:[%s170 + $0x13a8] sm:$0xff]
        %v803 = vld [vmem:[%s170 + $0x13b0] sm:$0xff]
        %v804 = vld [vmem:[%s170 + $0x13b8] sm:$0xff]
        %v805 = vld [vmem:[%s170 + $0x13c0] sm:$0xff]
        %v806 = vld [vmem:[%s170 + $0x13c8] sm:$0xff]
        %v807 = vld [vmem:[%s170 + $0x13d0] sm:$0xff]
        %v808 = vld [vmem:[%s170 + $0x13d8] sm:$0xff]
        %v809 = vld [vmem:[%s170 + $0x13e0] sm:$0xff]
        %v810 = vld [vmem:[%s170 + $0x13e8] sm:$0xff]
        %v811 = vld [vmem:[%s170 + $0x13f0] sm:$0xff]
        %v812 = vld [vmem:[%s170 + $0x13f8] sm:$0xff]
        %v813 = vld [vmem:[%s170 + $0x1400] sm:$0xff]
        %v814 = vld [vmem:[%s170 + $0x1408] sm:$0xff]
        %v815 = vld [vmem:[%s170 + $0x1410] sm:$0xff]
        %v816 = vld [vmem:[%s170 + $0x1418] sm:$0xff]
        %v817 = vld [vmem:[%s170 + $0x1420] sm:$0xff]
        %v818 = vld [vmem:[%s170 + $0x1428] sm:$0xff]
        %v819 = vld [vmem:[%s170 + $0x1430] sm:$0xff]
        %v820 = vld [vmem:[%s170 + $0x1438] sm:$0xff]
        %v821 = vld [vmem:[%s170 + $0x1440] sm:$0xff]
        %v822 = vld [vmem:[%s170 + $0x1448] sm:$0xff]
        %v823 = vld [vmem:[%s170 + $0x1450] sm:$0xff]
        %v824 = vld [vmem:[%s170 + $0x1458] sm:$0xff]
        %v825 = vld [vmem:[%s170 + $0x1460] sm:$0xff]
        %v826 = vld [vmem:[%s170 + $0x1468] sm:$0xff]
        %v827 = vld [vmem:[%s170 + $0x1470] sm:$0xff]
        %v828 = vld [vmem:[%s170 + $0x1478] sm:$0xff]
        %v829 = vld [vmem:[%s170 + $0x1480] sm:$0xff]
        %v830 = vld [vmem:[%s170 + $0x1488] sm:$0xff]
        %v831 = vld [vmem:[%s170 + $0x1490] sm:$0xff]
        %v832 = vld [vmem:[%s170 + $0x1498] sm:$0xff]
        %v833 = vld [vmem:[%s170 + $0x14a0] sm:$0xff]
        %v834 = vld [vmem:[%s170 + $0x14a8] sm:$0xff]
        %v835 = vld [vmem:[%s170 + $0x14b0] sm:$0xff]
        %v836 = vld [vmem:[%s170 + $0x14b8] sm:$0xff]
        %v837 = vld [vmem:[%s170 + $0x14c0] sm:$0xff]
        %v838 = vld [vmem:[%s170 + $0x14c8] sm:$0xff]
        %v839 = vld [vmem:[%s170 + $0x14d0] sm:$0xff]
        %v840 = vld [vmem:[%s170 + $0x14d8] sm:$0xff]
        %v841 = vld [vmem:[%s170 + $0x14e0] sm:$0xff]
        %v842 = vld [vmem:[%s170 + $0x14e8] sm:$0xff]
        %v843 = vld [vmem:[%s170 + $0x14f0] sm:$0xff]
        %v844 = vld [vmem:[%s170 + $0x14f8] sm:$0xff]
        %v845 = vld [vmem:[%s170 + $0x1500] sm:$0xff]
        %v846 = vld [vmem:[%s170 + $0x1508] sm:$0xff]
        %v847 = vld [vmem:[%s170 + $0x1510] sm:$0xff]
        %v848 = vld [vmem:[%s170 + $0x1518] sm:$0xff]
        %v849 = vld [vmem:[%s170 + $0x1520] sm:$0xff]
        %v850 = vld [vmem:[%s170 + $0x1528] sm:$0xff]
        %v851 = vld [vmem:[%s170 + $0x1530] sm:$0xff]
        %v852 = vld [vmem:[%s170 + $0x1538] sm:$0xff]
        %v853 = vld [vmem:[%s170 + $0x1540] sm:$0xff]
        %v854 = vld [vmem:[%s170 + $0x1548] sm:$0xff]
        %v855 = vld [vmem:[%s170 + $0x1550] sm:$0xff]
        %v856 = vld [vmem:[%s170 + $0x1558] sm:$0xff]
        %v857 = vld [vmem:[%s170 + $0x1560] sm:$0xff]
        %v858 = vld [vmem:[%s170 + $0x1568] sm:$0xff]
        %v859 = vld [vmem:[%s170 + $0x1570] sm:$0xff]
        %v860 = vld [vmem:[%s170 + $0x1578] sm:$0xff]
        %v861 = vld [vmem:[%s170 + $0x1580] sm:$0xff]
        %v862 = vld [vmem:[%s170 + $0x1588] sm:$0xff]
        %v863 = vld [vmem:[%s170 + $0x1590] sm:$0xff]
        %v864 = vld [vmem:[%s170 + $0x1598] sm:$0xff]
        %v865 = vld [vmem:[%s170 + $0x15a0] sm:$0xff]
        %v866 = vld [vmem:[%s170 + $0x15a8] sm:$0xff]
        %v867 = vld [vmem:[%s170 + $0x15b0] sm:$0xff]
        %v868 = vld [vmem:[%s170 + $0x15b8] sm:$0xff]
        %v869 = vld [vmem:[%s170 + $0x15c0] sm:$0xff]
        %v870 = vld [vmem:[%s170 + $0x15c8] sm:$0xff]
        %v871 = vld [vmem:[%s170 + $0x15d0] sm:$0xff]
        %v872 = vld [vmem:[%s170 + $0x15d8] sm:$0xff]
        %v873 = vld [vmem:[%s170 + $0x15e0] sm:$0xff]
        %v874 = vld [vmem:[%s170 + $0x15e8] sm:$0xff]
        %v875 = vld [vmem:[%s170 + $0x15f0] sm:$0xff]
        %v876 = vld [vmem:[%s170 + $0x15f8] sm:$0xff]
        %v877 = vld [vmem:[%s170 + $0x1600] sm:$0xff]
        %v878 = vld [vmem:[%s170 + $0x1608] sm:$0xff]
        %v879 = vld [vmem:[%s170 + $0x1610] sm:$0xff]
        %v880 = vld [vmem:[%s170 + $0x1618] sm:$0xff]
        %v881 = vld [vmem:[%s170 + $0x1620] sm:$0xff]
        %v882 = vld [vmem:[%s170 + $0x1628] sm:$0xff]
        %v883 = vld [vmem:[%s170 + $0x1630] sm:$0xff]
        %v884 = vld [vmem:[%s170 + $0x1638] sm:$0xff]
        %v885 = vld [vmem:[%s170 + $0x1640] sm:$0xff]
        %v886 = vld [vmem:[%s170 + $0x1648] sm:$0xff]
        %v887 = vld [vmem:[%s170 + $0x1650] sm:$0xff]
        %v888 = vld [vmem:[%s170 + $0x1658] sm:$0xff]
        %v889 = vld [vmem:[%s170 + $0x1660] sm:$0xff]
        %v890 = vld [vmem:[%s170 + $0x1668] sm:$0xff]
        %v891 = vld [vmem:[%s170 + $0x1670] sm:$0xff]
        %v892 = vld [vmem:[%s170 + $0x1678] sm:$0xff]
        %v893 = vld [vmem:[%s170 + $0x1680] sm:$0xff]
        %v894 = vld [vmem:[%s170 + $0x1688] sm:$0xff]
        %v895 = vld [vmem:[%s170 + $0x1690] sm:$0xff]
        %v896 = vld [vmem:[%s170 + $0x1698] sm:$0xff]
        %v897 = vld [vmem:[%s170 + $0x16a0] sm:$0xff]
        %v898 = vld [vmem:[%s170 + $0x16a8] sm:$0xff]
        %v899 = vld [vmem:[%s170 + $0x16b0] sm:$0xff]
        %v900 = vld [vmem:[%s170 + $0x16b8] sm:$0xff]
        %v901 = vld [vmem:[%s170 + $0x16c0] sm:$0xff]
        %v902 = vld [vmem:[%s170 + $0x16c8] sm:$0xff]
        %v903 = vld [vmem:[%s170 + $0x16d0] sm:$0xff]
        %v904 = vld [vmem:[%s170 + $0x16d8] sm:$0xff]
        %v905 = vld [vmem:[%s170 + $0x16e0] sm:$0xff]
        %v906 = vld [vmem:[%s170 + $0x16e8] sm:$0xff]
        %v907 = vld [vmem:[%s170 + $0x16f0] sm:$0xff]
        %v908 = vld [vmem:[%s170 + $0x16f8] sm:$0xff]
        %v909 = vld [vmem:[%s170 + $0x1700] sm:$0xff]
        %v910 = vld [vmem:[%s170 + $0x1708] sm:$0xff]
        %v911 = vld [vmem:[%s170 + $0x1710] sm:$0xff]
        %v912 = vld [vmem:[%s170 + $0x1718] sm:$0xff]
        %v913 = vld [vmem:[%s170 + $0x1720] sm:$0xff]
        %v914 = vld [vmem:[%s170 + $0x1728] sm:$0xff]
        %v915 = vld [vmem:[%s170 + $0x1730] sm:$0xff]
        %v916 = vld [vmem:[%s170 + $0x1738] sm:$0xff]
        %v917 = vld [vmem:[%s170 + $0x1740] sm:$0xff]
        %v918 = vld [vmem:[%s170 + $0x1748] sm:$0xff]
        %v919 = vld [vmem:[%s170 + $0x1750] sm:$0xff]
        %v920 = vld [vmem:[%s170 + $0x1758] sm:$0xff]
        %v921 = vld [vmem:[%s170 + $0x1760] sm:$0xff]
        %v922 = vld [vmem:[%s170 + $0x1768] sm:$0xff]
        %v923 = vld [vmem:[%s170 + $0x1770] sm:$0xff]
        %v924 = vld [vmem:[%s170 + $0x1778] sm:$0xff]
        %v925 = vld [vmem:[%s170 + $0x1780] sm:$0xff]
        %v926 = vld [vmem:[%s170 + $0x1788] sm:$0xff]
        %v927 = vld [vmem:[%s170 + $0x1790] sm:$0xff]
        %v928 = vld [vmem:[%s170 + $0x1798] sm:$0xff]
        %v929 = vld [vmem:[%s170 + $0x17a0] sm:$0xff]
        %v930 = vld [vmem:[%s170 + $0x17a8] sm:$0xff]
        %v931 = vld [vmem:[%s170 + $0x17b0] sm:$0xff]
        %v932 = vld [vmem:[%s170 + $0x17b8] sm:$0xff]
        %v933 = vld [vmem:[%s170 + $0x17c0] sm:$0xff]
        %v934 = vld [vmem:[%s170 + $0x17c8] sm:$0xff]
        %v935 = vld [vmem:[%s170 + $0x17d0] sm:$0xff]
        %v936 = vld [vmem:[%s170 + $0x17d8] sm:$0xff]
        %v937 = vld [vmem:[%s170 + $0x17e0] sm:$0xff]
        %v938 = vld [vmem:[%s170 + $0x17e8] sm:$0xff]
        %v939 = vld [vmem:[%s170 + $0x17f0] sm:$0xff]
        %v940 = vld [vmem:[%s170 + $0x17f8] sm:$0xff]
        %v941 = vld [vmem:[%s170 + $0x1800] sm:$0xff]
        %v942 = vld [vmem:[%s170 + $0x1808] sm:$0xff]
        %v943 = vld [vmem:[%s170 + $0x1810] sm:$0xff]
        %v944 = vld [vmem:[%s170 + $0x1818] sm:$0xff]
        %v945 = vld [vmem:[%s170 + $0x1820] sm:$0xff]
        %v946 = vld [vmem:[%s170 + $0x1828] sm:$0xff]
        %v947 = vld [vmem:[%s170 + $0x1830] sm:$0xff]
        %v948 = vld [vmem:[%s170 + $0x1838] sm:$0xff]
        %v949 = vld [vmem:[%s170 + $0x1840] sm:$0xff]
        %v950 = vld [vmem:[%s170 + $0x1848] sm:$0xff]
        %v951 = vld [vmem:[%s170 + $0x1850] sm:$0xff]
        %v952 = vld [vmem:[%s170 + $0x1858] sm:$0xff]
        %v953 = vld [vmem:[%s170 + $0x1860] sm:$0xff]
        %v954 = vld [vmem:[%s170 + $0x1868] sm:$0xff]
        %v955 = vld [vmem:[%s170 + $0x1870] sm:$0xff]
        %v956 = vld [vmem:[%s170 + $0x1878] sm:$0xff]
        %v957 = vld [vmem:[%s170 + $0x1880] sm:$0xff]
        %v958 = vld [vmem:[%s170 + $0x1888] sm:$0xff]
        %v959 = vld [vmem:[%s170 + $0x1890] sm:$0xff]
        %v960 = vld [vmem:[%s170 + $0x1898] sm:$0xff]
        %v961 = vld [vmem:[%s170 + $0x18a0] sm:$0xff]
        %v962 = vld [vmem:[%s170 + $0x18a8] sm:$0xff]
        %v963 = vld [vmem:[%s170 + $0x18b0] sm:$0xff]
        %v964 = vld [vmem:[%s170 + $0x18b8] sm:$0xff]
        %v965 = vld [vmem:[%s170 + $0x18c0] sm:$0xff]
        %v966 = vld [vmem:[%s170 + $0x18c8] sm:$0xff]
        %v967 = vld [vmem:[%s170 + $0x18d0] sm:$0xff]
        %v968 = vld [vmem:[%s170 + $0x18d8] sm:$0xff]
        %v969 = vld [vmem:[%s170 + $0x18e0] sm:$0xff]
        %v970 = vld [vmem:[%s170 + $0x18e8] sm:$0xff]
        %v971 = vld [vmem:[%s170 + $0x18f0] sm:$0xff]
        %v972 = vld [vmem:[%s170 + $0x18f8] sm:$0xff]
        %v973 = vld [vmem:[%s170 + $0x1900] sm:$0xff]
        %v974 = vld [vmem:[%s170 + $0x1908] sm:$0xff]
        %v975 = vld [vmem:[%s170 + $0x1910] sm:$0xff]
        %v976 = vld [vmem:[%s170 + $0x1918] sm:$0xff]
        %v977 = vld [vmem:[%s170 + $0x1920] sm:$0xff]
        %v978 = vld [vmem:[%s170 + $0x1928] sm:$0xff]
        %v979 = vld [vmem:[%s170 + $0x1930] sm:$0xff]
        %v980 = vld [vmem:[%s170 + $0x1938] sm:$0xff]
        %v981 = vld [vmem:[%s170 + $0x1940] sm:$0xff]
        %v982 = vld [vmem:[%s170 + $0x1948] sm:$0xff]
        %v983 = vld [vmem:[%s170 + $0x1950] sm:$0xff]
        %v984 = vld [vmem:[%s170 + $0x1958] sm:$0xff]
        %v985 = vld [vmem:[%s170 + $0x1960] sm:$0xff]
        %v986 = vld [vmem:[%s170 + $0x1968] sm:$0xff]
        %v987 = vld [vmem:[%s170 + $0x1970] sm:$0xff]
        %v988 = vld [vmem:[%s170 + $0x1978] sm:$0xff]
        %v989 = vld [vmem:[%s170 + $0x1980] sm:$0xff]
        %v990 = vld [vmem:[%s170 + $0x1988] sm:$0xff]
        %v991 = vld [vmem:[%s170 + $0x1990] sm:$0xff]
        %v992 = vld [vmem:[%s170 + $0x1998] sm:$0xff]
        %v993 = vld [vmem:[%s170 + $0x19a0] sm:$0xff]
        %v994 = vld [vmem:[%s170 + $0x19a8] sm:$0xff]
        %v995 = vld [vmem:[%s170 + $0x19b0] sm:$0xff]
        %v996 = vld [vmem:[%s170 + $0x19b8] sm:$0xff]
        %v997 = vld [vmem:[%s170 + $0x19c0] sm:$0xff]
        %v998 = vld [vmem:[%s170 + $0x19c8] sm:$0xff]
        %v999 = vld [vmem:[%s170 + $0x19d0] sm:$0xff]
        %v1000 = vld [vmem:[%s170 + $0x19d8] sm:$0xff]
        %v1001 = vld [vmem:[%s170 + $0x19e0] sm:$0xff]
        %v1002 = vld [vmem:[%s170 + $0x19e8] sm:$0xff]
        %v1003 = vld [vmem:[%s170 + $0x19f0] sm:$0xff]
        %v1004 = vld [vmem:[%s170 + $0x19f8] sm:$0xff]
        %v1005 = vld [vmem:[%s170 + $0x1a00] sm:$0xff]
        %v1006 = vld [vmem:[%s170 + $0x1a08] sm:$0xff]
        %v1007 = vld [vmem:[%s170 + $0x1a10] sm:$0xff]
        %v1008 = vld [vmem:[%s170 + $0x1a18] sm:$0xff]
        %v1009 = vld [vmem:[%s170 + $0x1a20] sm:$0xff]
        %v1010 = vld [vmem:[%s170 + $0x1a28] sm:$0xff]
        %v1011 = vld [vmem:[%s170 + $0x1a30] sm:$0xff]
        %v1012 = vld [vmem:[%s170 + $0x1a38] sm:$0xff]
        %v1013 = vld [vmem:[%s170 + $0x1a40] sm:$0xff]
        %v1014 = vld [vmem:[%s170 + $0x1a48] sm:$0xff]
        %v1015 = vld [vmem:[%s170 + $0x1a50] sm:$0xff]
        %v1016 = vld [vmem:[%s170 + $0x1a58] sm:$0xff]
        %v1017 = vld [vmem:[%s170 + $0x1a60] sm:$0xff]
        %v1018 = vld [vmem:[%s170 + $0x1a68] sm:$0xff]
        %v1019 = vld [vmem:[%s170 + $0x1a70] sm:$0xff]
        %v1020 = vld [vmem:[%s170 + $0x1a78] sm:$0xff]
        %v1021 = vld [vmem:[%s170 + $0x1a80] sm:$0xff]
        %v1022 = vld [vmem:[%s170 + $0x1a88] sm:$0xff]
        %v1023 = vld [vmem:[%s170 + $0x1a90] sm:$0xff]
        %v1024 = vld [vmem:[%s170 + $0x1a98] sm:$0xff]
        %v1025 = vld [vmem:[%s170 + $0x1aa0] sm:$0xff]
        %v1026 = vld [vmem:[%s170 + $0x1aa8] sm:$0xff]
        %v1027 = vld [vmem:[%s170 + $0x1ab0] sm:$0xff]
        %v1028 = vld [vmem:[%s170 + $0x1ab8] sm:$0xff]
        %v1029 = vld [vmem:[%s170 + $0x1ac0] sm:$0xff]
        %v1030 = vld [vmem:[%s170 + $0x1ac8] sm:$0xff]
        %v1031 = vld [vmem:[%s170 + $0x1ad0] sm:$0xff]
        %v1032 = vld [vmem:[%s170 + $0x1ad8] sm:$0xff]
        %v1033 = vld [vmem:[%s170 + $0x1ae0] sm:$0xff]
        %v1034 = vld [vmem:[%s170 + $0x1ae8] sm:$0xff]
        %v1035 = vld [vmem:[%s170 + $0x1af0] sm:$0xff]
        %v1036 = vld [vmem:[%s170 + $0x1af8] sm:$0xff]
        %v1037 = vld [vmem:[%s170 + $0x1b00] sm:$0xff]
        %v1038 = vld [vmem:[%s170 + $0x1b08] sm:$0xff]
        %v1039 = vld [vmem:[%s170 + $0x1b10] sm:$0xff]
        %v1040 = vld [vmem:[%s170 + $0x1b18] sm:$0xff]
        %v1041 = vld [vmem:[%s170 + $0x1b20] sm:$0xff]
        %v1042 = vld [vmem:[%s170 + $0x1b28] sm:$0xff]
        %v1043 = vld [vmem:[%s170 + $0x1b30] sm:$0xff]
        %v1044 = vld [vmem:[%s170 + $0x1b38] sm:$0xff]
        %v1045 = vld [vmem:[%s170 + $0x1b40] sm:$0xff]
        %v1046 = vld [vmem:[%s170 + $0x1b48] sm:$0xff]
        %v1047 = vld [vmem:[%s170 + $0x1b50] sm:$0xff]
        %v1048 = vld [vmem:[%s170 + $0x1b58] sm:$0xff]
        %v1049 = vld [vmem:[%s170 + $0x1b60] sm:$0xff]
        %v1050 = vld [vmem:[%s170 + $0x1b68] sm:$0xff]
        %v1051 = vld [vmem:[%s170 + $0x1b70] sm:$0xff]
        %v1052 = vld [vmem:[%s170 + $0x1b78] sm:$0xff]
        %v1053 = vld [vmem:[%s170 + $0x1b80] sm:$0xff]
        %v1054 = vld [vmem:[%s170 + $0x1b88] sm:$0xff]
        %v1055 = vld [vmem:[%s170 + $0x1b90] sm:$0xff]
        %v1056 = vld [vmem:[%s170 + $0x1b98] sm:$0xff]
        %v1057 = vld [vmem:[%s170 + $0x1ba0] sm:$0xff]
        %v1058 = vld [vmem:[%s170 + $0x1ba8] sm:$0xff]
        %v1059 = vld [vmem:[%s170 + $0x1bb0] sm:$0xff]
        %v1060 = vld [vmem:[%s170 + $0x1bb8] sm:$0xff]
        %v1061 = vld [vmem:[%s170 + $0x1bc0] sm:$0xff]
        %v1062 = vld [vmem:[%s170 + $0x1bc8] sm:$0xff]
        %v1063 = vld [vmem:[%s170 + $0x1bd0] sm:$0xff]
        %v1064 = vld [vmem:[%s170 + $0x1bd8] sm:$0xff]
        %v1065 = vld [vmem:[%s170 + $0x1be0] sm:$0xff]
        %v1066 = vld [vmem:[%s170 + $0x1be8] sm:$0xff]
        %v1067 = vld [vmem:[%s170 + $0x1bf0] sm:$0xff]
        %v1068 = vld [vmem:[%s170 + $0x1bf8] sm:$0xff]
        %v1069 = vld [vmem:[%s170 + $0x1c00] sm:$0xff]
        %v1070 = vld [vmem:[%s170 + $0x1c08] sm:$0xff]
        %v1071 = vld [vmem:[%s170 + $0x1c10] sm:$0xff]
        %v1072 = vld [vmem:[%s170 + $0x1c18] sm:$0xff]
        %v1073 = vld [vmem:[%s170 + $0x1c20] sm:$0xff]
        %v1074 = vld [vmem:[%s170 + $0x1c28] sm:$0xff]
        %v1075 = vld [vmem:[%s170 + $0x1c30] sm:$0xff]
        %v1076 = vld [vmem:[%s170 + $0x1c38] sm:$0xff]
        %v1077 = vld [vmem:[%s170 + $0x1c40] sm:$0xff]
        %v1078 = vld [vmem:[%s170 + $0x1c48] sm:$0xff]
        %v1079 = vld [vmem:[%s170 + $0x1c50] sm:$0xff]
        %v1080 = vld [vmem:[%s170 + $0x1c58] sm:$0xff]
        %v1081 = vld [vmem:[%s170 + $0x1c60] sm:$0xff]
        %v1082 = vld [vmem:[%s170 + $0x1c68] sm:$0xff]
        %v1083 = vld [vmem:[%s170 + $0x1c70] sm:$0xff]
        %v1084 = vld [vmem:[%s170 + $0x1c78] sm:$0xff]
        %v1085 = vld [vmem:[%s170 + $0x1c80] sm:$0xff]
        %v1086 = vld [vmem:[%s170 + $0x1c88] sm:$0xff]
        %v1087 = vld [vmem:[%s170 + $0x1c90] sm:$0xff]
        %v1088 = vld [vmem:[%s170 + $0x1c98] sm:$0xff]
        %v1089 = vld [vmem:[%s170 + $0x1ca0] sm:$0xff]
        %v1090 = vld [vmem:[%s170 + $0x1ca8] sm:$0xff]
        %v1091 = vld [vmem:[%s170 + $0x1cb0] sm:$0xff]
        %v1092 = vld [vmem:[%s170 + $0x1cb8] sm:$0xff]
        %v1093 = vld [vmem:[%s170 + $0x1cc0] sm:$0xff]
        %v1094 = vld [vmem:[%s170 + $0x1cc8] sm:$0xff]
        %v1095 = vld [vmem:[%s170 + $0x1cd0] sm:$0xff]
        %v1096 = vld [vmem:[%s170 + $0x1cd8] sm:$0xff]
        %v1097 = vld [vmem:[%s170 + $0x1ce0] sm:$0xff]
        %v1098 = vld [vmem:[%s170 + $0x1ce8] sm:$0xff]
        %v1099 = vld [vmem:[%s170 + $0x1cf0] sm:$0xff]
        %v1100 = vld [vmem:[%s170 + $0x1cf8] sm:$0xff]
        %v1101 = vld [vmem:[%s170 + $0x1d00] sm:$0xff]
        %v1102 = vld [vmem:[%s170 + $0x1d08] sm:$0xff]
        %v1103 = vld [vmem:[%s170 + $0x1d10] sm:$0xff]
        %v1104 = vld [vmem:[%s170 + $0x1d18] sm:$0xff]
        %v1105 = vld [vmem:[%s170 + $0x1d20] sm:$0xff]
        %v1106 = vld [vmem:[%s170 + $0x1d28] sm:$0xff]
        %v1107 = vld [vmem:[%s170 + $0x1d30] sm:$0xff]
        %v1108 = vld [vmem:[%s170 + $0x1d38] sm:$0xff]
        %v1109 = vld [vmem:[%s170 + $0x1d40] sm:$0xff]
        %v1110 = vld [vmem:[%s170 + $0x1d48] sm:$0xff]
        %v1111 = vld [vmem:[%s170 + $0x1d50] sm:$0xff]
        %v1112 = vld [vmem:[%s170 + $0x1d58] sm:$0xff]
        %v1113 = vld [vmem:[%s170 + $0x1d60] sm:$0xff]
        %v1114 = vld [vmem:[%s170 + $0x1d68] sm:$0xff]
        %v1115 = vld [vmem:[%s170 + $0x1d70] sm:$0xff]
        %v1116 = vld [vmem:[%s170 + $0x1d78] sm:$0xff]
        %v1117 = vld [vmem:[%s170 + $0x1d80] sm:$0xff]
        %v1118 = vld [vmem:[%s170 + $0x1d88] sm:$0xff]
        %v1119 = vld [vmem:[%s170 + $0x1d90] sm:$0xff]
        %v1120 = vld [vmem:[%s170 + $0x1d98] sm:$0xff]
        %v1121 = vld [vmem:[%s170 + $0x1da0] sm:$0xff]
        %v1122 = vld [vmem:[%s170 + $0x1da8] sm:$0xff]
        %v1123 = vld [vmem:[%s170 + $0x1db0] sm:$0xff]
        %v1124 = vld [vmem:[%s170 + $0x1db8] sm:$0xff]
        %v1125 = vld [vmem:[%s170 + $0x1dc0] sm:$0xff]
        %v1126 = vld [vmem:[%s170 + $0x1dc8] sm:$0xff]
        %v1127 = vld [vmem:[%s170 + $0x1dd0] sm:$0xff]
        %v1128 = vld [vmem:[%s170 + $0x1dd8] sm:$0xff]
        %v1129 = vld [vmem:[%s170 + $0x1de0] sm:$0xff]
        %v1130 = vld [vmem:[%s170 + $0x1de8] sm:$0xff]
        %v1131 = vld [vmem:[%s170 + $0x1df0] sm:$0xff]
        %v1132 = vld [vmem:[%s170 + $0x1df8] sm:$0xff]
        %v1133 = vld [vmem:[%s170 + $0x1e00] sm:$0xff]
        %v1134 = vld [vmem:[%s170 + $0x1e08] sm:$0xff]
        %v1135 = vld [vmem:[%s170 + $0x1e10] sm:$0xff]
        %v1136 = vld [vmem:[%s170 + $0x1e18] sm:$0xff]
        %v1137 = vld [vmem:[%s170 + $0x1e20] sm:$0xff]
        %v1138 = vld [vmem:[%s170 + $0x1e28] sm:$0xff]
        %v1139 = vld [vmem:[%s170 + $0x1e30] sm:$0xff]
        %v1140 = vld [vmem:[%s170 + $0x1e38] sm:$0xff]
        %v1141 = vld [vmem:[%s170 + $0x1e40] sm:$0xff]
        %v1142 = vld [vmem:[%s170 + $0x1e48] sm:$0xff]
        %v1143 = vld [vmem:[%s170 + $0x1e50] sm:$0xff]
        %v1144 = vld [vmem:[%s170 + $0x1e58] sm:$0xff]
        %v1145 = vld [vmem:[%s170 + $0x1e60] sm:$0xff]
        %v1146 = vld [vmem:[%s170 + $0x1e68] sm:$0xff]
        %v1147 = vld [vmem:[%s170 + $0x1e70] sm:$0xff]
        %v1148 = vld [vmem:[%s170 + $0x1e78] sm:$0xff]
        %v1149 = vld [vmem:[%s170 + $0x1e80] sm:$0xff]
        %v1150 = vld [vmem:[%s170 + $0x1e88] sm:$0xff]
        %v1151 = vld [vmem:[%s170 + $0x1e90] sm:$0xff]
        %v1152 = vld [vmem:[%s170 + $0x1e98] sm:$0xff]
        %v1153 = vld [vmem:[%s170 + $0x1ea0] sm:$0xff]
        %v1154 = vld [vmem:[%s170 + $0x1ea8] sm:$0xff]
        %v1155 = vld [vmem:[%s170 + $0x1eb0] sm:$0xff]
        %v1156 = vld [vmem:[%s170 + $0x1eb8] sm:$0xff]
        %v1157 = vld [vmem:[%s170 + $0x1ec0] sm:$0xff]
        %v1158 = vld [vmem:[%s170 + $0x1ec8] sm:$0xff]
        %v1159 = vld [vmem:[%s170 + $0x1ed0] sm:$0xff]
        %v1160 = vld [vmem:[%s170 + $0x1ed8] sm:$0xff]
        %v1161 = vld [vmem:[%s170 + $0x1ee0] sm:$0xff]
        %v1162 = vld [vmem:[%s170 + $0x1ee8] sm:$0xff]
        %v1163 = vld [vmem:[%s170 + $0x1ef0] sm:$0xff]
        %v1164 = vld [vmem:[%s170 + $0x1ef8] sm:$0xff]
        %v1165 = vld [vmem:[%s170 + $0x1f00] sm:$0xff]
        %v1166 = vld [vmem:[%s170 + $0x1f08] sm:$0xff]
        %v1167 = vld [vmem:[%s170 + $0x1f10] sm:$0xff]
        %v1168 = vld [vmem:[%s170 + $0x1f18] sm:$0xff]
        %v1169 = vld [vmem:[%s170 + $0x1f20] sm:$0xff]
        %v1170 = vld [vmem:[%s170 + $0x1f28] sm:$0xff]
        %v1171 = vld [vmem:[%s170 + $0x1f30] sm:$0xff]
        %v1172 = vld [vmem:[%s170 + $0x1f38] sm:$0xff]
        %v1173 = vld [vmem:[%s170 + $0x1f40] sm:$0xff]
        %v1174 = vld [vmem:[%s170 + $0x1f48] sm:$0xff]
        %v1175 = vld [vmem:[%s170 + $0x1f50] sm:$0xff]
        %v1176 = vld [vmem:[%s170 + $0x1f58] sm:$0xff]
        %v1177 = vld [vmem:[%s170 + $0x1f60] sm:$0xff]
        %v1178 = vld [vmem:[%s170 + $0x1f68] sm:$0xff]
        %v1179 = vld [vmem:[%s170 + $0x1f70] sm:$0xff]
        %v1180 = vld [vmem:[%s170 + $0x1f78] sm:$0xff]
        %v1181 = vld [vmem:[%s170 + $0x1f80] sm:$0xff]
        %v1182 = vld [vmem:[%s170 + $0x1f88] sm:$0xff]
        %v1183 = vld [vmem:[%s170 + $0x1f90] sm:$0xff]
        %v1184 = vld [vmem:[%s170 + $0x1f98] sm:$0xff]
        %v1185 = vld [vmem:[%s170 + $0x1fa0] sm:$0xff]
        %v1186 = vld [vmem:[%s170 + $0x1fa8] sm:$0xff]
        %v1187 = vld [vmem:[%s170 + $0x1fb0] sm:$0xff]
        %v1188 = vld [vmem:[%s170 + $0x1fb8] sm:$0xff]
        %v1189 = vld [vmem:[%s170 + $0x1fc0] sm:$0xff]
        %v1190 = vld [vmem:[%s170 + $0x1fc8] sm:$0xff]
        %v1191 = vld [vmem:[%s170 + $0x1fd0] sm:$0xff]
        %v1192 = vld [vmem:[%s170 + $0x1fd8] sm:$0xff]
        %v1193 = vld [vmem:[%s170 + $0x1fe0] sm:$0xff]
        %v1194 = vld [vmem:[%s170 + $0x1fe8] sm:$0xff]
        %v1195 = vld [vmem:[%s170 + $0x1ff0] sm:$0xff]
        %v1196 = vld [vmem:[%s170 + $0x1ff8] sm:$0xff]
        %s1197 = sld [smem:[#allocation2]]
        %v1198 = vstv %s1197
        %vm1199 = vcmask 80896
        %v1201 = vsel %vm1199, %v172, 0
        %v1204 = vsel %vm1199, %v173, 0
        %v1207 = vsel %vm1199, %v174, 0
        %v1210 = vsel %vm1199, %v175, 0
        %v1213 = vsel %vm1199, %v176, 0
        %v1216 = vsel %vm1199, %v177, 0
        %v1219 = vsel %vm1199, %v178, 0
        %v1222 = vsel %vm1199, %v179, 0
        %v1225 = vsel %vm1199, %v180, 0
        %v1228 = vsel %vm1199, %v181, 0
        %v1231 = vsel %vm1199, %v182, 0
        %v1234 = vsel %vm1199, %v183, 0
        %v1237 = vsel %vm1199, %v184, 0
        %v1240 = vsel %vm1199, %v185, 0
        %v1243 = vsel %vm1199, %v186, 0
        %v1246 = vsel %vm1199, %v187, 0
        %v1249 = vsel %vm1199, %v188, 0
        %v1252 = vsel %vm1199, %v189, 0
        %v1255 = vsel %vm1199, %v190, 0
        %v1258 = vsel %vm1199, %v191, 0
        %v1261 = vsel %vm1199, %v192, 0
        %v1264 = vsel %vm1199, %v193, 0
        %v1267 = vsel %vm1199, %v194, 0
        %v1270 = vsel %vm1199, %v195, 0
        %v1273 = vsel %vm1199, %v196, 0
        %v1276 = vsel %vm1199, %v197, 0
        %v1279 = vsel %vm1199, %v198, 0
        %v1282 = vsel %vm1199, %v199, 0
        %v1285 = vsel %vm1199, %v200, 0
        %v1288 = vsel %vm1199, %v201, 0
        %v1291 = vsel %vm1199, %v202, 0
        %v1294 = vsel %vm1199, %v203, 0
        %v1297 = vsel %vm1199, %v204, 0
        %v1300 = vsel %vm1199, %v205, 0
        %v1303 = vsel %vm1199, %v206, 0
        %v1306 = vsel %vm1199, %v207, 0
        %v1309 = vsel %vm1199, %v208, 0
        %v1312 = vsel %vm1199, %v209, 0
        %v1315 = vsel %vm1199, %v210, 0
        %v1318 = vsel %vm1199, %v211, 0
        %v1321 = vsel %vm1199, %v212, 0
        %v1324 = vsel %vm1199, %v213, 0
        %v1327 = vsel %vm1199, %v214, 0
        %v1330 = vsel %vm1199, %v215, 0
        %v1333 = vsel %vm1199, %v216, 0
        %v1336 = vsel %vm1199, %v217, 0
        %v1339 = vsel %vm1199, %v218, 0
        %v1342 = vsel %vm1199, %v219, 0
        %v1345 = vsel %vm1199, %v220, 0
        %v1348 = vsel %vm1199, %v221, 0
        %v1351 = vsel %vm1199, %v222, 0
        %v1354 = vsel %vm1199, %v223, 0
        %v1357 = vsel %vm1199, %v224, 0
        %v1360 = vsel %vm1199, %v225, 0
        %v1363 = vsel %vm1199, %v226, 0
        %v1366 = vsel %vm1199, %v227, 0
        %v1369 = vsel %vm1199, %v228, 0
        %v1372 = vsel %vm1199, %v229, 0
        %v1375 = vsel %vm1199, %v230, 0
        %v1378 = vsel %vm1199, %v231, 0
        %v1381 = vsel %vm1199, %v232, 0
        %v1384 = vsel %vm1199, %v233, 0
        %v1387 = vsel %vm1199, %v234, 0
        %v1390 = vsel %vm1199, %v235, 0
        %v1393 = vsel %vm1199, %v236, 0
        %v1396 = vsel %vm1199, %v237, 0
        %v1399 = vsel %vm1199, %v238, 0
        %v1402 = vsel %vm1199, %v239, 0
        %v1405 = vsel %vm1199, %v240, 0
        %v1408 = vsel %vm1199, %v241, 0
        %v1411 = vsel %vm1199, %v242, 0
        %v1414 = vsel %vm1199, %v243, 0
        %v1417 = vsel %vm1199, %v244, 0
        %v1420 = vsel %vm1199, %v245, 0
        %v1423 = vsel %vm1199, %v246, 0
        %v1426 = vsel %vm1199, %v247, 0
        %v1429 = vsel %vm1199, %v248, 0
        %v1432 = vsel %vm1199, %v249, 0
        %v1435 = vsel %vm1199, %v250, 0
        %v1438 = vsel %vm1199, %v251, 0
        %v1441 = vsel %vm1199, %v252, 0
        %v1444 = vsel %vm1199, %v253, 0
        %v1447 = vsel %vm1199, %v254, 0
        %v1450 = vsel %vm1199, %v255, 0
        %v1453 = vsel %vm1199, %v256, 0
        %v1456 = vsel %vm1199, %v257, 0
        %v1459 = vsel %vm1199, %v258, 0
        %v1462 = vsel %vm1199, %v259, 0
        %v1465 = vsel %vm1199, %v260, 0
        %v1468 = vsel %vm1199, %v261, 0
        %v1471 = vsel %vm1199, %v262, 0
        %v1474 = vsel %vm1199, %v263, 0
        %v1477 = vsel %vm1199, %v264, 0
        %v1480 = vsel %vm1199, %v265, 0
        %v1483 = vsel %vm1199, %v266, 0
        %v1486 = vsel %vm1199, %v267, 0
        %v1489 = vsel %vm1199, %v268, 0
        %v1492 = vsel %vm1199, %v269, 0
        %v1495 = vsel %vm1199, %v270, 0
        %v1498 = vsel %vm1199, %v271, 0
        %v1501 = vsel %vm1199, %v272, 0
        %v1504 = vsel %vm1199, %v273, 0
        %v1507 = vsel %vm1199, %v274, 0
        %v1510 = vsel %vm1199, %v275, 0
        %v1513 = vsel %vm1199, %v276, 0
        %v1516 = vsel %vm1199, %v277, 0
        %v1519 = vsel %vm1199, %v278, 0
        %v1522 = vsel %vm1199, %v279, 0
        %v1525 = vsel %vm1199, %v280, 0
        %v1528 = vsel %vm1199, %v281, 0
        %v1531 = vsel %vm1199, %v282, 0
        %v1534 = vsel %vm1199, %v283, 0
        %v1537 = vsel %vm1199, %v284, 0
        %v1540 = vsel %vm1199, %v285, 0
        %v1543 = vsel %vm1199, %v286, 0
        %v1546 = vsel %vm1199, %v287, 0
        %v1549 = vsel %vm1199, %v288, 0
        %v1552 = vsel %vm1199, %v289, 0
        %v1555 = vsel %vm1199, %v290, 0
        %v1558 = vsel %vm1199, %v291, 0
        %v1561 = vsel %vm1199, %v292, 0
        %v1564 = vsel %vm1199, %v293, 0
        %v1567 = vsel %vm1199, %v294, 0
        %v1570 = vsel %vm1199, %v295, 0
        %v1573 = vsel %vm1199, %v296, 0
        %v1576 = vsel %vm1199, %v297, 0
        %v1579 = vsel %vm1199, %v298, 0
        %v1582 = vsel %vm1199, %v299, 0
        %v1585 = vsel %vm1199, %v300, 0
        %v1588 = vsel %vm1199, %v301, 0
        %v1591 = vsel %vm1199, %v302, 0
        %v1594 = vsel %vm1199, %v303, 0
        %v1597 = vsel %vm1199, %v304, 0
        %v1600 = vsel %vm1199, %v305, 0
        %v1603 = vsel %vm1199, %v306, 0
        %v1606 = vsel %vm1199, %v307, 0
        %v1609 = vsel %vm1199, %v308, 0
        %v1612 = vsel %vm1199, %v309, 0
        %v1615 = vsel %vm1199, %v310, 0
        %v1618 = vsel %vm1199, %v311, 0
        %v1621 = vsel %vm1199, %v312, 0
        %v1624 = vsel %vm1199, %v313, 0
        %v1627 = vsel %vm1199, %v314, 0
        %v1630 = vsel %vm1199, %v315, 0
        %v1633 = vsel %vm1199, %v316, 0
        %v1636 = vsel %vm1199, %v317, 0
        %v1639 = vsel %vm1199, %v318, 0
        %v1642 = vsel %vm1199, %v319, 0
        %v1645 = vsel %vm1199, %v320, 0
        %v1648 = vsel %vm1199, %v321, 0
        %v1651 = vsel %vm1199, %v322, 0
        %v1654 = vsel %vm1199, %v323, 0
        %v1657 = vsel %vm1199, %v324, 0
        %v1660 = vsel %vm1199, %v325, 0
        %v1663 = vsel %vm1199, %v326, 0
        %v1666 = vsel %vm1199, %v327, 0
        %v1669 = vsel %vm1199, %v328, 0
        %v1672 = vsel %vm1199, %v329, 0
        %v1675 = vsel %vm1199, %v330, 0
        %v1678 = vsel %vm1199, %v331, 0
        %v1681 = vsel %vm1199, %v332, 0
        %v1684 = vsel %vm1199, %v333, 0
        %v1687 = vsel %vm1199, %v334, 0
        %v1690 = vsel %vm1199, %v335, 0
        %v1693 = vsel %vm1199, %v336, 0
        %v1696 = vsel %vm1199, %v337, 0
        %v1699 = vsel %vm1199, %v338, 0
        %v1702 = vsel %vm1199, %v339, 0
        %v1705 = vsel %vm1199, %v340, 0
        %v1708 = vsel %vm1199, %v341, 0
        %v1711 = vsel %vm1199, %v342, 0
        %v1714 = vsel %vm1199, %v343, 0
        %v1717 = vsel %vm1199, %v344, 0
        %v1720 = vsel %vm1199, %v345, 0
        %v1723 = vsel %vm1199, %v346, 0
        %v1726 = vsel %vm1199, %v347, 0
        %v1729 = vsel %vm1199, %v348, 0
        %v1732 = vsel %vm1199, %v349, 0
        %v1735 = vsel %vm1199, %v350, 0
        %v1738 = vsel %vm1199, %v351, 0
        %v1741 = vsel %vm1199, %v352, 0
        %v1744 = vsel %vm1199, %v353, 0
        %v1747 = vsel %vm1199, %v354, 0
        %v1750 = vsel %vm1199, %v355, 0
        %v1753 = vsel %vm1199, %v356, 0
        %v1756 = vsel %vm1199, %v357, 0
        %v1759 = vsel %vm1199, %v358, 0
        %v1762 = vsel %vm1199, %v359, 0
        %v1765 = vsel %vm1199, %v360, 0
        %v1768 = vsel %vm1199, %v361, 0
        %v1771 = vsel %vm1199, %v362, 0
        %v1774 = vsel %vm1199, %v363, 0
        %v1777 = vsel %vm1199, %v364, 0
        %v1780 = vsel %vm1199, %v365, 0
        %v1783 = vsel %vm1199, %v366, 0
        %v1786 = vsel %vm1199, %v367, 0
        %v1789 = vsel %vm1199, %v368, 0
        %v1792 = vsel %vm1199, %v369, 0
        %v1795 = vsel %vm1199, %v370, 0
        %v1798 = vsel %vm1199, %v371, 0
        %v1801 = vsel %vm1199, %v372, 0
        %v1804 = vsel %vm1199, %v373, 0
        %v1807 = vsel %vm1199, %v374, 0
        %v1810 = vsel %vm1199, %v375, 0
        %v1813 = vsel %vm1199, %v376, 0
        %v1816 = vsel %vm1199, %v377, 0
        %v1819 = vsel %vm1199, %v378, 0
        %v1822 = vsel %vm1199, %v379, 0
        %v1825 = vsel %vm1199, %v380, 0
        %v1828 = vsel %vm1199, %v381, 0
        %v1831 = vsel %vm1199, %v382, 0
        %v1834 = vsel %vm1199, %v383, 0
        %v1837 = vsel %vm1199, %v384, 0
        %v1840 = vsel %vm1199, %v385, 0
        %v1843 = vsel %vm1199, %v386, 0
        %v1846 = vsel %vm1199, %v387, 0
        %v1849 = vsel %vm1199, %v388, 0
        %v1852 = vsel %vm1199, %v389, 0
        %v1855 = vsel %vm1199, %v390, 0
        %v1858 = vsel %vm1199, %v391, 0
        %v1861 = vsel %vm1199, %v392, 0
        %v1864 = vsel %vm1199, %v393, 0
        %v1867 = vsel %vm1199, %v394, 0
        %v1870 = vsel %vm1199, %v395, 0
        %v1873 = vsel %vm1199, %v396, 0
        %v1876 = vsel %vm1199, %v397, 0
        %v1879 = vsel %vm1199, %v398, 0
        %v1882 = vsel %vm1199, %v399, 0
        %v1885 = vsel %vm1199, %v400, 0
        %v1888 = vsel %vm1199, %v401, 0
        %v1891 = vsel %vm1199, %v402, 0
        %v1894 = vsel %vm1199, %v403, 0
        %v1897 = vsel %vm1199, %v404, 0
        %v1900 = vsel %vm1199, %v405, 0
        %v1903 = vsel %vm1199, %v406, 0
        %v1906 = vsel %vm1199, %v407, 0
        %v1909 = vsel %vm1199, %v408, 0
        %v1912 = vsel %vm1199, %v409, 0
        %v1915 = vsel %vm1199, %v410, 0
        %v1918 = vsel %vm1199, %v411, 0
        %v1921 = vsel %vm1199, %v412, 0
        %v1924 = vsel %vm1199, %v413, 0
        %v1927 = vsel %vm1199, %v414, 0
        %v1930 = vsel %vm1199, %v415, 0
        %v1933 = vsel %vm1199, %v416, 0
        %v1936 = vsel %vm1199, %v417, 0
        %v1939 = vsel %vm1199, %v418, 0
        %v1942 = vsel %vm1199, %v419, 0
        %v1945 = vsel %vm1199, %v420, 0
        %v1948 = vsel %vm1199, %v421, 0
        %v1951 = vsel %vm1199, %v422, 0
        %v1954 = vsel %vm1199, %v423, 0
        %v1957 = vsel %vm1199, %v424, 0
        %v1960 = vsel %vm1199, %v425, 0
        %v1963 = vsel %vm1199, %v426, 0
        %v1966 = vsel %vm1199, %v427, 0
        %v1969 = vsel %vm1199, %v428, 0
        %v1972 = vsel %vm1199, %v429, 0
        %v1975 = vsel %vm1199, %v430, 0
        %v1978 = vsel %vm1199, %v431, 0
        %v1981 = vsel %vm1199, %v432, 0
        %v1984 = vsel %vm1199, %v433, 0
        %v1987 = vsel %vm1199, %v434, 0
        %v1990 = vsel %vm1199, %v435, 0
        %v1993 = vsel %vm1199, %v436, 0
        %v1996 = vsel %vm1199, %v437, 0
        %v1999 = vsel %vm1199, %v438, 0
        %v2002 = vsel %vm1199, %v439, 0
        %v2005 = vsel %vm1199, %v440, 0
        %v2008 = vsel %vm1199, %v441, 0
        %v2011 = vsel %vm1199, %v442, 0
        %v2014 = vsel %vm1199, %v443, 0
        %v2017 = vsel %vm1199, %v444, 0
        %v2020 = vsel %vm1199, %v445, 0
        %v2023 = vsel %vm1199, %v446, 0
        %v2026 = vsel %vm1199, %v447, 0
        %v2029 = vsel %vm1199, %v448, 0
        %v2032 = vsel %vm1199, %v449, 0
        %v2035 = vsel %vm1199, %v450, 0
        %v2038 = vsel %vm1199, %v451, 0
        %v2041 = vsel %vm1199, %v452, 0
        %v2044 = vsel %vm1199, %v453, 0
        %v2047 = vsel %vm1199, %v454, 0
        %v2050 = vsel %vm1199, %v455, 0
        %v2053 = vsel %vm1199, %v456, 0
        %v2056 = vsel %vm1199, %v457, 0
        %v2059 = vsel %vm1199, %v458, 0
        %v2062 = vsel %vm1199, %v459, 0
        %v2065 = vsel %vm1199, %v460, 0
        %v2068 = vsel %vm1199, %v461, 0
        %v2071 = vsel %vm1199, %v462, 0
        %v2074 = vsel %vm1199, %v463, 0
        %v2077 = vsel %vm1199, %v464, 0
        %v2080 = vsel %vm1199, %v465, 0
        %v2083 = vsel %vm1199, %v466, 0
        %v2086 = vsel %vm1199, %v467, 0
        %v2089 = vsel %vm1199, %v468, 0
        %v2092 = vsel %vm1199, %v469, 0
        %v2095 = vsel %vm1199, %v470, 0
        %v2098 = vsel %vm1199, %v471, 0
        %v2101 = vsel %vm1199, %v472, 0
        %v2104 = vsel %vm1199, %v473, 0
        %v2107 = vsel %vm1199, %v474, 0
        %v2110 = vsel %vm1199, %v475, 0
        %v2113 = vsel %vm1199, %v476, 0
        %v2116 = vsel %vm1199, %v477, 0
        %v2119 = vsel %vm1199, %v478, 0
        %v2122 = vsel %vm1199, %v479, 0
        %v2125 = vsel %vm1199, %v480, 0
        %v2128 = vsel %vm1199, %v481, 0
        %v2131 = vsel %vm1199, %v482, 0
        %v2134 = vsel %vm1199, %v483, 0
        %v2137 = vsel %vm1199, %v484, 0
        %v2140 = vsel %vm1199, %v485, 0
        %v2143 = vsel %vm1199, %v486, 0
        %v2146 = vsel %vm1199, %v487, 0
        %v2149 = vsel %vm1199, %v488, 0
        %v2152 = vsel %vm1199, %v489, 0
        %v2155 = vsel %vm1199, %v490, 0
        %v2158 = vsel %vm1199, %v491, 0
        %v2161 = vsel %vm1199, %v492, 0
        %v2164 = vsel %vm1199, %v493, 0
        %v2167 = vsel %vm1199, %v494, 0
        %v2170 = vsel %vm1199, %v495, 0
        %v2173 = vsel %vm1199, %v496, 0
        %v2176 = vsel %vm1199, %v497, 0
        %v2179 = vsel %vm1199, %v498, 0
        %v2182 = vsel %vm1199, %v499, 0
        %v2185 = vsel %vm1199, %v500, 0
        %v2188 = vsel %vm1199, %v501, 0
        %v2191 = vsel %vm1199, %v502, 0
        %v2194 = vsel %vm1199, %v503, 0
        %v2197 = vsel %vm1199, %v504, 0
        %v2200 = vsel %vm1199, %v505, 0
        %v2203 = vsel %vm1199, %v506, 0
        %v2206 = vsel %vm1199, %v507, 0
        %v2209 = vsel %vm1199, %v508, 0
        %v2212 = vsel %vm1199, %v509, 0
        %v2215 = vsel %vm1199, %v510, 0
        %v2218 = vsel %vm1199, %v511, 0
        %v2221 = vsel %vm1199, %v512, 0
        %v2224 = vsel %vm1199, %v513, 0
        %v2227 = vsel %vm1199, %v514, 0
        %v2230 = vsel %vm1199, %v515, 0
        %v2233 = vsel %vm1199, %v516, 0
        %v2236 = vsel %vm1199, %v517, 0
        %v2239 = vsel %vm1199, %v518, 0
        %v2242 = vsel %vm1199, %v519, 0
        %v2245 = vsel %vm1199, %v520, 0
        %v2248 = vsel %vm1199, %v521, 0
        %v2251 = vsel %vm1199, %v522, 0
        %v2254 = vsel %vm1199, %v523, 0
        %v2257 = vsel %vm1199, %v524, 0
        %v2260 = vsel %vm1199, %v525, 0
        %v2263 = vsel %vm1199, %v526, 0
        %v2266 = vsel %vm1199, %v527, 0
        %v2269 = vsel %vm1199, %v528, 0
        %v2272 = vsel %vm1199, %v529, 0
        %v2275 = vsel %vm1199, %v530, 0
        %v2278 = vsel %vm1199, %v531, 0
        %v2281 = vsel %vm1199, %v532, 0
        %v2284 = vsel %vm1199, %v533, 0
        %v2287 = vsel %vm1199, %v534, 0
        %v2290 = vsel %vm1199, %v535, 0
        %v2293 = vsel %vm1199, %v536, 0
        %v2296 = vsel %vm1199, %v537, 0
        %v2299 = vsel %vm1199, %v538, 0
        %v2302 = vsel %vm1199, %v539, 0
        %v2305 = vsel %vm1199, %v540, 0
        %v2308 = vsel %vm1199, %v541, 0
        %v2311 = vsel %vm1199, %v542, 0
        %v2314 = vsel %vm1199, %v543, 0
        %v2317 = vsel %vm1199, %v544, 0
        %v2320 = vsel %vm1199, %v545, 0
        %v2323 = vsel %vm1199, %v546, 0
        %v2326 = vsel %vm1199, %v547, 0
        %v2329 = vsel %vm1199, %v548, 0
        %v2332 = vsel %vm1199, %v549, 0
        %v2335 = vsel %vm1199, %v550, 0
        %v2338 = vsel %vm1199, %v551, 0
        %v2341 = vsel %vm1199, %v552, 0
        %v2344 = vsel %vm1199, %v553, 0
        %v2347 = vsel %vm1199, %v554, 0
        %v2350 = vsel %vm1199, %v555, 0
        %v2353 = vsel %vm1199, %v556, 0
        %v2356 = vsel %vm1199, %v557, 0
        %v2359 = vsel %vm1199, %v558, 0
        %v2362 = vsel %vm1199, %v559, 0
        %v2365 = vsel %vm1199, %v560, 0
        %v2368 = vsel %vm1199, %v561, 0
        %v2371 = vsel %vm1199, %v562, 0
        %v2374 = vsel %vm1199, %v563, 0
        %v2377 = vsel %vm1199, %v564, 0
        %v2380 = vsel %vm1199, %v565, 0
        %v2383 = vsel %vm1199, %v566, 0
        %v2386 = vsel %vm1199, %v567, 0
        %v2389 = vsel %vm1199, %v568, 0
        %v2392 = vsel %vm1199, %v569, 0
        %v2395 = vsel %vm1199, %v570, 0
        %v2398 = vsel %vm1199, %v571, 0
        %v2401 = vsel %vm1199, %v572, 0
        %v2404 = vsel %vm1199, %v573, 0
        %v2407 = vsel %vm1199, %v574, 0
        %v2410 = vsel %vm1199, %v575, 0
        %v2413 = vsel %vm1199, %v576, 0
        %v2416 = vsel %vm1199, %v577, 0
        %v2419 = vsel %vm1199, %v578, 0
        %v2422 = vsel %vm1199, %v579, 0
        %v2425 = vsel %vm1199, %v580, 0
        %v2428 = vsel %vm1199, %v581, 0
        %v2431 = vsel %vm1199, %v582, 0
        %v2434 = vsel %vm1199, %v583, 0
        %v2437 = vsel %vm1199, %v584, 0
        %v2440 = vsel %vm1199, %v585, 0
        %v2443 = vsel %vm1199, %v586, 0
        %v2446 = vsel %vm1199, %v587, 0
        %v2449 = vsel %vm1199, %v588, 0
        %v2452 = vsel %vm1199, %v589, 0
        %v2455 = vsel %vm1199, %v590, 0
        %v2458 = vsel %vm1199, %v591, 0
        %v2461 = vsel %vm1199, %v592, 0
        %v2464 = vsel %vm1199, %v593, 0
        %v2467 = vsel %vm1199, %v594, 0
        %v2470 = vsel %vm1199, %v595, 0
        %v2473 = vsel %vm1199, %v596, 0
        %v2476 = vsel %vm1199, %v597, 0
        %v2479 = vsel %vm1199, %v598, 0
        %v2482 = vsel %vm1199, %v599, 0
        %v2485 = vsel %vm1199, %v600, 0
        %v2488 = vsel %vm1199, %v601, 0
        %v2491 = vsel %vm1199, %v602, 0
        %v2494 = vsel %vm1199, %v603, 0
        %v2497 = vsel %vm1199, %v604, 0
        %v2500 = vsel %vm1199, %v605, 0
        %v2503 = vsel %vm1199, %v606, 0
        %v2506 = vsel %vm1199, %v607, 0
        %v2509 = vsel %vm1199, %v608, 0
        %v2512 = vsel %vm1199, %v609, 0
        %v2515 = vsel %vm1199, %v610, 0
        %v2518 = vsel %vm1199, %v611, 0
        %v2521 = vsel %vm1199, %v612, 0
        %v2524 = vsel %vm1199, %v613, 0
        %v2527 = vsel %vm1199, %v614, 0
        %v2530 = vsel %vm1199, %v615, 0
        %v2533 = vsel %vm1199, %v616, 0
        %v2536 = vsel %vm1199, %v617, 0
        %v2539 = vsel %vm1199, %v618, 0
        %v2542 = vsel %vm1199, %v619, 0
        %v2545 = vsel %vm1199, %v620, 0
        %v2548 = vsel %vm1199, %v621, 0
        %v2551 = vsel %vm1199, %v622, 0
        %v2554 = vsel %vm1199, %v623, 0
        %v2557 = vsel %vm1199, %v624, 0
        %v2560 = vsel %vm1199, %v625, 0
        %v2563 = vsel %vm1199, %v626, 0
        %v2566 = vsel %vm1199, %v627, 0
        %v2569 = vsel %vm1199, %v628, 0
        %v2572 = vsel %vm1199, %v629, 0
        %v2575 = vsel %vm1199, %v630, 0
        %v2578 = vsel %vm1199, %v631, 0
        %v2581 = vsel %vm1199, %v632, 0
        %v2584 = vsel %vm1199, %v633, 0
        %v2587 = vsel %vm1199, %v634, 0
        %v2590 = vsel %vm1199, %v635, 0
        %v2593 = vsel %vm1199, %v636, 0
        %v2596 = vsel %vm1199, %v637, 0
        %v2599 = vsel %vm1199, %v638, 0
        %v2602 = vsel %vm1199, %v639, 0
        %v2605 = vsel %vm1199, %v640, 0
        %v2608 = vsel %vm1199, %v641, 0
        %v2611 = vsel %vm1199, %v642, 0
        %v2614 = vsel %vm1199, %v643, 0
        %v2617 = vsel %vm1199, %v644, 0
        %v2620 = vsel %vm1199, %v645, 0
        %v2623 = vsel %vm1199, %v646, 0
        %v2626 = vsel %vm1199, %v647, 0
        %v2629 = vsel %vm1199, %v648, 0
        %v2632 = vsel %vm1199, %v649, 0
        %v2635 = vsel %vm1199, %v650, 0
        %v2638 = vsel %vm1199, %v651, 0
        %v2641 = vsel %vm1199, %v652, 0
        %v2644 = vsel %vm1199, %v653, 0
        %v2647 = vsel %vm1199, %v654, 0
        %v2650 = vsel %vm1199, %v655, 0
        %v2653 = vsel %vm1199, %v656, 0
        %v2656 = vsel %vm1199, %v657, 0
        %v2659 = vsel %vm1199, %v658, 0
        %v2662 = vsel %vm1199, %v659, 0
        %v2665 = vsel %vm1199, %v660, 0
        %v2668 = vsel %vm1199, %v661, 0
        %v2671 = vsel %vm1199, %v662, 0
        %v2674 = vsel %vm1199, %v663, 0
        %v2677 = vsel %vm1199, %v664, 0
        %v2680 = vsel %vm1199, %v665, 0
        %v2683 = vsel %vm1199, %v666, 0
        %v2686 = vsel %vm1199, %v667, 0
        %v2689 = vsel %vm1199, %v668, 0
        %v2692 = vsel %vm1199, %v669, 0
        %v2695 = vsel %vm1199, %v670, 0
        %v2698 = vsel %vm1199, %v671, 0
        %v2701 = vsel %vm1199, %v672, 0
        %v2704 = vsel %vm1199, %v673, 0
        %v2707 = vsel %vm1199, %v674, 0
        %v2710 = vsel %vm1199, %v675, 0
        %v2713 = vsel %vm1199, %v676, 0
        %v2716 = vsel %vm1199, %v677, 0
        %v2719 = vsel %vm1199, %v678, 0
        %v2722 = vsel %vm1199, %v679, 0
        %v2725 = vsel %vm1199, %v680, 0
        %v2728 = vsel %vm1199, %v681, 0
        %v2731 = vsel %vm1199, %v682, 0
        %v2734 = vsel %vm1199, %v683, 0
        %v2737 = vsel %vm1199, %v684, 0
        %v2740 = vsel %vm1199, %v685, 0
        %v2743 = vsel %vm1199, %v686, 0
        %v2746 = vsel %vm1199, %v687, 0
        %v2749 = vsel %vm1199, %v688, 0
        %v2752 = vsel %vm1199, %v689, 0
        %v2755 = vsel %vm1199, %v690, 0
        %v2758 = vsel %vm1199, %v691, 0
        %v2761 = vsel %vm1199, %v692, 0
        %v2764 = vsel %vm1199, %v693, 0
        %v2767 = vsel %vm1199, %v694, 0
        %v2770 = vsel %vm1199, %v695, 0
        %v2773 = vsel %vm1199, %v696, 0
        %v2776 = vsel %vm1199, %v697, 0
        %v2779 = vsel %vm1199, %v698, 0
        %v2782 = vsel %vm1199, %v699, 0
        %v2785 = vsel %vm1199, %v700, 0
        %v2788 = vsel %vm1199, %v701, 0
        %v2791 = vsel %vm1199, %v702, 0
        %v2794 = vsel %vm1199, %v703, 0
        %v2797 = vsel %vm1199, %v704, 0
        %v2800 = vsel %vm1199, %v705, 0
        %v2803 = vsel %vm1199, %v706, 0
        %v2806 = vsel %vm1199, %v707, 0
        %v2809 = vsel %vm1199, %v708, 0
        %v2812 = vsel %vm1199, %v709, 0
        %v2815 = vsel %vm1199, %v710, 0
        %v2818 = vsel %vm1199, %v711, 0
        %v2821 = vsel %vm1199, %v712, 0
        %v2824 = vsel %vm1199, %v713, 0
        %v2827 = vsel %vm1199, %v714, 0
        %v2830 = vsel %vm1199, %v715, 0
        %v2833 = vsel %vm1199, %v716, 0
        %v2836 = vsel %vm1199, %v717, 0
        %v2839 = vsel %vm1199, %v718, 0
        %v2842 = vsel %vm1199, %v719, 0
        %v2845 = vsel %vm1199, %v720, 0
        %v2848 = vsel %vm1199, %v721, 0
        %v2851 = vsel %vm1199, %v722, 0
        %v2854 = vsel %vm1199, %v723, 0
        %v2857 = vsel %vm1199, %v724, 0
        %v2860 = vsel %vm1199, %v725, 0
        %v2863 = vsel %vm1199, %v726, 0
        %v2866 = vsel %vm1199, %v727, 0
        %v2869 = vsel %vm1199, %v728, 0
        %v2872 = vsel %vm1199, %v729, 0
        %v2875 = vsel %vm1199, %v730, 0
        %v2878 = vsel %vm1199, %v731, 0
        %v2881 = vsel %vm1199, %v732, 0
        %v2884 = vsel %vm1199, %v733, 0
        %v2887 = vsel %vm1199, %v734, 0
        %v2890 = vsel %vm1199, %v735, 0
        %v2893 = vsel %vm1199, %v736, 0
        %v2896 = vsel %vm1199, %v737, 0
        %v2899 = vsel %vm1199, %v738, 0
        %v2902 = vsel %vm1199, %v739, 0
        %v2905 = vsel %vm1199, %v740, 0
        %v2908 = vsel %vm1199, %v741, 0
        %v2911 = vsel %vm1199, %v742, 0
        %v2914 = vsel %vm1199, %v743, 0
        %v2917 = vsel %vm1199, %v744, 0
        %v2920 = vsel %vm1199, %v745, 0
        %v2923 = vsel %vm1199, %v746, 0
        %v2926 = vsel %vm1199, %v747, 0
        %v2929 = vsel %vm1199, %v748, 0
        %v2932 = vsel %vm1199, %v749, 0
        %v2935 = vsel %vm1199, %v750, 0
        %v2938 = vsel %vm1199, %v751, 0
        %v2941 = vsel %vm1199, %v752, 0
        %v2944 = vsel %vm1199, %v753, 0
        %v2947 = vsel %vm1199, %v754, 0
        %v2950 = vsel %vm1199, %v755, 0
        %v2953 = vsel %vm1199, %v756, 0
        %v2956 = vsel %vm1199, %v757, 0
        %v2959 = vsel %vm1199, %v758, 0
        %v2962 = vsel %vm1199, %v759, 0
        %v2965 = vsel %vm1199, %v760, 0
        %v2968 = vsel %vm1199, %v761, 0
        %v2971 = vsel %vm1199, %v762, 0
        %v2974 = vsel %vm1199, %v763, 0
        %v2977 = vsel %vm1199, %v764, 0
        %v2980 = vsel %vm1199, %v765, 0
        %v2983 = vsel %vm1199, %v766, 0
        %v2986 = vsel %vm1199, %v767, 0
        %v2989 = vsel %vm1199, %v768, 0
        %v2992 = vsel %vm1199, %v769, 0
        %v2995 = vsel %vm1199, %v770, 0
        %v2998 = vsel %vm1199, %v771, 0
        %v3001 = vsel %vm1199, %v772, 0
        %v3004 = vsel %vm1199, %v773, 0
        %v3007 = vsel %vm1199, %v774, 0
        %v3010 = vsel %vm1199, %v775, 0
        %v3013 = vsel %vm1199, %v776, 0
        %v3016 = vsel %vm1199, %v777, 0
        %v3019 = vsel %vm1199, %v778, 0
        %v3022 = vsel %vm1199, %v779, 0
        %v3025 = vsel %vm1199, %v780, 0
        %v3028 = vsel %vm1199, %v781, 0
        %v3031 = vsel %vm1199, %v782, 0
        %v3034 = vsel %vm1199, %v783, 0
        %v3037 = vsel %vm1199, %v784, 0
        %v3040 = vsel %vm1199, %v785, 0
        %v3043 = vsel %vm1199, %v786, 0
        %v3046 = vsel %vm1199, %v787, 0
        %v3049 = vsel %vm1199, %v788, 0
        %v3052 = vsel %vm1199, %v789, 0
        %v3055 = vsel %vm1199, %v790, 0
        %v3058 = vsel %vm1199, %v791, 0
        %v3061 = vsel %vm1199, %v792, 0
        %v3064 = vsel %vm1199, %v793, 0
        %v3067 = vsel %vm1199, %v794, 0
        %v3070 = vsel %vm1199, %v795, 0
        %v3073 = vsel %vm1199, %v796, 0
        %v3076 = vsel %vm1199, %v797, 0
        %v3079 = vsel %vm1199, %v798, 0
        %v3082 = vsel %vm1199, %v799, 0
        %v3085 = vsel %vm1199, %v800, 0
        %v3088 = vsel %vm1199, %v801, 0
        %v3091 = vsel %vm1199, %v802, 0
        %v3094 = vsel %vm1199, %v803, 0
        %v3097 = vsel %vm1199, %v804, 0
        %v3100 = vsel %vm1199, %v805, 0
        %v3103 = vsel %vm1199, %v806, 0
        %v3106 = vsel %vm1199, %v807, 0
        %v3109 = vsel %vm1199, %v808, 0
        %v3112 = vsel %vm1199, %v809, 0
        %v3115 = vsel %vm1199, %v810, 0
        %v3118 = vsel %vm1199, %v811, 0
        %v3121 = vsel %vm1199, %v812, 0
        %v3124 = vsel %vm1199, %v813, 0
        %v3127 = vsel %vm1199, %v814, 0
        %v3130 = vsel %vm1199, %v815, 0
        %v3133 = vsel %vm1199, %v816, 0
        %v3136 = vsel %vm1199, %v817, 0
        %v3139 = vsel %vm1199, %v818, 0
        %v3142 = vsel %vm1199, %v819, 0
        %v3145 = vsel %vm1199, %v820, 0
        %v3148 = vsel %vm1199, %v821, 0
        %v3151 = vsel %vm1199, %v822, 0
        %v3154 = vsel %vm1199, %v823, 0
        %v3157 = vsel %vm1199, %v824, 0
        %v3160 = vsel %vm1199, %v825, 0
        %v3163 = vsel %vm1199, %v826, 0
        %v3166 = vsel %vm1199, %v827, 0
        %v3169 = vsel %vm1199, %v828, 0
        %v3172 = vsel %vm1199, %v829, 0
        %v3175 = vsel %vm1199, %v830, 0
        %v3178 = vsel %vm1199, %v831, 0
        %v3181 = vsel %vm1199, %v832, 0
        %v3184 = vsel %vm1199, %v833, 0
        %v3187 = vsel %vm1199, %v834, 0
        %v3190 = vsel %vm1199, %v835, 0
        %v3193 = vsel %vm1199, %v836, 0
        %v3196 = vsel %vm1199, %v837, 0
        %v3199 = vsel %vm1199, %v838, 0
        %v3202 = vsel %vm1199, %v839, 0
        %v3205 = vsel %vm1199, %v840, 0
        %v3208 = vsel %vm1199, %v841, 0
        %v3211 = vsel %vm1199, %v842, 0
        %v3214 = vsel %vm1199, %v843, 0
        %v3217 = vsel %vm1199, %v844, 0
        %v3220 = vsel %vm1199, %v845, 0
        %v3223 = vsel %vm1199, %v846, 0
        %v3226 = vsel %vm1199, %v847, 0
        %v3229 = vsel %vm1199, %v848, 0
        %v3232 = vsel %vm1199, %v849, 0
        %v3235 = vsel %vm1199, %v850, 0
        %v3238 = vsel %vm1199, %v851, 0
        %v3241 = vsel %vm1199, %v852, 0
        %v3244 = vsel %vm1199, %v853, 0
        %v3247 = vsel %vm1199, %v854, 0
        %v3250 = vsel %vm1199, %v855, 0
        %v3253 = vsel %vm1199, %v856, 0
        %v3256 = vsel %vm1199, %v857, 0
        %v3259 = vsel %vm1199, %v858, 0
        %v3262 = vsel %vm1199, %v859, 0
        %v3265 = vsel %vm1199, %v860, 0
        %v3268 = vsel %vm1199, %v861, 0
        %v3271 = vsel %vm1199, %v862, 0
        %v3274 = vsel %vm1199, %v863, 0
        %v3277 = vsel %vm1199, %v864, 0
        %v3280 = vsel %vm1199, %v865, 0
        %v3283 = vsel %vm1199, %v866, 0
        %v3286 = vsel %vm1199, %v867, 0
        %v3289 = vsel %vm1199, %v868, 0
        %v3292 = vsel %vm1199, %v869, 0
        %v3295 = vsel %vm1199, %v870, 0
        %v3298 = vsel %vm1199, %v871, 0
        %v3301 = vsel %vm1199, %v872, 0
        %v3304 = vsel %vm1199, %v873, 0
        %v3307 = vsel %vm1199, %v874, 0
        %v3310 = vsel %vm1199, %v875, 0
        %v3313 = vsel %vm1199, %v876, 0
        %v3316 = vsel %vm1199, %v877, 0
        %v3319 = vsel %vm1199, %v878, 0
        %v3322 = vsel %vm1199, %v879, 0
        %v3325 = vsel %vm1199, %v880, 0
        %v3328 = vsel %vm1199, %v881, 0
        %v3331 = vsel %vm1199, %v882, 0
        %v3334 = vsel %vm1199, %v883, 0
        %v3337 = vsel %vm1199, %v884, 0
        %v3340 = vsel %vm1199, %v885, 0
        %v3343 = vsel %vm1199, %v886, 0
        %v3346 = vsel %vm1199, %v887, 0
        %v3349 = vsel %vm1199, %v888, 0
        %v3352 = vsel %vm1199, %v889, 0
        %v3355 = vsel %vm1199, %v890, 0
        %v3358 = vsel %vm1199, %v891, 0
        %v3361 = vsel %vm1199, %v892, 0
        %v3364 = vsel %vm1199, %v893, 0
        %v3367 = vsel %vm1199, %v894, 0
        %v3370 = vsel %vm1199, %v895, 0
        %v3373 = vsel %vm1199, %v896, 0
        %v3376 = vsel %vm1199, %v897, 0
        %v3379 = vsel %vm1199, %v898, 0
        %v3382 = vsel %vm1199, %v899, 0
        %v3385 = vsel %vm1199, %v900, 0
        %v3388 = vsel %vm1199, %v901, 0
        %v3391 = vsel %vm1199, %v902, 0
        %v3394 = vsel %vm1199, %v903, 0
        %v3397 = vsel %vm1199, %v904, 0
        %v3400 = vsel %vm1199, %v905, 0
        %v3403 = vsel %vm1199, %v906, 0
        %v3406 = vsel %vm1199, %v907, 0
        %v3409 = vsel %vm1199, %v908, 0
        %v3412 = vsel %vm1199, %v909, 0
        %v3415 = vsel %vm1199, %v910, 0
        %v3418 = vsel %vm1199, %v911, 0
        %v3421 = vsel %vm1199, %v912, 0
        %v3424 = vsel %vm1199, %v913, 0
        %v3427 = vsel %vm1199, %v914, 0
        %v3430 = vsel %vm1199, %v915, 0
        %v3433 = vsel %vm1199, %v916, 0
        %v3436 = vsel %vm1199, %v917, 0
        %v3439 = vsel %vm1199, %v918, 0
        %v3442 = vsel %vm1199, %v919, 0
        %v3445 = vsel %vm1199, %v920, 0
        %v3448 = vsel %vm1199, %v921, 0
        %v3451 = vsel %vm1199, %v922, 0
        %v3454 = vsel %vm1199, %v923, 0
        %v3457 = vsel %vm1199, %v924, 0
        %v3460 = vsel %vm1199, %v925, 0
        %v3463 = vsel %vm1199, %v926, 0
        %v3466 = vsel %vm1199, %v927, 0
        %v3469 = vsel %vm1199, %v928, 0
        %v3472 = vsel %vm1199, %v929, 0
        %v3475 = vsel %vm1199, %v930, 0
        %v3478 = vsel %vm1199, %v931, 0
        %v3481 = vsel %vm1199, %v932, 0
        %v3484 = vsel %vm1199, %v933, 0
        %v3487 = vsel %vm1199, %v934, 0
        %v3490 = vsel %vm1199, %v935, 0
        %v3493 = vsel %vm1199, %v936, 0
        %v3496 = vsel %vm1199, %v937, 0
        %v3499 = vsel %vm1199, %v938, 0
        %v3502 = vsel %vm1199, %v939, 0
        %v3505 = vsel %vm1199, %v940, 0
        %v3508 = vsel %vm1199, %v941, 0
        %v3511 = vsel %vm1199, %v942, 0
        %v3514 = vsel %vm1199, %v943, 0
        %v3517 = vsel %vm1199, %v944, 0
        %v3520 = vsel %vm1199, %v945, 0
        %v3523 = vsel %vm1199, %v946, 0
        %v3526 = vsel %vm1199, %v947, 0
        %v3529 = vsel %vm1199, %v948, 0
        %v3532 = vsel %vm1199, %v949, 0
        %v3535 = vsel %vm1199, %v950, 0
        %v3538 = vsel %vm1199, %v951, 0
        %v3541 = vsel %vm1199, %v952, 0
        %v3544 = vsel %vm1199, %v953, 0
        %v3547 = vsel %vm1199, %v954, 0
        %v3550 = vsel %vm1199, %v955, 0
        %v3553 = vsel %vm1199, %v956, 0
        %v3556 = vsel %vm1199, %v957, 0
        %v3559 = vsel %vm1199, %v958, 0
        %v3562 = vsel %vm1199, %v959, 0
        %v3565 = vsel %vm1199, %v960, 0
        %v3568 = vsel %vm1199, %v961, 0
        %v3571 = vsel %vm1199, %v962, 0
        %v3574 = vsel %vm1199, %v963, 0
        %v3577 = vsel %vm1199, %v964, 0
        %v3580 = vsel %vm1199, %v965, 0
        %v3583 = vsel %vm1199, %v966, 0
        %v3586 = vsel %vm1199, %v967, 0
        %v3589 = vsel %vm1199, %v968, 0
        %v3592 = vsel %vm1199, %v969, 0
        %v3595 = vsel %vm1199, %v970, 0
        %v3598 = vsel %vm1199, %v971, 0
        %v3601 = vsel %vm1199, %v972, 0
        %v3604 = vsel %vm1199, %v973, 0
        %v3607 = vsel %vm1199, %v974, 0
        %v3610 = vsel %vm1199, %v975, 0
        %v3613 = vsel %vm1199, %v976, 0
        %v3616 = vsel %vm1199, %v977, 0
        %v3619 = vsel %vm1199, %v978, 0
        %v3622 = vsel %vm1199, %v979, 0
        %v3625 = vsel %vm1199, %v980, 0
        %v3628 = vsel %vm1199, %v981, 0
        %v3631 = vsel %vm1199, %v982, 0
        %v3634 = vsel %vm1199, %v983, 0
        %v3637 = vsel %vm1199, %v984, 0
        %v3640 = vsel %vm1199, %v985, 0
        %v3643 = vsel %vm1199, %v986, 0
        %v3646 = vsel %vm1199, %v987, 0
        %v3649 = vsel %vm1199, %v988, 0
        %v3652 = vsel %vm1199, %v989, 0
        %v3655 = vsel %vm1199, %v990, 0
        %v3658 = vsel %vm1199, %v991, 0
        %v3661 = vsel %vm1199, %v992, 0
        %v3664 = vsel %vm1199, %v993, 0
        %v3667 = vsel %vm1199, %v994, 0
        %v3670 = vsel %vm1199, %v995, 0
        %v3673 = vsel %vm1199, %v996, 0
        %v3676 = vsel %vm1199, %v997, 0
        %v3679 = vsel %vm1199, %v998, 0
        %v3682 = vsel %vm1199, %v999, 0
        %v3685 = vsel %vm1199, %v1000, 0
        %v3688 = vsel %vm1199, %v1001, 0
        %v3691 = vsel %vm1199, %v1002, 0
        %v3694 = vsel %vm1199, %v1003, 0
        %v3697 = vsel %vm1199, %v1004, 0
        %v3700 = vsel %vm1199, %v1005, 0
        %v3703 = vsel %vm1199, %v1006, 0
        %v3706 = vsel %vm1199, %v1007, 0
        %v3709 = vsel %vm1199, %v1008, 0
        %v3712 = vsel %vm1199, %v1009, 0
        %v3715 = vsel %vm1199, %v1010, 0
        %v3718 = vsel %vm1199, %v1011, 0
        %v3721 = vsel %vm1199, %v1012, 0
        %v3724 = vsel %vm1199, %v1013, 0
        %v3727 = vsel %vm1199, %v1014, 0
        %v3730 = vsel %vm1199, %v1015, 0
        %v3733 = vsel %vm1199, %v1016, 0
        %v3736 = vsel %vm1199, %v1017, 0
        %v3739 = vsel %vm1199, %v1018, 0
        %v3742 = vsel %vm1199, %v1019, 0
        %v3745 = vsel %vm1199, %v1020, 0
        %v3748 = vsel %vm1199, %v1021, 0
        %v3751 = vsel %vm1199, %v1022, 0
        %v3754 = vsel %vm1199, %v1023, 0
        %v3757 = vsel %vm1199, %v1024, 0
        %v3760 = vsel %vm1199, %v1025, 0
        %v3763 = vsel %vm1199, %v1026, 0
        %v3766 = vsel %vm1199, %v1027, 0
        %v3769 = vsel %vm1199, %v1028, 0
        %v3772 = vsel %vm1199, %v1029, 0
        %v3775 = vsel %vm1199, %v1030, 0
        %v3778 = vsel %vm1199, %v1031, 0
        %v3781 = vsel %vm1199, %v1032, 0
        %v3784 = vsel %vm1199, %v1033, 0
        %v3787 = vsel %vm1199, %v1034, 0
        %v3790 = vsel %vm1199, %v1035, 0
        %v3793 = vsel %vm1199, %v1036, 0
        %v3796 = vsel %vm1199, %v1037, 0
        %v3799 = vsel %vm1199, %v1038, 0
        %v3802 = vsel %vm1199, %v1039, 0
        %v3805 = vsel %vm1199, %v1040, 0
        %v3808 = vsel %vm1199, %v1041, 0
        %v3811 = vsel %vm1199, %v1042, 0
        %v3814 = vsel %vm1199, %v1043, 0
        %v3817 = vsel %vm1199, %v1044, 0
        %v3820 = vsel %vm1199, %v1045, 0
        %v3823 = vsel %vm1199, %v1046, 0
        %v3826 = vsel %vm1199, %v1047, 0
        %v3829 = vsel %vm1199, %v1048, 0
        %v3832 = vsel %vm1199, %v1049, 0
        %v3835 = vsel %vm1199, %v1050, 0
        %v3838 = vsel %vm1199, %v1051, 0
        %v3841 = vsel %vm1199, %v1052, 0
        %v3844 = vsel %vm1199, %v1053, 0
        %v3847 = vsel %vm1199, %v1054, 0
        %v3850 = vsel %vm1199, %v1055, 0
        %v3853 = vsel %vm1199, %v1056, 0
        %v3856 = vsel %vm1199, %v1057, 0
        %v3859 = vsel %vm1199, %v1058, 0
        %v3862 = vsel %vm1199, %v1059, 0
        %v3865 = vsel %vm1199, %v1060, 0
        %v3868 = vsel %vm1199, %v1061, 0
        %v3871 = vsel %vm1199, %v1062, 0
        %v3874 = vsel %vm1199, %v1063, 0
        %v3877 = vsel %vm1199, %v1064, 0
        %v3880 = vsel %vm1199, %v1065, 0
        %v3883 = vsel %vm1199, %v1066, 0
        %v3886 = vsel %vm1199, %v1067, 0
        %v3889 = vsel %vm1199, %v1068, 0
        %v3892 = vsel %vm1199, %v1069, 0
        %v3895 = vsel %vm1199, %v1070, 0
        %v3898 = vsel %vm1199, %v1071, 0
        %v3901 = vsel %vm1199, %v1072, 0
        %v3904 = vsel %vm1199, %v1073, 0
        %v3907 = vsel %vm1199, %v1074, 0
        %v3910 = vsel %vm1199, %v1075, 0
        %v3913 = vsel %vm1199, %v1076, 0
        %v3916 = vsel %vm1199, %v1077, 0
        %v3919 = vsel %vm1199, %v1078, 0
        %v3922 = vsel %vm1199, %v1079, 0
        %v3925 = vsel %vm1199, %v1080, 0
        %v3928 = vsel %vm1199, %v1081, 0
        %v3931 = vsel %vm1199, %v1082, 0
        %v3934 = vsel %vm1199, %v1083, 0
        %v3937 = vsel %vm1199, %v1084, 0
        %v3940 = vsel %vm1199, %v1085, 0
        %v3943 = vsel %vm1199, %v1086, 0
        %v3946 = vsel %vm1199, %v1087, 0
        %v3949 = vsel %vm1199, %v1088, 0
        %v3952 = vsel %vm1199, %v1089, 0
        %v3955 = vsel %vm1199, %v1090, 0
        %v3958 = vsel %vm1199, %v1091, 0
        %v3961 = vsel %vm1199, %v1092, 0
        %v3964 = vsel %vm1199, %v1093, 0
        %v3967 = vsel %vm1199, %v1094, 0
        %v3970 = vsel %vm1199, %v1095, 0
        %v3973 = vsel %vm1199, %v1096, 0
        %v3976 = vsel %vm1199, %v1097, 0
        %v3979 = vsel %vm1199, %v1098, 0
        %v3982 = vsel %vm1199, %v1099, 0
        %v3985 = vsel %vm1199, %v1100, 0
        %v3988 = vsel %vm1199, %v1101, 0
        %v3991 = vsel %vm1199, %v1102, 0
        %v3994 = vsel %vm1199, %v1103, 0
        %v3997 = vsel %vm1199, %v1104, 0
        %v4000 = vsel %vm1199, %v1105, 0
        %v4003 = vsel %vm1199, %v1106, 0
        %v4006 = vsel %vm1199, %v1107, 0
        %v4009 = vsel %vm1199, %v1108, 0
        %v4012 = vsel %vm1199, %v1109, 0
        %v4015 = vsel %vm1199, %v1110, 0
        %v4018 = vsel %vm1199, %v1111, 0
        %v4021 = vsel %vm1199, %v1112, 0
        %v4024 = vsel %vm1199, %v1113, 0
        %v4027 = vsel %vm1199, %v1114, 0
        %v4030 = vsel %vm1199, %v1115, 0
        %v4033 = vsel %vm1199, %v1116, 0
        %v4036 = vsel %vm1199, %v1117, 0
        %v4039 = vsel %vm1199, %v1118, 0
        %v4042 = vsel %vm1199, %v1119, 0
        %v4045 = vsel %vm1199, %v1120, 0
        %v4048 = vsel %vm1199, %v1121, 0
        %v4051 = vsel %vm1199, %v1122, 0
        %v4054 = vsel %vm1199, %v1123, 0
        %v4057 = vsel %vm1199, %v1124, 0
        %v4060 = vsel %vm1199, %v1125, 0
        %v4063 = vsel %vm1199, %v1126, 0
        %v4066 = vsel %vm1199, %v1127, 0
        %v4069 = vsel %vm1199, %v1128, 0
        %v4072 = vsel %vm1199, %v1129, 0
        %v4075 = vsel %vm1199, %v1130, 0
        %v4078 = vsel %vm1199, %v1131, 0
        %v4081 = vsel %vm1199, %v1132, 0
        %v4084 = vsel %vm1199, %v1133, 0
        %v4087 = vsel %vm1199, %v1134, 0
        %v4090 = vsel %vm1199, %v1135, 0
        %v4093 = vsel %vm1199, %v1136, 0
        %v4096 = vsel %vm1199, %v1137, 0
        %v4099 = vsel %vm1199, %v1138, 0
        %v4102 = vsel %vm1199, %v1139, 0
        %v4105 = vsel %vm1199, %v1140, 0
        %v4108 = vsel %vm1199, %v1141, 0
        %v4111 = vsel %vm1199, %v1142, 0
        %v4114 = vsel %vm1199, %v1143, 0
        %v4117 = vsel %vm1199, %v1144, 0
        %v4120 = vsel %vm1199, %v1145, 0
        %v4123 = vsel %vm1199, %v1146, 0
        %v4126 = vsel %vm1199, %v1147, 0
        %v4129 = vsel %vm1199, %v1148, 0
        %v4132 = vsel %vm1199, %v1149, 0
        %v4135 = vsel %vm1199, %v1150, 0
        %v4138 = vsel %vm1199, %v1151, 0
        %v4141 = vsel %vm1199, %v1152, 0
        %v4144 = vsel %vm1199, %v1153, 0
        %v4147 = vsel %vm1199, %v1154, 0
        %v4150 = vsel %vm1199, %v1155, 0
        %v4153 = vsel %vm1199, %v1156, 0
        %v4156 = vsel %vm1199, %v1157, 0
        %v4159 = vsel %vm1199, %v1158, 0
        %v4162 = vsel %vm1199, %v1159, 0
        %v4165 = vsel %vm1199, %v1160, 0
        %v4168 = vsel %vm1199, %v1161, 0
        %v4171 = vsel %vm1199, %v1162, 0
        %v4174 = vsel %vm1199, %v1163, 0
        %v4177 = vsel %vm1199, %v1164, 0
        %v4180 = vsel %vm1199, %v1165, 0
        %v4183 = vsel %vm1199, %v1166, 0
        %v4186 = vsel %vm1199, %v1167, 0
        %v4189 = vsel %vm1199, %v1168, 0
        %v4192 = vsel %vm1199, %v1169, 0
        %v4195 = vsel %vm1199, %v1170, 0
        %v4198 = vsel %vm1199, %v1171, 0
        %v4201 = vsel %vm1199, %v1172, 0
        %v4204 = vsel %vm1199, %v1173, 0
        %v4207 = vsel %vm1199, %v1174, 0
        %v4210 = vsel %vm1199, %v1175, 0
        %v4213 = vsel %vm1199, %v1176, 0
        %v4216 = vsel %vm1199, %v1177, 0
        %v4219 = vsel %vm1199, %v1178, 0
        %v4222 = vsel %vm1199, %v1179, 0
        %v4225 = vsel %vm1199, %v1180, 0
        %v4228 = vsel %vm1199, %v1181, 0
        %v4231 = vsel %vm1199, %v1182, 0
        %v4234 = vsel %vm1199, %v1183, 0
        %v4237 = vsel %vm1199, %v1184, 0
        %v4240 = vsel %vm1199, %v1185, 0
        %v4243 = vsel %vm1199, %v1186, 0
        %v4246 = vsel %vm1199, %v1187, 0
        %v4249 = vsel %vm1199, %v1188, 0
        %v4252 = vsel %vm1199, %v1189, 0
        %v4255 = vsel %vm1199, %v1190, 0
        %v4258 = vsel %vm1199, %v1191, 0
        %v4261 = vsel %vm1199, %v1192, 0
        %v4264 = vsel %vm1199, %v1193, 0
        %v4267 = vsel %vm1199, %v1194, 0
        %v4270 = vsel %vm1199, %v1195, 0
        %v4273 = vsel %vm1199, %v1196, 0
        %4275 = vmatpush.xpose.msra.mxu0 %v1249
        %4276 = vmatpush.xpose.msra.mxu0 %v1246
        %4277 = vmatpush.xpose.msra.mxu0 %v1243
        %4278 = vmatpush.xpose.msra.mxu0 %v1240
        %4279 = vmatpush.xpose.msra.mxu0 %v1237
        %4280 = vmatpush.xpose.msra.mxu0 %v1234
        %4281 = vmatpush.xpose.msra.mxu0 %v1231
        %4282 = vmatpush.xpose.msra.mxu0 %v1228
        %4283 = vmatpush.xpose.msra.mxu0 %v1225
        %4284 = vmatpush.xpose.msra.mxu0 %v1222
        %4285 = vmatpush.xpose.msra.mxu0 %v1219
        %4286 = vmatpush.xpose.msra.mxu0 %v1216
        %4287 = vmatpush.xpose.msra.mxu0 %v1213
        %4288 = vmatpush.xpose.msra.mxu0 %v1210
        %4289 = vmatpush.xpose.msra.mxu0 %v1207
        %4290 = vmatpush.xpose.msra.mxu0 %v1204
        %4291 = vmatmul.f32.gmra.mxu0 %v1201
        %v4292 = vpop.f32.mrf.mxu0
        %v4293 = vadd.f32 %v1198, %v4292
        %4294 = vdwg.mxu0
        %4295 = vmatpush.xpose.msra.mxu0 %v1297
        %4296 = vmatpush.xpose.msra.mxu0 %v1294
        %4297 = vmatpush.xpose.msra.mxu0 %v1291
        %4298 = vmatpush.xpose.msra.mxu0 %v1288
        %4299 = vmatpush.xpose.msra.mxu0 %v1285
        %4300 = vmatpush.xpose.msra.mxu0 %v1282
        %4301 = vmatpush.xpose.msra.mxu0 %v1279
        %4302 = vmatpush.xpose.msra.mxu0 %v1276
        %4303 = vmatpush.xpose.msra.mxu0 %v1273
        %4304 = vmatpush.xpose.msra.mxu0 %v1270
        %4305 = vmatpush.xpose.msra.mxu0 %v1267
        %4306 = vmatpush.xpose.msra.mxu0 %v1264
        %4307 = vmatpush.xpose.msra.mxu0 %v1261
        %4308 = vmatpush.xpose.msra.mxu0 %v1258
        %4309 = vmatpush.xpose.msra.mxu0 %v1255
        %4310 = vmatpush.xpose.msra.mxu0 %v1252
        %4311 = vmatmul.f32.gmra.mxu0 %v1201
        %v4312 = vpop.f32.mrf.mxu0
        %v4313 = vadd.f32 %v1198, %v4312
        %4314 = vdwg.mxu0
        %4315 = vmatpush.xpose.msra.mxu0 %v1345
        %4316 = vmatpush.xpose.msra.mxu0 %v1342
        %4317 = vmatpush.xpose.msra.mxu0 %v1339
        %4318 = vmatpush.xpose.msra.mxu0 %v1336
        %4319 = vmatpush.xpose.msra.mxu0 %v1333
        %4320 = vmatpush.xpose.msra.mxu0 %v1330
        %4321 = vmatpush.xpose.msra.mxu0 %v1327
        %4322 = vmatpush.xpose.msra.mxu0 %v1324
        %4323 = vmatpush.xpose.msra.mxu0 %v1321
        %4324 = vmatpush.xpose.msra.mxu0 %v1318
        %4325 = vmatpush.xpose.msra.mxu0 %v1315
        %4326 = vmatpush.xpose.msra.mxu0 %v1312
        %4327 = vmatpush.xpose.msra.mxu0 %v1309
        %4328 = vmatpush.xpose.msra.mxu0 %v1306
        %4329 = vmatpush.xpose.msra.mxu0 %v1303
        %4330 = vmatpush.xpose.msra.mxu0 %v1300
        %4331 = vmatmul.f32.gmra.mxu0 %v1201
        %v4332 = vpop.f32.mrf.mxu0
        %v4333 = vadd.f32 %v1198, %v4332
        %4334 = vdwg.mxu0
        %4335 = vmatpush.xpose.msra.mxu0 %v1393
        %4336 = vmatpush.xpose.msra.mxu0 %v1390
        %4337 = vmatpush.xpose.msra.mxu0 %v1387
        %4338 = vmatpush.xpose.msra.mxu0 %v1384
        %4339 = vmatpush.xpose.msra.mxu0 %v1381
        %4340 = vmatpush.xpose.msra.mxu0 %v1378
        %4341 = vmatpush.xpose.msra.mxu0 %v1375
        %4342 = vmatpush.xpose.msra.mxu0 %v1372
        %4343 = vmatpush.xpose.msra.mxu0 %v1369
        %4344 = vmatpush.xpose.msra.mxu0 %v1366
        %4345 = vmatpush.xpose.msra.mxu0 %v1363
        %4346 = vmatpush.xpose.msra.mxu0 %v1360
        %4347 = vmatpush.xpose.msra.mxu0 %v1357
        %4348 = vmatpush.xpose.msra.mxu0 %v1354
        %4349 = vmatpush.xpose.msra.mxu0 %v1351
        %4350 = vmatpush.xpose.msra.mxu0 %v1348
        %4351 = vmatmul.f32.gmra.mxu0 %v1201
        %v4352 = vpop.f32.mrf.mxu0
        %v4353 = vadd.f32 %v1198, %v4352
        %4354 = vdwg.mxu0
        %4355 = vmatpush.xpose.msra.mxu0 %v1441
        %4356 = vmatpush.xpose.msra.mxu0 %v1438
        %4357 = vmatpush.xpose.msra.mxu0 %v1435
        %4358 = vmatpush.xpose.msra.mxu0 %v1432
        %4359 = vmatpush.xpose.msra.mxu0 %v1429
        %4360 = vmatpush.xpose.msra.mxu0 %v1426
        %4361 = vmatpush.xpose.msra.mxu0 %v1423
        %4362 = vmatpush.xpose.msra.mxu0 %v1420
        %4363 = vmatpush.xpose.msra.mxu0 %v1417
        %4364 = vmatpush.xpose.msra.mxu0 %v1414
        %4365 = vmatpush.xpose.msra.mxu0 %v1411
        %4366 = vmatpush.xpose.msra.mxu0 %v1408
        %4367 = vmatpush.xpose.msra.mxu0 %v1405
        %4368 = vmatpush.xpose.msra.mxu0 %v1402
        %4369 = vmatpush.xpose.msra.mxu0 %v1399
        %4370 = vmatpush.xpose.msra.mxu0 %v1396
        %4371 = vmatmul.f32.gmra.mxu0 %v1201
        %v4372 = vpop.f32.mrf.mxu0
        %v4373 = vadd.f32 %v1198, %v4372
        %4374 = vdwg.mxu0
        %4375 = vmatpush.xpose.msra.mxu0 %v1489
        %4376 = vmatpush.xpose.msra.mxu0 %v1486
        %4377 = vmatpush.xpose.msra.mxu0 %v1483
        %4378 = vmatpush.xpose.msra.mxu0 %v1480
        %4379 = vmatpush.xpose.msra.mxu0 %v1477
        %4380 = vmatpush.xpose.msra.mxu0 %v1474
        %4381 = vmatpush.xpose.msra.mxu0 %v1471
        %4382 = vmatpush.xpose.msra.mxu0 %v1468
        %4383 = vmatpush.xpose.msra.mxu0 %v1465
        %4384 = vmatpush.xpose.msra.mxu0 %v1462
        %4385 = vmatpush.xpose.msra.mxu0 %v1459
        %4386 = vmatpush.xpose.msra.mxu0 %v1456
        %4387 = vmatpush.xpose.msra.mxu0 %v1453
        %4388 = vmatpush.xpose.msra.mxu0 %v1450
        %4389 = vmatpush.xpose.msra.mxu0 %v1447
        %4390 = vmatpush.xpose.msra.mxu0 %v1444
        %4391 = vmatmul.f32.gmra.mxu0 %v1201
        %v4392 = vpop.f32.mrf.mxu0
        %v4393 = vadd.f32 %v1198, %v4392
        %4394 = vdwg.mxu0
        %4395 = vmatpush.xpose.msra.mxu0 %v1537
        %4396 = vmatpush.xpose.msra.mxu0 %v1534
        %4397 = vmatpush.xpose.msra.mxu0 %v1531
        %4398 = vmatpush.xpose.msra.mxu0 %v1528
        %4399 = vmatpush.xpose.msra.mxu0 %v1525
        %4400 = vmatpush.xpose.msra.mxu0 %v1522
        %4401 = vmatpush.xpose.msra.mxu0 %v1519
        %4402 = vmatpush.xpose.msra.mxu0 %v1516
        %4403 = vmatpush.xpose.msra.mxu0 %v1513
        %4404 = vmatpush.xpose.msra.mxu0 %v1510
        %4405 = vmatpush.xpose.msra.mxu0 %v1507
        %4406 = vmatpush.xpose.msra.mxu0 %v1504
        %4407 = vmatpush.xpose.msra.mxu0 %v1501
        %4408 = vmatpush.xpose.msra.mxu0 %v1498
        %4409 = vmatpush.xpose.msra.mxu0 %v1495
        %4410 = vmatpush.xpose.msra.mxu0 %v1492
        %4411 = vmatmul.f32.gmra.mxu0 %v1201
        %v4412 = vpop.f32.mrf.mxu0
        %v4413 = vadd.f32 %v1198, %v4412
        %4414 = vdwg.mxu0
        %4415 = vmatpush.xpose.msra.mxu0 %v1585
        %4416 = vmatpush.xpose.msra.mxu0 %v1582
        %4417 = vmatpush.xpose.msra.mxu0 %v1579
        %4418 = vmatpush.xpose.msra.mxu0 %v1576
        %4419 = vmatpush.xpose.msra.mxu0 %v1573
        %4420 = vmatpush.xpose.msra.mxu0 %v1570
        %4421 = vmatpush.xpose.msra.mxu0 %v1567
        %4422 = vmatpush.xpose.msra.mxu0 %v1564
        %4423 = vmatpush.xpose.msra.mxu0 %v1561
        %4424 = vmatpush.xpose.msra.mxu0 %v1558
        %4425 = vmatpush.xpose.msra.mxu0 %v1555
        %4426 = vmatpush.xpose.msra.mxu0 %v1552
        %4427 = vmatpush.xpose.msra.mxu0 %v1549
        %4428 = vmatpush.xpose.msra.mxu0 %v1546
        %4429 = vmatpush.xpose.msra.mxu0 %v1543
        %4430 = vmatpush.xpose.msra.mxu0 %v1540
        %4431 = vmatmul.f32.gmra.mxu0 %v1201
        %v4432 = vpop.f32.mrf.mxu0
        %v4433 = vadd.f32 %v1198, %v4432
        %4434 = vdwg.mxu0
        %4435 = vmatpush.xpose.msra.mxu0 %v1633
        %4436 = vmatpush.xpose.msra.mxu0 %v1630
        %4437 = vmatpush.xpose.msra.mxu0 %v1627
        %4438 = vmatpush.xpose.msra.mxu0 %v1624
        %4439 = vmatpush.xpose.msra.mxu0 %v1621
        %4440 = vmatpush.xpose.msra.mxu0 %v1618
        %4441 = vmatpush.xpose.msra.mxu0 %v1615
        %4442 = vmatpush.xpose.msra.mxu0 %v1612
        %4443 = vmatpush.xpose.msra.mxu0 %v1609
        %4444 = vmatpush.xpose.msra.mxu0 %v1606
        %4445 = vmatpush.xpose.msra.mxu0 %v1603
        %4446 = vmatpush.xpose.msra.mxu0 %v1600
        %4447 = vmatpush.xpose.msra.mxu0 %v1597
        %4448 = vmatpush.xpose.msra.mxu0 %v1594
        %4449 = vmatpush.xpose.msra.mxu0 %v1591
        %4450 = vmatpush.xpose.msra.mxu0 %v1588
        %4451 = vmatmul.f32.gmra.mxu0 %v1201
        %v4452 = vpop.f32.mrf.mxu0
        %v4453 = vadd.f32 %v1198, %v4452
        %4454 = vdwg.mxu0
        %4455 = vmatpush.xpose.msra.mxu0 %v1681
        %4456 = vmatpush.xpose.msra.mxu0 %v1678
        %4457 = vmatpush.xpose.msra.mxu0 %v1675
        %4458 = vmatpush.xpose.msra.mxu0 %v1672
        %4459 = vmatpush.xpose.msra.mxu0 %v1669
        %4460 = vmatpush.xpose.msra.mxu0 %v1666
        %4461 = vmatpush.xpose.msra.mxu0 %v1663
        %4462 = vmatpush.xpose.msra.mxu0 %v1660
        %4463 = vmatpush.xpose.msra.mxu0 %v1657
        %4464 = vmatpush.xpose.msra.mxu0 %v1654
        %4465 = vmatpush.xpose.msra.mxu0 %v1651
        %4466 = vmatpush.xpose.msra.mxu0 %v1648
        %4467 = vmatpush.xpose.msra.mxu0 %v1645
        %4468 = vmatpush.xpose.msra.mxu0 %v1642
        %4469 = vmatpush.xpose.msra.mxu0 %v1639
        %4470 = vmatpush.xpose.msra.mxu0 %v1636
        %4471 = vmatmul.f32.gmra.mxu0 %v1201
        %v4472 = vpop.f32.mrf.mxu0
        %v4473 = vadd.f32 %v1198, %v4472
        %4474 = vdwg.mxu0
        %4475 = vmatpush.xpose.msra.mxu0 %v1729
        %4476 = vmatpush.xpose.msra.mxu0 %v1726
        %4477 = vmatpush.xpose.msra.mxu0 %v1723
        %4478 = vmatpush.xpose.msra.mxu0 %v1720
        %4479 = vmatpush.xpose.msra.mxu0 %v1717
        %4480 = vmatpush.xpose.msra.mxu0 %v1714
        %4481 = vmatpush.xpose.msra.mxu0 %v1711
        %4482 = vmatpush.xpose.msra.mxu0 %v1708
        %4483 = vmatpush.xpose.msra.mxu0 %v1705
        %4484 = vmatpush.xpose.msra.mxu0 %v1702
        %4485 = vmatpush.xpose.msra.mxu0 %v1699
        %4486 = vmatpush.xpose.msra.mxu0 %v1696
        %4487 = vmatpush.xpose.msra.mxu0 %v1693
        %4488 = vmatpush.xpose.msra.mxu0 %v1690
        %4489 = vmatpush.xpose.msra.mxu0 %v1687
        %4490 = vmatpush.xpose.msra.mxu0 %v1684
        %4491 = vmatmul.f32.gmra.mxu0 %v1201
        %v4492 = vpop.f32.mrf.mxu0
        %v4493 = vadd.f32 %v1198, %v4492
        %4494 = vdwg.mxu0
        %4495 = vmatpush.xpose.msra.mxu0 %v1777
        %4496 = vmatpush.xpose.msra.mxu0 %v1774
        %4497 = vmatpush.xpose.msra.mxu0 %v1771
        %4498 = vmatpush.xpose.msra.mxu0 %v1768
        %4499 = vmatpush.xpose.msra.mxu0 %v1765
        %4500 = vmatpush.xpose.msra.mxu0 %v1762
        %4501 = vmatpush.xpose.msra.mxu0 %v1759
        %4502 = vmatpush.xpose.msra.mxu0 %v1756
        %4503 = vmatpush.xpose.msra.mxu0 %v1753
        %4504 = vmatpush.xpose.msra.mxu0 %v1750
        %4505 = vmatpush.xpose.msra.mxu0 %v1747
        %4506 = vmatpush.xpose.msra.mxu0 %v1744
        %4507 = vmatpush.xpose.msra.mxu0 %v1741
        %4508 = vmatpush.xpose.msra.mxu0 %v1738
        %4509 = vmatpush.xpose.msra.mxu0 %v1735
        %4510 = vmatpush.xpose.msra.mxu0 %v1732
        %4511 = vmatmul.f32.gmra.mxu0 %v1201
        %v4512 = vpop.f32.mrf.mxu0
        %v4513 = vadd.f32 %v1198, %v4512
        %4514 = vdwg.mxu0
        %4515 = vmatpush.xpose.msra.mxu0 %v1825
        %4516 = vmatpush.xpose.msra.mxu0 %v1822
        %4517 = vmatpush.xpose.msra.mxu0 %v1819
        %4518 = vmatpush.xpose.msra.mxu0 %v1816
        %4519 = vmatpush.xpose.msra.mxu0 %v1813
        %4520 = vmatpush.xpose.msra.mxu0 %v1810
        %4521 = vmatpush.xpose.msra.mxu0 %v1807
        %4522 = vmatpush.xpose.msra.mxu0 %v1804
        %4523 = vmatpush.xpose.msra.mxu0 %v1801
        %4524 = vmatpush.xpose.msra.mxu0 %v1798
        %4525 = vmatpush.xpose.msra.mxu0 %v1795
        %4526 = vmatpush.xpose.msra.mxu0 %v1792
        %4527 = vmatpush.xpose.msra.mxu0 %v1789
        %4528 = vmatpush.xpose.msra.mxu0 %v1786
        %4529 = vmatpush.xpose.msra.mxu0 %v1783
        %4530 = vmatpush.xpose.msra.mxu0 %v1780
        %4531 = vmatmul.f32.gmra.mxu0 %v1201
        %v4532 = vpop.f32.mrf.mxu0
        %v4533 = vadd.f32 %v1198, %v4532
        %4534 = vdwg.mxu0
        %4535 = vmatpush.xpose.msra.mxu0 %v1873
        %4536 = vmatpush.xpose.msra.mxu0 %v1870
        %4537 = vmatpush.xpose.msra.mxu0 %v1867
        %4538 = vmatpush.xpose.msra.mxu0 %v1864
        %4539 = vmatpush.xpose.msra.mxu0 %v1861
        %4540 = vmatpush.xpose.msra.mxu0 %v1858
        %4541 = vmatpush.xpose.msra.mxu0 %v1855
        %4542 = vmatpush.xpose.msra.mxu0 %v1852
        %4543 = vmatpush.xpose.msra.mxu0 %v1849
        %4544 = vmatpush.xpose.msra.mxu0 %v1846
        %4545 = vmatpush.xpose.msra.mxu0 %v1843
        %4546 = vmatpush.xpose.msra.mxu0 %v1840
        %4547 = vmatpush.xpose.msra.mxu0 %v1837
        %4548 = vmatpush.xpose.msra.mxu0 %v1834
        %4549 = vmatpush.xpose.msra.mxu0 %v1831
        %4550 = vmatpush.xpose.msra.mxu0 %v1828
        %4551 = vmatmul.f32.gmra.mxu0 %v1201
        %v4552 = vpop.f32.mrf.mxu0
        %v4553 = vadd.f32 %v1198, %v4552
        %4554 = vdwg.mxu0
        %4555 = vmatpush.xpose.msra.mxu0 %v1921
        %4556 = vmatpush.xpose.msra.mxu0 %v1918
        %4557 = vmatpush.xpose.msra.mxu0 %v1915
        %4558 = vmatpush.xpose.msra.mxu0 %v1912
        %4559 = vmatpush.xpose.msra.mxu0 %v1909
        %4560 = vmatpush.xpose.msra.mxu0 %v1906
        %4561 = vmatpush.xpose.msra.mxu0 %v1903
        %4562 = vmatpush.xpose.msra.mxu0 %v1900
        %4563 = vmatpush.xpose.msra.mxu0 %v1897
        %4564 = vmatpush.xpose.msra.mxu0 %v1894
        %4565 = vmatpush.xpose.msra.mxu0 %v1891
        %4566 = vmatpush.xpose.msra.mxu0 %v1888
        %4567 = vmatpush.xpose.msra.mxu0 %v1885
        %4568 = vmatpush.xpose.msra.mxu0 %v1882
        %4569 = vmatpush.xpose.msra.mxu0 %v1879
        %4570 = vmatpush.xpose.msra.mxu0 %v1876
        %4571 = vmatmul.f32.gmra.mxu0 %v1201
        %v4572 = vpop.f32.mrf.mxu0
        %v4573 = vadd.f32 %v1198, %v4572
        %4574 = vdwg.mxu0
        %4575 = vmatpush.xpose.msra.mxu0 %v1969
        %4576 = vmatpush.xpose.msra.mxu0 %v1966
        %4577 = vmatpush.xpose.msra.mxu0 %v1963
        %4578 = vmatpush.xpose.msra.mxu0 %v1960
        %4579 = vmatpush.xpose.msra.mxu0 %v1957
        %4580 = vmatpush.xpose.msra.mxu0 %v1954
        %4581 = vmatpush.xpose.msra.mxu0 %v1951
        %4582 = vmatpush.xpose.msra.mxu0 %v1948
        %4583 = vmatpush.xpose.msra.mxu0 %v1945
        %4584 = vmatpush.xpose.msra.mxu0 %v1942
        %4585 = vmatpush.xpose.msra.mxu0 %v1939
        %4586 = vmatpush.xpose.msra.mxu0 %v1936
        %4587 = vmatpush.xpose.msra.mxu0 %v1933
        %4588 = vmatpush.xpose.msra.mxu0 %v1930
        %4589 = vmatpush.xpose.msra.mxu0 %v1927
        %4590 = vmatpush.xpose.msra.mxu0 %v1924
        %4591 = vmatmul.f32.gmra.mxu0 %v1201
        %v4592 = vpop.f32.mrf.mxu0
        %v4593 = vadd.f32 %v1198, %v4592
        %4594 = vdwg.mxu0
        %4595 = vmatpush.xpose.msra.mxu0 %v2017
        %4596 = vmatpush.xpose.msra.mxu0 %v2014
        %4597 = vmatpush.xpose.msra.mxu0 %v2011
        %4598 = vmatpush.xpose.msra.mxu0 %v2008
        %4599 = vmatpush.xpose.msra.mxu0 %v2005
        %4600 = vmatpush.xpose.msra.mxu0 %v2002
        %4601 = vmatpush.xpose.msra.mxu0 %v1999
        %4602 = vmatpush.xpose.msra.mxu0 %v1996
        %4603 = vmatpush.xpose.msra.mxu0 %v1993
        %4604 = vmatpush.xpose.msra.mxu0 %v1990
        %4605 = vmatpush.xpose.msra.mxu0 %v1987
        %4606 = vmatpush.xpose.msra.mxu0 %v1984
        %4607 = vmatpush.xpose.msra.mxu0 %v1981
        %4608 = vmatpush.xpose.msra.mxu0 %v1978
        %4609 = vmatpush.xpose.msra.mxu0 %v1975
        %4610 = vmatpush.xpose.msra.mxu0 %v1972
        %4611 = vmatmul.f32.gmra.mxu0 %v1201
        %v4612 = vpop.f32.mrf.mxu0
        %v4613 = vadd.f32 %v1198, %v4612
        %4614 = vdwg.mxu0
        %4615 = vmatpush.xpose.msra.mxu0 %v2065
        %4616 = vmatpush.xpose.msra.mxu0 %v2062
        %4617 = vmatpush.xpose.msra.mxu0 %v2059
        %4618 = vmatpush.xpose.msra.mxu0 %v2056
        %4619 = vmatpush.xpose.msra.mxu0 %v2053
        %4620 = vmatpush.xpose.msra.mxu0 %v2050
        %4621 = vmatpush.xpose.msra.mxu0 %v2047
        %4622 = vmatpush.xpose.msra.mxu0 %v2044
        %4623 = vmatpush.xpose.msra.mxu0 %v2041
        %4624 = vmatpush.xpose.msra.mxu0 %v2038
        %4625 = vmatpush.xpose.msra.mxu0 %v2035
        %4626 = vmatpush.xpose.msra.mxu0 %v2032
        %4627 = vmatpush.xpose.msra.mxu0 %v2029
        %4628 = vmatpush.xpose.msra.mxu0 %v2026
        %4629 = vmatpush.xpose.msra.mxu0 %v2023
        %4630 = vmatpush.xpose.msra.mxu0 %v2020
        %4631 = vmatmul.f32.gmra.mxu0 %v1201
        %v4632 = vpop.f32.mrf.mxu0
        %v4633 = vadd.f32 %v1198, %v4632
        %4634 = vdwg.mxu0
        %4635 = vmatpush.xpose.msra.mxu0 %v2113
        %4636 = vmatpush.xpose.msra.mxu0 %v2110
        %4637 = vmatpush.xpose.msra.mxu0 %v2107
        %4638 = vmatpush.xpose.msra.mxu0 %v2104
        %4639 = vmatpush.xpose.msra.mxu0 %v2101
        %4640 = vmatpush.xpose.msra.mxu0 %v2098
        %4641 = vmatpush.xpose.msra.mxu0 %v2095
        %4642 = vmatpush.xpose.msra.mxu0 %v2092
        %4643 = vmatpush.xpose.msra.mxu0 %v2089
        %4644 = vmatpush.xpose.msra.mxu0 %v2086
        %4645 = vmatpush.xpose.msra.mxu0 %v2083
        %4646 = vmatpush.xpose.msra.mxu0 %v2080
        %4647 = vmatpush.xpose.msra.mxu0 %v2077
        %4648 = vmatpush.xpose.msra.mxu0 %v2074
        %4649 = vmatpush.xpose.msra.mxu0 %v2071
        %4650 = vmatpush.xpose.msra.mxu0 %v2068
        %4651 = vmatmul.f32.gmra.mxu0 %v1201
        %v4652 = vpop.f32.mrf.mxu0
        %v4653 = vadd.f32 %v1198, %v4652
        %4654 = vdwg.mxu0
        %4655 = vmatpush.xpose.msra.mxu0 %v2161
        %4656 = vmatpush.xpose.msra.mxu0 %v2158
        %4657 = vmatpush.xpose.msra.mxu0 %v2155
        %4658 = vmatpush.xpose.msra.mxu0 %v2152
        %4659 = vmatpush.xpose.msra.mxu0 %v2149
        %4660 = vmatpush.xpose.msra.mxu0 %v2146
        %4661 = vmatpush.xpose.msra.mxu0 %v2143
        %4662 = vmatpush.xpose.msra.mxu0 %v2140
        %4663 = vmatpush.xpose.msra.mxu0 %v2137
        %4664 = vmatpush.xpose.msra.mxu0 %v2134
        %4665 = vmatpush.xpose.msra.mxu0 %v2131
        %4666 = vmatpush.xpose.msra.mxu0 %v2128
        %4667 = vmatpush.xpose.msra.mxu0 %v2125
        %4668 = vmatpush.xpose.msra.mxu0 %v2122
        %4669 = vmatpush.xpose.msra.mxu0 %v2119
        %4670 = vmatpush.xpose.msra.mxu0 %v2116
        %4671 = vmatmul.f32.gmra.mxu0 %v1201
        %v4672 = vpop.f32.mrf.mxu0
        %v4673 = vadd.f32 %v1198, %v4672
        %4674 = vdwg.mxu0
        %4675 = vmatpush.xpose.msra.mxu0 %v2209
        %4676 = vmatpush.xpose.msra.mxu0 %v2206
        %4677 = vmatpush.xpose.msra.mxu0 %v2203
        %4678 = vmatpush.xpose.msra.mxu0 %v2200
        %4679 = vmatpush.xpose.msra.mxu0 %v2197
        %4680 = vmatpush.xpose.msra.mxu0 %v2194
        %4681 = vmatpush.xpose.msra.mxu0 %v2191
        %4682 = vmatpush.xpose.msra.mxu0 %v2188
        %4683 = vmatpush.xpose.msra.mxu0 %v2185
        %4684 = vmatpush.xpose.msra.mxu0 %v2182
        %4685 = vmatpush.xpose.msra.mxu0 %v2179
        %4686 = vmatpush.xpose.msra.mxu0 %v2176
        %4687 = vmatpush.xpose.msra.mxu0 %v2173
        %4688 = vmatpush.xpose.msra.mxu0 %v2170
        %4689 = vmatpush.xpose.msra.mxu0 %v2167
        %4690 = vmatpush.xpose.msra.mxu0 %v2164
        %4691 = vmatmul.f32.gmra.mxu0 %v1201
        %v4692 = vpop.f32.mrf.mxu0
        %v4693 = vadd.f32 %v1198, %v4692
        %4694 = vdwg.mxu0
        %4695 = vmatpush.xpose.msra.mxu0 %v2257
        %4696 = vmatpush.xpose.msra.mxu0 %v2254
        %4697 = vmatpush.xpose.msra.mxu0 %v2251
        %4698 = vmatpush.xpose.msra.mxu0 %v2248
        %4699 = vmatpush.xpose.msra.mxu0 %v2245
        %4700 = vmatpush.xpose.msra.mxu0 %v2242
        %4701 = vmatpush.xpose.msra.mxu0 %v2239
        %4702 = vmatpush.xpose.msra.mxu0 %v2236
        %4703 = vmatpush.xpose.msra.mxu0 %v2233
        %4704 = vmatpush.xpose.msra.mxu0 %v2230
        %4705 = vmatpush.xpose.msra.mxu0 %v2227
        %4706 = vmatpush.xpose.msra.mxu0 %v2224
        %4707 = vmatpush.xpose.msra.mxu0 %v2221
        %4708 = vmatpush.xpose.msra.mxu0 %v2218
        %4709 = vmatpush.xpose.msra.mxu0 %v2215
        %4710 = vmatpush.xpose.msra.mxu0 %v2212
        %4711 = vmatmul.f32.gmra.mxu0 %v1201
        %v4712 = vpop.f32.mrf.mxu0
        %v4713 = vadd.f32 %v1198, %v4712
        %4714 = vdwg.mxu0
        %4715 = vmatpush.xpose.msra.mxu0 %v2305
        %4716 = vmatpush.xpose.msra.mxu0 %v2302
        %4717 = vmatpush.xpose.msra.mxu0 %v2299
        %4718 = vmatpush.xpose.msra.mxu0 %v2296
        %4719 = vmatpush.xpose.msra.mxu0 %v2293
        %4720 = vmatpush.xpose.msra.mxu0 %v2290
        %4721 = vmatpush.xpose.msra.mxu0 %v2287
        %4722 = vmatpush.xpose.msra.mxu0 %v2284
        %4723 = vmatpush.xpose.msra.mxu0 %v2281
        %4724 = vmatpush.xpose.msra.mxu0 %v2278
        %4725 = vmatpush.xpose.msra.mxu0 %v2275
        %4726 = vmatpush.xpose.msra.mxu0 %v2272
        %4727 = vmatpush.xpose.msra.mxu0 %v2269
        %4728 = vmatpush.xpose.msra.mxu0 %v2266
        %4729 = vmatpush.xpose.msra.mxu0 %v2263
        %4730 = vmatpush.xpose.msra.mxu0 %v2260
        %4731 = vmatmul.f32.gmra.mxu0 %v1201
        %v4732 = vpop.f32.mrf.mxu0
        %v4733 = vadd.f32 %v1198, %v4732
        %4734 = vdwg.mxu0
        %4735 = vmatpush.xpose.msra.mxu0 %v2353
        %4736 = vmatpush.xpose.msra.mxu0 %v2350
        %4737 = vmatpush.xpose.msra.mxu0 %v2347
        %4738 = vmatpush.xpose.msra.mxu0 %v2344
        %4739 = vmatpush.xpose.msra.mxu0 %v2341
        %4740 = vmatpush.xpose.msra.mxu0 %v2338
        %4741 = vmatpush.xpose.msra.mxu0 %v2335
        %4742 = vmatpush.xpose.msra.mxu0 %v2332
        %4743 = vmatpush.xpose.msra.mxu0 %v2329
        %4744 = vmatpush.xpose.msra.mxu0 %v2326
        %4745 = vmatpush.xpose.msra.mxu0 %v2323
        %4746 = vmatpush.xpose.msra.mxu0 %v2320
        %4747 = vmatpush.xpose.msra.mxu0 %v2317
        %4748 = vmatpush.xpose.msra.mxu0 %v2314
        %4749 = vmatpush.xpose.msra.mxu0 %v2311
        %4750 = vmatpush.xpose.msra.mxu0 %v2308
        %4751 = vmatmul.f32.gmra.mxu0 %v1201
        %v4752 = vpop.f32.mrf.mxu0
        %v4753 = vadd.f32 %v1198, %v4752
        %4754 = vdwg.mxu0
        %4755 = vmatpush.xpose.msra.mxu0 %v2401
        %4756 = vmatpush.xpose.msra.mxu0 %v2398
        %4757 = vmatpush.xpose.msra.mxu0 %v2395
        %4758 = vmatpush.xpose.msra.mxu0 %v2392
        %4759 = vmatpush.xpose.msra.mxu0 %v2389
        %4760 = vmatpush.xpose.msra.mxu0 %v2386
        %4761 = vmatpush.xpose.msra.mxu0 %v2383
        %4762 = vmatpush.xpose.msra.mxu0 %v2380
        %4763 = vmatpush.xpose.msra.mxu0 %v2377
        %4764 = vmatpush.xpose.msra.mxu0 %v2374
        %4765 = vmatpush.xpose.msra.mxu0 %v2371
        %4766 = vmatpush.xpose.msra.mxu0 %v2368
        %4767 = vmatpush.xpose.msra.mxu0 %v2365
        %4768 = vmatpush.xpose.msra.mxu0 %v2362
        %4769 = vmatpush.xpose.msra.mxu0 %v2359
        %4770 = vmatpush.xpose.msra.mxu0 %v2356
        %4771 = vmatmul.f32.gmra.mxu0 %v1201
        %v4772 = vpop.f32.mrf.mxu0
        %v4773 = vadd.f32 %v1198, %v4772
        %4774 = vdwg.mxu0
        %4775 = vmatpush.xpose.msra.mxu0 %v2449
        %4776 = vmatpush.xpose.msra.mxu0 %v2446
        %4777 = vmatpush.xpose.msra.mxu0 %v2443
        %4778 = vmatpush.xpose.msra.mxu0 %v2440
        %4779 = vmatpush.xpose.msra.mxu0 %v2437
        %4780 = vmatpush.xpose.msra.mxu0 %v2434
        %4781 = vmatpush.xpose.msra.mxu0 %v2431
        %4782 = vmatpush.xpose.msra.mxu0 %v2428
        %4783 = vmatpush.xpose.msra.mxu0 %v2425
        %4784 = vmatpush.xpose.msra.mxu0 %v2422
        %4785 = vmatpush.xpose.msra.mxu0 %v2419
        %4786 = vmatpush.xpose.msra.mxu0 %v2416
        %4787 = vmatpush.xpose.msra.mxu0 %v2413
        %4788 = vmatpush.xpose.msra.mxu0 %v2410
        %4789 = vmatpush.xpose.msra.mxu0 %v2407
        %4790 = vmatpush.xpose.msra.mxu0 %v2404
        %4791 = vmatmul.f32.gmra.mxu0 %v1201
        %v4792 = vpop.f32.mrf.mxu0
        %v4793 = vadd.f32 %v1198, %v4792
        %4794 = vdwg.mxu0
        %4795 = vmatpush.xpose.msra.mxu0 %v2497
        %4796 = vmatpush.xpose.msra.mxu0 %v2494
        %4797 = vmatpush.xpose.msra.mxu0 %v2491
        %4798 = vmatpush.xpose.msra.mxu0 %v2488
        %4799 = vmatpush.xpose.msra.mxu0 %v2485
        %4800 = vmatpush.xpose.msra.mxu0 %v2482
        %4801 = vmatpush.xpose.msra.mxu0 %v2479
        %4802 = vmatpush.xpose.msra.mxu0 %v2476
        %4803 = vmatpush.xpose.msra.mxu0 %v2473
        %4804 = vmatpush.xpose.msra.mxu0 %v2470
        %4805 = vmatpush.xpose.msra.mxu0 %v2467
        %4806 = vmatpush.xpose.msra.mxu0 %v2464
        %4807 = vmatpush.xpose.msra.mxu0 %v2461
        %4808 = vmatpush.xpose.msra.mxu0 %v2458
        %4809 = vmatpush.xpose.msra.mxu0 %v2455
        %4810 = vmatpush.xpose.msra.mxu0 %v2452
        %4811 = vmatmul.f32.gmra.mxu0 %v1201
        %v4812 = vpop.f32.mrf.mxu0
        %v4813 = vadd.f32 %v1198, %v4812
        %4814 = vdwg.mxu0
        %4815 = vmatpush.xpose.msra.mxu0 %v2545
        %4816 = vmatpush.xpose.msra.mxu0 %v2542
        %4817 = vmatpush.xpose.msra.mxu0 %v2539
        %4818 = vmatpush.xpose.msra.mxu0 %v2536
        %4819 = vmatpush.xpose.msra.mxu0 %v2533
        %4820 = vmatpush.xpose.msra.mxu0 %v2530
        %4821 = vmatpush.xpose.msra.mxu0 %v2527
        %4822 = vmatpush.xpose.msra.mxu0 %v2524
        %4823 = vmatpush.xpose.msra.mxu0 %v2521
        %4824 = vmatpush.xpose.msra.mxu0 %v2518
        %4825 = vmatpush.xpose.msra.mxu0 %v2515
        %4826 = vmatpush.xpose.msra.mxu0 %v2512
        %4827 = vmatpush.xpose.msra.mxu0 %v2509
        %4828 = vmatpush.xpose.msra.mxu0 %v2506
        %4829 = vmatpush.xpose.msra.mxu0 %v2503
        %4830 = vmatpush.xpose.msra.mxu0 %v2500
        %4831 = vmatmul.f32.gmra.mxu0 %v1201
        %v4832 = vpop.f32.mrf.mxu0
        %v4833 = vadd.f32 %v1198, %v4832
        %4834 = vdwg.mxu0
        %4835 = vmatpush.xpose.msra.mxu0 %v2593
        %4836 = vmatpush.xpose.msra.mxu0 %v2590
        %4837 = vmatpush.xpose.msra.mxu0 %v2587
        %4838 = vmatpush.xpose.msra.mxu0 %v2584
        %4839 = vmatpush.xpose.msra.mxu0 %v2581
        %4840 = vmatpush.xpose.msra.mxu0 %v2578
        %4841 = vmatpush.xpose.msra.mxu0 %v2575
        %4842 = vmatpush.xpose.msra.mxu0 %v2572
        %4843 = vmatpush.xpose.msra.mxu0 %v2569
        %4844 = vmatpush.xpose.msra.mxu0 %v2566
        %4845 = vmatpush.xpose.msra.mxu0 %v2563
        %4846 = vmatpush.xpose.msra.mxu0 %v2560
        %4847 = vmatpush.xpose.msra.mxu0 %v2557
        %4848 = vmatpush.xpose.msra.mxu0 %v2554
        %4849 = vmatpush.xpose.msra.mxu0 %v2551
        %4850 = vmatpush.xpose.msra.mxu0 %v2548
        %4851 = vmatmul.f32.gmra.mxu0 %v1201
        %v4852 = vpop.f32.mrf.mxu0
        %v4853 = vadd.f32 %v1198, %v4852
        %4854 = vdwg.mxu0
        %4855 = vmatpush.xpose.msra.mxu0 %v2641
        %4856 = vmatpush.xpose.msra.mxu0 %v2638
        %4857 = vmatpush.xpose.msra.mxu0 %v2635
        %4858 = vmatpush.xpose.msra.mxu0 %v2632
        %4859 = vmatpush.xpose.msra.mxu0 %v2629
        %4860 = vmatpush.xpose.msra.mxu0 %v2626
        %4861 = vmatpush.xpose.msra.mxu0 %v2623
        %4862 = vmatpush.xpose.msra.mxu0 %v2620
        %4863 = vmatpush.xpose.msra.mxu0 %v2617
        %4864 = vmatpush.xpose.msra.mxu0 %v2614
        %4865 = vmatpush.xpose.msra.mxu0 %v2611
        %4866 = vmatpush.xpose.msra.mxu0 %v2608
        %4867 = vmatpush.xpose.msra.mxu0 %v2605
        %4868 = vmatpush.xpose.msra.mxu0 %v2602
        %4869 = vmatpush.xpose.msra.mxu0 %v2599
        %4870 = vmatpush.xpose.msra.mxu0 %v2596
        %4871 = vmatmul.f32.gmra.mxu0 %v1201
        %v4872 = vpop.f32.mrf.mxu0
        %v4873 = vadd.f32 %v1198, %v4872
        %4874 = vdwg.mxu0
        %4875 = vmatpush.xpose.msra.mxu0 %v2689
        %4876 = vmatpush.xpose.msra.mxu0 %v2686
        %4877 = vmatpush.xpose.msra.mxu0 %v2683
        %4878 = vmatpush.xpose.msra.mxu0 %v2680
        %4879 = vmatpush.xpose.msra.mxu0 %v2677
        %4880 = vmatpush.xpose.msra.mxu0 %v2674
        %4881 = vmatpush.xpose.msra.mxu0 %v2671
        %4882 = vmatpush.xpose.msra.mxu0 %v2668
        %4883 = vmatpush.xpose.msra.mxu0 %v2665
        %4884 = vmatpush.xpose.msra.mxu0 %v2662
        %4885 = vmatpush.xpose.msra.mxu0 %v2659
        %4886 = vmatpush.xpose.msra.mxu0 %v2656
        %4887 = vmatpush.xpose.msra.mxu0 %v2653
        %4888 = vmatpush.xpose.msra.mxu0 %v2650
        %4889 = vmatpush.xpose.msra.mxu0 %v2647
        %4890 = vmatpush.xpose.msra.mxu0 %v2644
        %4891 = vmatmul.f32.gmra.mxu0 %v1201
        %v4892 = vpop.f32.mrf.mxu0
        %v4893 = vadd.f32 %v1198, %v4892
        %4894 = vdwg.mxu0
        %4895 = vmatpush.xpose.msra.mxu0 %v2737
        %4896 = vmatpush.xpose.msra.mxu0 %v2734
        %4897 = vmatpush.xpose.msra.mxu0 %v2731
        %4898 = vmatpush.xpose.msra.mxu0 %v2728
        %4899 = vmatpush.xpose.msra.mxu0 %v2725
        %4900 = vmatpush.xpose.msra.mxu0 %v2722
        %4901 = vmatpush.xpose.msra.mxu0 %v2719
        %4902 = vmatpush.xpose.msra.mxu0 %v2716
        %4903 = vmatpush.xpose.msra.mxu0 %v2713
        %4904 = vmatpush.xpose.msra.mxu0 %v2710
        %4905 = vmatpush.xpose.msra.mxu0 %v2707
        %4906 = vmatpush.xpose.msra.mxu0 %v2704
        %4907 = vmatpush.xpose.msra.mxu0 %v2701
        %4908 = vmatpush.xpose.msra.mxu0 %v2698
        %4909 = vmatpush.xpose.msra.mxu0 %v2695
        %4910 = vmatpush.xpose.msra.mxu0 %v2692
        %4911 = vmatmul.f32.gmra.mxu0 %v1201
        %v4912 = vpop.f32.mrf.mxu0
        %v4913 = vadd.f32 %v1198, %v4912
        %4914 = vdwg.mxu0
        %4915 = vmatpush.xpose.msra.mxu0 %v2785
        %4916 = vmatpush.xpose.msra.mxu0 %v2782
        %4917 = vmatpush.xpose.msra.mxu0 %v2779
        %4918 = vmatpush.xpose.msra.mxu0 %v2776
        %4919 = vmatpush.xpose.msra.mxu0 %v2773
        %4920 = vmatpush.xpose.msra.mxu0 %v2770
        %4921 = vmatpush.xpose.msra.mxu0 %v2767
        %4922 = vmatpush.xpose.msra.mxu0 %v2764
        %4923 = vmatpush.xpose.msra.mxu0 %v2761
        %4924 = vmatpush.xpose.msra.mxu0 %v2758
        %4925 = vmatpush.xpose.msra.mxu0 %v2755
        %4926 = vmatpush.xpose.msra.mxu0 %v2752
        %4927 = vmatpush.xpose.msra.mxu0 %v2749
        %4928 = vmatpush.xpose.msra.mxu0 %v2746
        %4929 = vmatpush.xpose.msra.mxu0 %v2743
        %4930 = vmatpush.xpose.msra.mxu0 %v2740
        %4931 = vmatmul.f32.gmra.mxu0 %v1201
        %v4932 = vpop.f32.mrf.mxu0
        %v4933 = vadd.f32 %v1198, %v4932
        %4934 = vdwg.mxu0
        %4935 = vmatpush.xpose.msra.mxu0 %v2833
        %4936 = vmatpush.xpose.msra.mxu0 %v2830
        %4937 = vmatpush.xpose.msra.mxu0 %v2827
        %4938 = vmatpush.xpose.msra.mxu0 %v2824
        %4939 = vmatpush.xpose.msra.mxu0 %v2821
        %4940 = vmatpush.xpose.msra.mxu0 %v2818
        %4941 = vmatpush.xpose.msra.mxu0 %v2815
        %4942 = vmatpush.xpose.msra.mxu0 %v2812
        %4943 = vmatpush.xpose.msra.mxu0 %v2809
        %4944 = vmatpush.xpose.msra.mxu0 %v2806
        %4945 = vmatpush.xpose.msra.mxu0 %v2803
        %4946 = vmatpush.xpose.msra.mxu0 %v2800
        %4947 = vmatpush.xpose.msra.mxu0 %v2797
        %4948 = vmatpush.xpose.msra.mxu0 %v2794
        %4949 = vmatpush.xpose.msra.mxu0 %v2791
        %4950 = vmatpush.xpose.msra.mxu0 %v2788
        %4951 = vmatmul.f32.gmra.mxu0 %v1201
        %v4952 = vpop.f32.mrf.mxu0
        %v4953 = vadd.f32 %v1198, %v4952
        %4954 = vdwg.mxu0
        %4955 = vmatpush.xpose.msra.mxu0 %v2881
        %4956 = vmatpush.xpose.msra.mxu0 %v2878
        %4957 = vmatpush.xpose.msra.mxu0 %v2875
        %4958 = vmatpush.xpose.msra.mxu0 %v2872
        %4959 = vmatpush.xpose.msra.mxu0 %v2869
        %4960 = vmatpush.xpose.msra.mxu0 %v2866
        %4961 = vmatpush.xpose.msra.mxu0 %v2863
        %4962 = vmatpush.xpose.msra.mxu0 %v2860
        %4963 = vmatpush.xpose.msra.mxu0 %v2857
        %4964 = vmatpush.xpose.msra.mxu0 %v2854
        %4965 = vmatpush.xpose.msra.mxu0 %v2851
        %4966 = vmatpush.xpose.msra.mxu0 %v2848
        %4967 = vmatpush.xpose.msra.mxu0 %v2845
        %4968 = vmatpush.xpose.msra.mxu0 %v2842
        %4969 = vmatpush.xpose.msra.mxu0 %v2839
        %4970 = vmatpush.xpose.msra.mxu0 %v2836
        %4971 = vmatmul.f32.gmra.mxu0 %v1201
        %v4972 = vpop.f32.mrf.mxu0
        %v4973 = vadd.f32 %v1198, %v4972
        %4974 = vdwg.mxu0
        %4975 = vmatpush.xpose.msra.mxu0 %v2929
        %4976 = vmatpush.xpose.msra.mxu0 %v2926
        %4977 = vmatpush.xpose.msra.mxu0 %v2923
        %4978 = vmatpush.xpose.msra.mxu0 %v2920
        %4979 = vmatpush.xpose.msra.mxu0 %v2917
        %4980 = vmatpush.xpose.msra.mxu0 %v2914
        %4981 = vmatpush.xpose.msra.mxu0 %v2911
        %4982 = vmatpush.xpose.msra.mxu0 %v2908
        %4983 = vmatpush.xpose.msra.mxu0 %v2905
        %4984 = vmatpush.xpose.msra.mxu0 %v2902
        %4985 = vmatpush.xpose.msra.mxu0 %v2899
        %4986 = vmatpush.xpose.msra.mxu0 %v2896
        %4987 = vmatpush.xpose.msra.mxu0 %v2893
        %4988 = vmatpush.xpose.msra.mxu0 %v2890
        %4989 = vmatpush.xpose.msra.mxu0 %v2887
        %4990 = vmatpush.xpose.msra.mxu0 %v2884
        %4991 = vmatmul.f32.gmra.mxu0 %v1201
        %v4992 = vpop.f32.mrf.mxu0
        %v4993 = vadd.f32 %v1198, %v4992
        %4994 = vdwg.mxu0
        %4995 = vmatpush.xpose.msra.mxu0 %v2977
        %4996 = vmatpush.xpose.msra.mxu0 %v2974
        %4997 = vmatpush.xpose.msra.mxu0 %v2971
        %4998 = vmatpush.xpose.msra.mxu0 %v2968
        %4999 = vmatpush.xpose.msra.mxu0 %v2965
        %5000 = vmatpush.xpose.msra.mxu0 %v2962
        %5001 = vmatpush.xpose.msra.mxu0 %v2959
        %5002 = vmatpush.xpose.msra.mxu0 %v2956
        %5003 = vmatpush.xpose.msra.mxu0 %v2953
        %5004 = vmatpush.xpose.msra.mxu0 %v2950
        %5005 = vmatpush.xpose.msra.mxu0 %v2947
        %5006 = vmatpush.xpose.msra.mxu0 %v2944
        %5007 = vmatpush.xpose.msra.mxu0 %v2941
        %5008 = vmatpush.xpose.msra.mxu0 %v2938
        %5009 = vmatpush.xpose.msra.mxu0 %v2935
        %5010 = vmatpush.xpose.msra.mxu0 %v2932
        %5011 = vmatmul.f32.gmra.mxu0 %v1201
        %v5012 = vpop.f32.mrf.mxu0
        %v5013 = vadd.f32 %v1198, %v5012
        %5014 = vdwg.mxu0
        %5015 = vmatpush.xpose.msra.mxu0 %v3025
        %5016 = vmatpush.xpose.msra.mxu0 %v3022
        %5017 = vmatpush.xpose.msra.mxu0 %v3019
        %5018 = vmatpush.xpose.msra.mxu0 %v3016
        %5019 = vmatpush.xpose.msra.mxu0 %v3013
        %5020 = vmatpush.xpose.msra.mxu0 %v3010
        %5021 = vmatpush.xpose.msra.mxu0 %v3007
        %5022 = vmatpush.xpose.msra.mxu0 %v3004
        %5023 = vmatpush.xpose.msra.mxu0 %v3001
        %5024 = vmatpush.xpose.msra.mxu0 %v2998
        %5025 = vmatpush.xpose.msra.mxu0 %v2995
        %5026 = vmatpush.xpose.msra.mxu0 %v2992
        %5027 = vmatpush.xpose.msra.mxu0 %v2989
        %5028 = vmatpush.xpose.msra.mxu0 %v2986
        %5029 = vmatpush.xpose.msra.mxu0 %v2983
        %5030 = vmatpush.xpose.msra.mxu0 %v2980
        %5031 = vmatmul.f32.gmra.mxu0 %v1201
        %v5032 = vpop.f32.mrf.mxu0
        %v5033 = vadd.f32 %v1198, %v5032
        %5034 = vdwg.mxu0
        %5035 = vmatpush.xpose.msra.mxu0 %v3073
        %5036 = vmatpush.xpose.msra.mxu0 %v3070
        %5037 = vmatpush.xpose.msra.mxu0 %v3067
        %5038 = vmatpush.xpose.msra.mxu0 %v3064
        %5039 = vmatpush.xpose.msra.mxu0 %v3061
        %5040 = vmatpush.xpose.msra.mxu0 %v3058
        %5041 = vmatpush.xpose.msra.mxu0 %v3055
        %5042 = vmatpush.xpose.msra.mxu0 %v3052
        %5043 = vmatpush.xpose.msra.mxu0 %v3049
        %5044 = vmatpush.xpose.msra.mxu0 %v3046
        %5045 = vmatpush.xpose.msra.mxu0 %v3043
        %5046 = vmatpush.xpose.msra.mxu0 %v3040
        %5047 = vmatpush.xpose.msra.mxu0 %v3037
        %5048 = vmatpush.xpose.msra.mxu0 %v3034
        %5049 = vmatpush.xpose.msra.mxu0 %v3031
        %5050 = vmatpush.xpose.msra.mxu0 %v3028
        %5051 = vmatmul.f32.gmra.mxu0 %v1201
        %v5052 = vpop.f32.mrf.mxu0
        %v5053 = vadd.f32 %v1198, %v5052
        %5054 = vdwg.mxu0
        %5055 = vmatpush.xpose.msra.mxu0 %v3121
        %5056 = vmatpush.xpose.msra.mxu0 %v3118
        %5057 = vmatpush.xpose.msra.mxu0 %v3115
        %5058 = vmatpush.xpose.msra.mxu0 %v3112
        %5059 = vmatpush.xpose.msra.mxu0 %v3109
        %5060 = vmatpush.xpose.msra.mxu0 %v3106
        %5061 = vmatpush.xpose.msra.mxu0 %v3103
        %5062 = vmatpush.xpose.msra.mxu0 %v3100
        %5063 = vmatpush.xpose.msra.mxu0 %v3097
        %5064 = vmatpush.xpose.msra.mxu0 %v3094
        %5065 = vmatpush.xpose.msra.mxu0 %v3091
        %5066 = vmatpush.xpose.msra.mxu0 %v3088
        %5067 = vmatpush.xpose.msra.mxu0 %v3085
        %5068 = vmatpush.xpose.msra.mxu0 %v3082
        %5069 = vmatpush.xpose.msra.mxu0 %v3079
        %5070 = vmatpush.xpose.msra.mxu0 %v3076
        %5071 = vmatmul.f32.gmra.mxu0 %v1201
        %v5072 = vpop.f32.mrf.mxu0
        %v5073 = vadd.f32 %v1198, %v5072
        %5074 = vdwg.mxu0
        %5075 = vmatpush.xpose.msra.mxu0 %v3169
        %5076 = vmatpush.xpose.msra.mxu0 %v3166
        %5077 = vmatpush.xpose.msra.mxu0 %v3163
        %5078 = vmatpush.xpose.msra.mxu0 %v3160
        %5079 = vmatpush.xpose.msra.mxu0 %v3157
        %5080 = vmatpush.xpose.msra.mxu0 %v3154
        %5081 = vmatpush.xpose.msra.mxu0 %v3151
        %5082 = vmatpush.xpose.msra.mxu0 %v3148
        %5083 = vmatpush.xpose.msra.mxu0 %v3145
        %5084 = vmatpush.xpose.msra.mxu0 %v3142
        %5085 = vmatpush.xpose.msra.mxu0 %v3139
        %5086 = vmatpush.xpose.msra.mxu0 %v3136
        %5087 = vmatpush.xpose.msra.mxu0 %v3133
        %5088 = vmatpush.xpose.msra.mxu0 %v3130
        %5089 = vmatpush.xpose.msra.mxu0 %v3127
        %5090 = vmatpush.xpose.msra.mxu0 %v3124
        %5091 = vmatmul.f32.gmra.mxu0 %v1201
        %v5092 = vpop.f32.mrf.mxu0
        %v5093 = vadd.f32 %v1198, %v5092
        %5094 = vdwg.mxu0
        %5095 = vmatpush.xpose.msra.mxu0 %v3217
        %5096 = vmatpush.xpose.msra.mxu0 %v3214
        %5097 = vmatpush.xpose.msra.mxu0 %v3211
        %5098 = vmatpush.xpose.msra.mxu0 %v3208
        %5099 = vmatpush.xpose.msra.mxu0 %v3205
        %5100 = vmatpush.xpose.msra.mxu0 %v3202
        %5101 = vmatpush.xpose.msra.mxu0 %v3199
        %5102 = vmatpush.xpose.msra.mxu0 %v3196
        %5103 = vmatpush.xpose.msra.mxu0 %v3193
        %5104 = vmatpush.xpose.msra.mxu0 %v3190
        %5105 = vmatpush.xpose.msra.mxu0 %v3187
        %5106 = vmatpush.xpose.msra.mxu0 %v3184
        %5107 = vmatpush.xpose.msra.mxu0 %v3181
        %5108 = vmatpush.xpose.msra.mxu0 %v3178
        %5109 = vmatpush.xpose.msra.mxu0 %v3175
        %5110 = vmatpush.xpose.msra.mxu0 %v3172
        %5111 = vmatmul.f32.gmra.mxu0 %v1201
        %v5112 = vpop.f32.mrf.mxu0
        %v5113 = vadd.f32 %v1198, %v5112
        %5114 = vdwg.mxu0
        %5115 = vmatpush.xpose.msra.mxu0 %v3265
        %5116 = vmatpush.xpose.msra.mxu0 %v3262
        %5117 = vmatpush.xpose.msra.mxu0 %v3259
        %5118 = vmatpush.xpose.msra.mxu0 %v3256
        %5119 = vmatpush.xpose.msra.mxu0 %v3253
        %5120 = vmatpush.xpose.msra.mxu0 %v3250
        %5121 = vmatpush.xpose.msra.mxu0 %v3247
        %5122 = vmatpush.xpose.msra.mxu0 %v3244
        %5123 = vmatpush.xpose.msra.mxu0 %v3241
        %5124 = vmatpush.xpose.msra.mxu0 %v3238
        %5125 = vmatpush.xpose.msra.mxu0 %v3235
        %5126 = vmatpush.xpose.msra.mxu0 %v3232
        %5127 = vmatpush.xpose.msra.mxu0 %v3229
        %5128 = vmatpush.xpose.msra.mxu0 %v3226
        %5129 = vmatpush.xpose.msra.mxu0 %v3223
        %5130 = vmatpush.xpose.msra.mxu0 %v3220
        %5131 = vmatmul.f32.gmra.mxu0 %v1201
        %v5132 = vpop.f32.mrf.mxu0
        %v5133 = vadd.f32 %v1198, %v5132
        %5134 = vdwg.mxu0
        %5135 = vmatpush.xpose.msra.mxu0 %v3313
        %5136 = vmatpush.xpose.msra.mxu0 %v3310
        %5137 = vmatpush.xpose.msra.mxu0 %v3307
        %5138 = vmatpush.xpose.msra.mxu0 %v3304
        %5139 = vmatpush.xpose.msra.mxu0 %v3301
        %5140 = vmatpush.xpose.msra.mxu0 %v3298
        %5141 = vmatpush.xpose.msra.mxu0 %v3295
        %5142 = vmatpush.xpose.msra.mxu0 %v3292
        %5143 = vmatpush.xpose.msra.mxu0 %v3289
        %5144 = vmatpush.xpose.msra.mxu0 %v3286
        %5145 = vmatpush.xpose.msra.mxu0 %v3283
        %5146 = vmatpush.xpose.msra.mxu0 %v3280
        %5147 = vmatpush.xpose.msra.mxu0 %v3277
        %5148 = vmatpush.xpose.msra.mxu0 %v3274
        %5149 = vmatpush.xpose.msra.mxu0 %v3271
        %5150 = vmatpush.xpose.msra.mxu0 %v3268
        %5151 = vmatmul.f32.gmra.mxu0 %v1201
        %v5152 = vpop.f32.mrf.mxu0
        %v5153 = vadd.f32 %v1198, %v5152
        %5154 = vdwg.mxu0
        %5155 = vmatpush.xpose.msra.mxu0 %v3361
        %5156 = vmatpush.xpose.msra.mxu0 %v3358
        %5157 = vmatpush.xpose.msra.mxu0 %v3355
        %5158 = vmatpush.xpose.msra.mxu0 %v3352
        %5159 = vmatpush.xpose.msra.mxu0 %v3349
        %5160 = vmatpush.xpose.msra.mxu0 %v3346
        %5161 = vmatpush.xpose.msra.mxu0 %v3343
        %5162 = vmatpush.xpose.msra.mxu0 %v3340
        %5163 = vmatpush.xpose.msra.mxu0 %v3337
        %5164 = vmatpush.xpose.msra.mxu0 %v3334
        %5165 = vmatpush.xpose.msra.mxu0 %v3331
        %5166 = vmatpush.xpose.msra.mxu0 %v3328
        %5167 = vmatpush.xpose.msra.mxu0 %v3325
        %5168 = vmatpush.xpose.msra.mxu0 %v3322
        %5169 = vmatpush.xpose.msra.mxu0 %v3319
        %5170 = vmatpush.xpose.msra.mxu0 %v3316
        %5171 = vmatmul.f32.gmra.mxu0 %v1201
        %v5172 = vpop.f32.mrf.mxu0
        %v5173 = vadd.f32 %v1198, %v5172
        %5174 = vdwg.mxu0
        %5175 = vmatpush.xpose.msra.mxu0 %v3409
        %5176 = vmatpush.xpose.msra.mxu0 %v3406
        %5177 = vmatpush.xpose.msra.mxu0 %v3403
        %5178 = vmatpush.xpose.msra.mxu0 %v3400
        %5179 = vmatpush.xpose.msra.mxu0 %v3397
        %5180 = vmatpush.xpose.msra.mxu0 %v3394
        %5181 = vmatpush.xpose.msra.mxu0 %v3391
        %5182 = vmatpush.xpose.msra.mxu0 %v3388
        %5183 = vmatpush.xpose.msra.mxu0 %v3385
        %5184 = vmatpush.xpose.msra.mxu0 %v3382
        %5185 = vmatpush.xpose.msra.mxu0 %v3379
        %5186 = vmatpush.xpose.msra.mxu0 %v3376
        %5187 = vmatpush.xpose.msra.mxu0 %v3373
        %5188 = vmatpush.xpose.msra.mxu0 %v3370
        %5189 = vmatpush.xpose.msra.mxu0 %v3367
        %5190 = vmatpush.xpose.msra.mxu0 %v3364
        %5191 = vmatmul.f32.gmra.mxu0 %v1201
        %v5192 = vpop.f32.mrf.mxu0
        %v5193 = vadd.f32 %v1198, %v5192
        %5194 = vdwg.mxu0
        %5195 = vmatpush.xpose.msra.mxu0 %v3457
        %5196 = vmatpush.xpose.msra.mxu0 %v3454
        %5197 = vmatpush.xpose.msra.mxu0 %v3451
        %5198 = vmatpush.xpose.msra.mxu0 %v3448
        %5199 = vmatpush.xpose.msra.mxu0 %v3445
        %5200 = vmatpush.xpose.msra.mxu0 %v3442
        %5201 = vmatpush.xpose.msra.mxu0 %v3439
        %5202 = vmatpush.xpose.msra.mxu0 %v3436
        %5203 = vmatpush.xpose.msra.mxu0 %v3433
        %5204 = vmatpush.xpose.msra.mxu0 %v3430
        %5205 = vmatpush.xpose.msra.mxu0 %v3427
        %5206 = vmatpush.xpose.msra.mxu0 %v3424
        %5207 = vmatpush.xpose.msra.mxu0 %v3421
        %5208 = vmatpush.xpose.msra.mxu0 %v3418
        %5209 = vmatpush.xpose.msra.mxu0 %v3415
        %5210 = vmatpush.xpose.msra.mxu0 %v3412
        %5211 = vmatmul.f32.gmra.mxu0 %v1201
        %v5212 = vpop.f32.mrf.mxu0
        %v5213 = vadd.f32 %v1198, %v5212
        %5214 = vdwg.mxu0
        %5215 = vmatpush.xpose.msra.mxu0 %v3505
        %5216 = vmatpush.xpose.msra.mxu0 %v3502
        %5217 = vmatpush.xpose.msra.mxu0 %v3499
        %5218 = vmatpush.xpose.msra.mxu0 %v3496
        %5219 = vmatpush.xpose.msra.mxu0 %v3493
        %5220 = vmatpush.xpose.msra.mxu0 %v3490
        %5221 = vmatpush.xpose.msra.mxu0 %v3487
        %5222 = vmatpush.xpose.msra.mxu0 %v3484
        %5223 = vmatpush.xpose.msra.mxu0 %v3481
        %5224 = vmatpush.xpose.msra.mxu0 %v3478
        %5225 = vmatpush.xpose.msra.mxu0 %v3475
        %5226 = vmatpush.xpose.msra.mxu0 %v3472
        %5227 = vmatpush.xpose.msra.mxu0 %v3469
        %5228 = vmatpush.xpose.msra.mxu0 %v3466
        %5229 = vmatpush.xpose.msra.mxu0 %v3463
        %5230 = vmatpush.xpose.msra.mxu0 %v3460
        %5231 = vmatmul.f32.gmra.mxu0 %v1201
        %v5232 = vpop.f32.mrf.mxu0
        %v5233 = vadd.f32 %v1198, %v5232
        %5234 = vdwg.mxu0
        %5235 = vmatpush.xpose.msra.mxu0 %v3553
        %5236 = vmatpush.xpose.msra.mxu0 %v3550
        %5237 = vmatpush.xpose.msra.mxu0 %v3547
        %5238 = vmatpush.xpose.msra.mxu0 %v3544
        %5239 = vmatpush.xpose.msra.mxu0 %v3541
        %5240 = vmatpush.xpose.msra.mxu0 %v3538
        %5241 = vmatpush.xpose.msra.mxu0 %v3535
        %5242 = vmatpush.xpose.msra.mxu0 %v3532
        %5243 = vmatpush.xpose.msra.mxu0 %v3529
        %5244 = vmatpush.xpose.msra.mxu0 %v3526
        %5245 = vmatpush.xpose.msra.mxu0 %v3523
        %5246 = vmatpush.xpose.msra.mxu0 %v3520
        %5247 = vmatpush.xpose.msra.mxu0 %v3517
        %5248 = vmatpush.xpose.msra.mxu0 %v3514
        %5249 = vmatpush.xpose.msra.mxu0 %v3511
        %5250 = vmatpush.xpose.msra.mxu0 %v3508
        %5251 = vmatmul.f32.gmra.mxu0 %v1201
        %v5252 = vpop.f32.mrf.mxu0
        %v5253 = vadd.f32 %v1198, %v5252
        %5254 = vdwg.mxu0
        %5255 = vmatpush.xpose.msra.mxu0 %v3601
        %5256 = vmatpush.xpose.msra.mxu0 %v3598
        %5257 = vmatpush.xpose.msra.mxu0 %v3595
        %5258 = vmatpush.xpose.msra.mxu0 %v3592
        %5259 = vmatpush.xpose.msra.mxu0 %v3589
        %5260 = vmatpush.xpose.msra.mxu0 %v3586
        %5261 = vmatpush.xpose.msra.mxu0 %v3583
        %5262 = vmatpush.xpose.msra.mxu0 %v3580
        %5263 = vmatpush.xpose.msra.mxu0 %v3577
        %5264 = vmatpush.xpose.msra.mxu0 %v3574
        %5265 = vmatpush.xpose.msra.mxu0 %v3571
        %5266 = vmatpush.xpose.msra.mxu0 %v3568
        %5267 = vmatpush.xpose.msra.mxu0 %v3565
        %5268 = vmatpush.xpose.msra.mxu0 %v3562
        %5269 = vmatpush.xpose.msra.mxu0 %v3559
        %5270 = vmatpush.xpose.msra.mxu0 %v3556
        %5271 = vmatmul.f32.gmra.mxu0 %v1201
        %v5272 = vpop.f32.mrf.mxu0
        %v5273 = vadd.f32 %v1198, %v5272
        %5274 = vdwg.mxu0
        %5275 = vmatpush.xpose.msra.mxu0 %v3649
        %5276 = vmatpush.xpose.msra.mxu0 %v3646
        %5277 = vmatpush.xpose.msra.mxu0 %v3643
        %5278 = vmatpush.xpose.msra.mxu0 %v3640
        %5279 = vmatpush.xpose.msra.mxu0 %v3637
        %5280 = vmatpush.xpose.msra.mxu0 %v3634
        %5281 = vmatpush.xpose.msra.mxu0 %v3631
        %5282 = vmatpush.xpose.msra.mxu0 %v3628
        %5283 = vmatpush.xpose.msra.mxu0 %v3625
        %5284 = vmatpush.xpose.msra.mxu0 %v3622
        %5285 = vmatpush.xpose.msra.mxu0 %v3619
        %5286 = vmatpush.xpose.msra.mxu0 %v3616
        %5287 = vmatpush.xpose.msra.mxu0 %v3613
        %5288 = vmatpush.xpose.msra.mxu0 %v3610
        %5289 = vmatpush.xpose.msra.mxu0 %v3607
        %5290 = vmatpush.xpose.msra.mxu0 %v3604
        %5291 = vmatmul.f32.gmra.mxu0 %v1201
        %v5292 = vpop.f32.mrf.mxu0
        %v5293 = vadd.f32 %v1198, %v5292
        %5294 = vdwg.mxu0
        %5295 = vmatpush.xpose.msra.mxu0 %v3697
        %5296 = vmatpush.xpose.msra.mxu0 %v3694
        %5297 = vmatpush.xpose.msra.mxu0 %v3691
        %5298 = vmatpush.xpose.msra.mxu0 %v3688
        %5299 = vmatpush.xpose.msra.mxu0 %v3685
        %5300 = vmatpush.xpose.msra.mxu0 %v3682
        %5301 = vmatpush.xpose.msra.mxu0 %v3679
        %5302 = vmatpush.xpose.msra.mxu0 %v3676
        %5303 = vmatpush.xpose.msra.mxu0 %v3673
        %5304 = vmatpush.xpose.msra.mxu0 %v3670
        %5305 = vmatpush.xpose.msra.mxu0 %v3667
        %5306 = vmatpush.xpose.msra.mxu0 %v3664
        %5307 = vmatpush.xpose.msra.mxu0 %v3661
        %5308 = vmatpush.xpose.msra.mxu0 %v3658
        %5309 = vmatpush.xpose.msra.mxu0 %v3655
        %5310 = vmatpush.xpose.msra.mxu0 %v3652
        %5311 = vmatmul.f32.gmra.mxu0 %v1201
        %v5312 = vpop.f32.mrf.mxu0
        %v5313 = vadd.f32 %v1198, %v5312
        %5314 = vdwg.mxu0
        %5315 = vmatpush.xpose.msra.mxu0 %v3745
        %5316 = vmatpush.xpose.msra.mxu0 %v3742
        %5317 = vmatpush.xpose.msra.mxu0 %v3739
        %5318 = vmatpush.xpose.msra.mxu0 %v3736
        %5319 = vmatpush.xpose.msra.mxu0 %v3733
        %5320 = vmatpush.xpose.msra.mxu0 %v3730
        %5321 = vmatpush.xpose.msra.mxu0 %v3727
        %5322 = vmatpush.xpose.msra.mxu0 %v3724
        %5323 = vmatpush.xpose.msra.mxu0 %v3721
        %5324 = vmatpush.xpose.msra.mxu0 %v3718
        %5325 = vmatpush.xpose.msra.mxu0 %v3715
        %5326 = vmatpush.xpose.msra.mxu0 %v3712
        %5327 = vmatpush.xpose.msra.mxu0 %v3709
        %5328 = vmatpush.xpose.msra.mxu0 %v3706
        %5329 = vmatpush.xpose.msra.mxu0 %v3703
        %5330 = vmatpush.xpose.msra.mxu0 %v3700
        %5331 = vmatmul.f32.gmra.mxu0 %v1201
        %v5332 = vpop.f32.mrf.mxu0
        %v5333 = vadd.f32 %v1198, %v5332
        %5334 = vdwg.mxu0
        %5335 = vmatpush.xpose.msra.mxu0 %v3793
        %5336 = vmatpush.xpose.msra.mxu0 %v3790
        %5337 = vmatpush.xpose.msra.mxu0 %v3787
        %5338 = vmatpush.xpose.msra.mxu0 %v3784
        %5339 = vmatpush.xpose.msra.mxu0 %v3781
        %5340 = vmatpush.xpose.msra.mxu0 %v3778
        %5341 = vmatpush.xpose.msra.mxu0 %v3775
        %5342 = vmatpush.xpose.msra.mxu0 %v3772
        %5343 = vmatpush.xpose.msra.mxu0 %v3769
        %5344 = vmatpush.xpose.msra.mxu0 %v3766
        %5345 = vmatpush.xpose.msra.mxu0 %v3763
        %5346 = vmatpush.xpose.msra.mxu0 %v3760
        %5347 = vmatpush.xpose.msra.mxu0 %v3757
        %5348 = vmatpush.xpose.msra.mxu0 %v3754
        %5349 = vmatpush.xpose.msra.mxu0 %v3751
        %5350 = vmatpush.xpose.msra.mxu0 %v3748
        %5351 = vmatmul.f32.gmra.mxu0 %v1201
        %v5352 = vpop.f32.mrf.mxu0
        %v5353 = vadd.f32 %v1198, %v5352
        %5354 = vdwg.mxu0
        %5355 = vmatpush.xpose.msra.mxu0 %v3841
        %5356 = vmatpush.xpose.msra.mxu0 %v3838
        %5357 = vmatpush.xpose.msra.mxu0 %v3835
        %5358 = vmatpush.xpose.msra.mxu0 %v3832
        %5359 = vmatpush.xpose.msra.mxu0 %v3829
        %5360 = vmatpush.xpose.msra.mxu0 %v3826
        %5361 = vmatpush.xpose.msra.mxu0 %v3823
        %5362 = vmatpush.xpose.msra.mxu0 %v3820
        %5363 = vmatpush.xpose.msra.mxu0 %v3817
        %5364 = vmatpush.xpose.msra.mxu0 %v3814
        %5365 = vmatpush.xpose.msra.mxu0 %v3811
        %5366 = vmatpush.xpose.msra.mxu0 %v3808
        %5367 = vmatpush.xpose.msra.mxu0 %v3805
        %5368 = vmatpush.xpose.msra.mxu0 %v3802
        %5369 = vmatpush.xpose.msra.mxu0 %v3799
        %5370 = vmatpush.xpose.msra.mxu0 %v3796
        %5371 = vmatmul.f32.gmra.mxu0 %v1201
        %v5372 = vpop.f32.mrf.mxu0
        %v5373 = vadd.f32 %v1198, %v5372
        %5374 = vdwg.mxu0
        %5375 = vmatpush.xpose.msra.mxu0 %v3889
        %5376 = vmatpush.xpose.msra.mxu0 %v3886
        %5377 = vmatpush.xpose.msra.mxu0 %v3883
        %5378 = vmatpush.xpose.msra.mxu0 %v3880
        %5379 = vmatpush.xpose.msra.mxu0 %v3877
        %5380 = vmatpush.xpose.msra.mxu0 %v3874
        %5381 = vmatpush.xpose.msra.mxu0 %v3871
        %5382 = vmatpush.xpose.msra.mxu0 %v3868
        %5383 = vmatpush.xpose.msra.mxu0 %v3865
        %5384 = vmatpush.xpose.msra.mxu0 %v3862
        %5385 = vmatpush.xpose.msra.mxu0 %v3859
        %5386 = vmatpush.xpose.msra.mxu0 %v3856
        %5387 = vmatpush.xpose.msra.mxu0 %v3853
        %5388 = vmatpush.xpose.msra.mxu0 %v3850
        %5389 = vmatpush.xpose.msra.mxu0 %v3847
        %5390 = vmatpush.xpose.msra.mxu0 %v3844
        %5391 = vmatmul.f32.gmra.mxu0 %v1201
        %v5392 = vpop.f32.mrf.mxu0
        %v5393 = vadd.f32 %v1198, %v5392
        %5394 = vdwg.mxu0
        %5395 = vmatpush.xpose.msra.mxu0 %v3937
        %5396 = vmatpush.xpose.msra.mxu0 %v3934
        %5397 = vmatpush.xpose.msra.mxu0 %v3931
        %5398 = vmatpush.xpose.msra.mxu0 %v3928
        %5399 = vmatpush.xpose.msra.mxu0 %v3925
        %5400 = vmatpush.xpose.msra.mxu0 %v3922
        %5401 = vmatpush.xpose.msra.mxu0 %v3919
        %5402 = vmatpush.xpose.msra.mxu0 %v3916
        %5403 = vmatpush.xpose.msra.mxu0 %v3913
        %5404 = vmatpush.xpose.msra.mxu0 %v3910
        %5405 = vmatpush.xpose.msra.mxu0 %v3907
        %5406 = vmatpush.xpose.msra.mxu0 %v3904
        %5407 = vmatpush.xpose.msra.mxu0 %v3901
        %5408 = vmatpush.xpose.msra.mxu0 %v3898
        %5409 = vmatpush.xpose.msra.mxu0 %v3895
        %5410 = vmatpush.xpose.msra.mxu0 %v3892
        %5411 = vmatmul.f32.gmra.mxu0 %v1201
        %v5412 = vpop.f32.mrf.mxu0
        %v5413 = vadd.f32 %v1198, %v5412
        %5414 = vdwg.mxu0
        %5415 = vmatpush.xpose.msra.mxu0 %v3985
        %5416 = vmatpush.xpose.msra.mxu0 %v3982
        %5417 = vmatpush.xpose.msra.mxu0 %v3979
        %5418 = vmatpush.xpose.msra.mxu0 %v3976
        %5419 = vmatpush.xpose.msra.mxu0 %v3973
        %5420 = vmatpush.xpose.msra.mxu0 %v3970
        %5421 = vmatpush.xpose.msra.mxu0 %v3967
        %5422 = vmatpush.xpose.msra.mxu0 %v3964
        %5423 = vmatpush.xpose.msra.mxu0 %v3961
        %5424 = vmatpush.xpose.msra.mxu0 %v3958
        %5425 = vmatpush.xpose.msra.mxu0 %v3955
        %5426 = vmatpush.xpose.msra.mxu0 %v3952
        %5427 = vmatpush.xpose.msra.mxu0 %v3949
        %5428 = vmatpush.xpose.msra.mxu0 %v3946
        %5429 = vmatpush.xpose.msra.mxu0 %v3943
        %5430 = vmatpush.xpose.msra.mxu0 %v3940
        %5431 = vmatmul.f32.gmra.mxu0 %v1201
        %v5432 = vpop.f32.mrf.mxu0
        %v5433 = vadd.f32 %v1198, %v5432
        %5434 = vdwg.mxu0
        %5435 = vmatpush.xpose.msra.mxu0 %v4033
        %5436 = vmatpush.xpose.msra.mxu0 %v4030
        %5437 = vmatpush.xpose.msra.mxu0 %v4027
        %5438 = vmatpush.xpose.msra.mxu0 %v4024
        %5439 = vmatpush.xpose.msra.mxu0 %v4021
        %5440 = vmatpush.xpose.msra.mxu0 %v4018
        %5441 = vmatpush.xpose.msra.mxu0 %v4015
        %5442 = vmatpush.xpose.msra.mxu0 %v4012
        %5443 = vmatpush.xpose.msra.mxu0 %v4009
        %5444 = vmatpush.xpose.msra.mxu0 %v4006
        %5445 = vmatpush.xpose.msra.mxu0 %v4003
        %5446 = vmatpush.xpose.msra.mxu0 %v4000
        %5447 = vmatpush.xpose.msra.mxu0 %v3997
        %5448 = vmatpush.xpose.msra.mxu0 %v3994
        %5449 = vmatpush.xpose.msra.mxu0 %v3991
        %5450 = vmatpush.xpose.msra.mxu0 %v3988
        %5451 = vmatmul.f32.gmra.mxu0 %v1201
        %v5452 = vpop.f32.mrf.mxu0
        %v5453 = vadd.f32 %v1198, %v5452
        %5454 = vdwg.mxu0
        %5455 = vmatpush.xpose.msra.mxu0 %v4081
        %5456 = vmatpush.xpose.msra.mxu0 %v4078
        %5457 = vmatpush.xpose.msra.mxu0 %v4075
        %5458 = vmatpush.xpose.msra.mxu0 %v4072
        %5459 = vmatpush.xpose.msra.mxu0 %v4069
        %5460 = vmatpush.xpose.msra.mxu0 %v4066
        %5461 = vmatpush.xpose.msra.mxu0 %v4063
        %5462 = vmatpush.xpose.msra.mxu0 %v4060
        %5463 = vmatpush.xpose.msra.mxu0 %v4057
        %5464 = vmatpush.xpose.msra.mxu0 %v4054
        %5465 = vmatpush.xpose.msra.mxu0 %v4051
        %5466 = vmatpush.xpose.msra.mxu0 %v4048
        %5467 = vmatpush.xpose.msra.mxu0 %v4045
        %5468 = vmatpush.xpose.msra.mxu0 %v4042
        %5469 = vmatpush.xpose.msra.mxu0 %v4039
        %5470 = vmatpush.xpose.msra.mxu0 %v4036
        %5471 = vmatmul.f32.gmra.mxu0 %v1201
        %v5472 = vpop.f32.mrf.mxu0
        %v5473 = vadd.f32 %v1198, %v5472
        %5474 = vdwg.mxu0
        %5475 = vmatpush.xpose.msra.mxu0 %v4129
        %5476 = vmatpush.xpose.msra.mxu0 %v4126
        %5477 = vmatpush.xpose.msra.mxu0 %v4123
        %5478 = vmatpush.xpose.msra.mxu0 %v4120
        %5479 = vmatpush.xpose.msra.mxu0 %v4117
        %5480 = vmatpush.xpose.msra.mxu0 %v4114
        %5481 = vmatpush.xpose.msra.mxu0 %v4111
        %5482 = vmatpush.xpose.msra.mxu0 %v4108
        %5483 = vmatpush.xpose.msra.mxu0 %v4105
        %5484 = vmatpush.xpose.msra.mxu0 %v4102
        %5485 = vmatpush.xpose.msra.mxu0 %v4099
        %5486 = vmatpush.xpose.msra.mxu0 %v4096
        %5487 = vmatpush.xpose.msra.mxu0 %v4093
        %5488 = vmatpush.xpose.msra.mxu0 %v4090
        %5489 = vmatpush.xpose.msra.mxu0 %v4087
        %5490 = vmatpush.xpose.msra.mxu0 %v4084
        %5491 = vmatmul.f32.gmra.mxu0 %v1201
        %v5492 = vpop.f32.mrf.mxu0
        %v5493 = vadd.f32 %v1198, %v5492
        %5494 = vdwg.mxu0
        %5495 = vmatpush.xpose.msra.mxu0 %v4177
        %5496 = vmatpush.xpose.msra.mxu0 %v4174
        %5497 = vmatpush.xpose.msra.mxu0 %v4171
        %5498 = vmatpush.xpose.msra.mxu0 %v4168
        %5499 = vmatpush.xpose.msra.mxu0 %v4165
        %5500 = vmatpush.xpose.msra.mxu0 %v4162
        %5501 = vmatpush.xpose.msra.mxu0 %v4159
        %5502 = vmatpush.xpose.msra.mxu0 %v4156
        %5503 = vmatpush.xpose.msra.mxu0 %v4153
        %5504 = vmatpush.xpose.msra.mxu0 %v4150
        %5505 = vmatpush.xpose.msra.mxu0 %v4147
        %5506 = vmatpush.xpose.msra.mxu0 %v4144
        %5507 = vmatpush.xpose.msra.mxu0 %v4141
        %5508 = vmatpush.xpose.msra.mxu0 %v4138
        %5509 = vmatpush.xpose.msra.mxu0 %v4135
        %5510 = vmatpush.xpose.msra.mxu0 %v4132
        %5511 = vmatmul.f32.gmra.mxu0 %v1201
        %v5512 = vpop.f32.mrf.mxu0
        %v5513 = vadd.f32 %v1198, %v5512
        %5514 = vdwg.mxu0
        %5515 = vmatpush.xpose.msra.mxu0 %v4225
        %5516 = vmatpush.xpose.msra.mxu0 %v4222
        %5517 = vmatpush.xpose.msra.mxu0 %v4219
        %5518 = vmatpush.xpose.msra.mxu0 %v4216
        %5519 = vmatpush.xpose.msra.mxu0 %v4213
        %5520 = vmatpush.xpose.msra.mxu0 %v4210
        %5521 = vmatpush.xpose.msra.mxu0 %v4207
        %5522 = vmatpush.xpose.msra.mxu0 %v4204
        %5523 = vmatpush.xpose.msra.mxu0 %v4201
        %5524 = vmatpush.xpose.msra.mxu0 %v4198
        %5525 = vmatpush.xpose.msra.mxu0 %v4195
        %5526 = vmatpush.xpose.msra.mxu0 %v4192
        %5527 = vmatpush.xpose.msra.mxu0 %v4189
        %5528 = vmatpush.xpose.msra.mxu0 %v4186
        %5529 = vmatpush.xpose.msra.mxu0 %v4183
        %5530 = vmatpush.xpose.msra.mxu0 %v4180
        %5531 = vmatmul.f32.gmra.mxu0 %v1201
        %v5532 = vpop.f32.mrf.mxu0
        %v5533 = vadd.f32 %v1198, %v5532
        %5534 = vdwg.mxu0
        %5535 = vmatpush.xpose.msra.mxu0 %v4273
        %5536 = vmatpush.xpose.msra.mxu0 %v4270
        %5537 = vmatpush.xpose.msra.mxu0 %v4267
        %5538 = vmatpush.xpose.msra.mxu0 %v4264
        %5539 = vmatpush.xpose.msra.mxu0 %v4261
        %5540 = vmatpush.xpose.msra.mxu0 %v4258
        %5541 = vmatpush.xpose.msra.mxu0 %v4255
        %5542 = vmatpush.xpose.msra.mxu0 %v4252
        %5543 = vmatpush.xpose.msra.mxu0 %v4249
        %5544 = vmatpush.xpose.msra.mxu0 %v4246
        %5545 = vmatpush.xpose.msra.mxu0 %v4243
        %5546 = vmatpush.xpose.msra.mxu0 %v4240
        %5547 = vmatpush.xpose.msra.mxu0 %v4237
        %5548 = vmatpush.xpose.msra.mxu0 %v4234
        %5549 = vmatpush.xpose.msra.mxu0 %v4231
        %5550 = vmatpush.xpose.msra.mxu0 %v4228
        %5551 = vmatmul.f32.gmra.mxu0 %v1201
        %v5552 = vpop.f32.mrf.mxu0
        %v5553 = vadd.f32 %v1198, %v5552
        %5554 = vdwg.mxu0
        %v5619 = vrot.slane %v4313, 7
        %v5620 = vrot.slane %v4333, 6
        %v5621 = vrot.slane %v4353, 5
        %v5622 = vrot.slane %v4373, 4
        %v5623 = vrot.slane %v4393, 3
        %v5624 = vrot.slane %v4413, 2
        %v5625 = vrot.slane %v4433, 1
        %v5626 = vrot.slane %v4473, 7
        %v5627 = vrot.slane %v4493, 6
        %v5628 = vrot.slane %v4513, 5
        %v5629 = vrot.slane %v4533, 4
        %v5630 = vrot.slane %v4553, 3
        %v5631 = vrot.slane %v4573, 2
        %v5632 = vrot.slane %v4593, 1
        %v5633 = vrot.slane %v4633, 7
        %v5634 = vrot.slane %v4653, 6
        %v5635 = vrot.slane %v4673, 5
        %v5636 = vrot.slane %v4693, 4
        %v5637 = vrot.slane %v4713, 3
        %v5638 = vrot.slane %v4733, 2
        %v5639 = vrot.slane %v4753, 1
        %v5640 = vrot.slane %v4793, 7
        %v5641 = vrot.slane %v4813, 6
        %v5642 = vrot.slane %v4833, 5
        %v5643 = vrot.slane %v4853, 4
        %v5644 = vrot.slane %v4873, 3
        %v5645 = vrot.slane %v4893, 2
        %v5646 = vrot.slane %v4913, 1
        %v5647 = vrot.slane %v4953, 7
        %v5648 = vrot.slane %v4973, 6
        %v5649 = vrot.slane %v4993, 5
        %v5650 = vrot.slane %v5013, 4
        %v5651 = vrot.slane %v5033, 3
        %v5652 = vrot.slane %v5053, 2
        %v5653 = vrot.slane %v5073, 1
        %v5654 = vrot.slane %v5113, 7
        %v5655 = vrot.slane %v5133, 6
        %v5656 = vrot.slane %v5153, 5
        %v5657 = vrot.slane %v5173, 4
        %v5658 = vrot.slane %v5193, 3
        %v5659 = vrot.slane %v5213, 2
        %v5660 = vrot.slane %v5233, 1
        %v5661 = vrot.slane %v5273, 7
        %v5662 = vrot.slane %v5293, 6
        %v5663 = vrot.slane %v5313, 5
        %v5664 = vrot.slane %v5333, 4
        %v5665 = vrot.slane %v5353, 3
        %v5666 = vrot.slane %v5373, 2
        %v5667 = vrot.slane %v5393, 1
        %v5668 = vrot.slane %v5433, 7
        %v5669 = vrot.slane %v5453, 6
        %v5670 = vrot.slane %v5473, 5
        %v5671 = vrot.slane %v5493, 4
        %v5672 = vrot.slane %v5513, 3
        %v5673 = vrot.slane %v5533, 2
        %v5674 = vrot.slane %v5553, 1
        %vm5675 = vcmask 1040384
        %v5676 = vsel %vm5675, %v4293, %v5619
        %vm5677 = vcmask 1042434
        %v5678 = vsel %vm5677, %v5620, %v5621
        %vm5679 = vcmask 1041408
        %v5680 = vsel %vm5679, %v5676, %v5678
        %vm5681 = vcmask 1044484
        %v5682 = vsel %vm5681, %v5622, %v5623
        %vm5683 = vcmask 1046534
        %v5684 = vsel %vm5683, %v5624, %v5625
        %vm5685 = vcmask 1045508
        %v5686 = vsel %vm5685, %v5682, %v5684
        %vm5687 = vcmask 1043456
        %v5688 = vsel %vm5687, %v5680, %v5686
        %v5689 = vsel %vm5675, %v4453, %v5626
        %v5690 = vsel %vm5677, %v5627, %v5628
        %v5691 = vsel %vm5679, %v5689, %v5690
        %v5692 = vsel %vm5681, %v5629, %v5630
        %v5693 = vsel %vm5683, %v5631, %v5632
        %v5694 = vsel %vm5685, %v5692, %v5693
        %v5695 = vsel %vm5687, %v5691, %v5694
        %v5696 = vsel %vm5675, %v4613, %v5633
        %v5697 = vsel %vm5677, %v5634, %v5635
        %v5698 = vsel %vm5679, %v5696, %v5697
        %v5699 = vsel %vm5681, %v5636, %v5637
        %v5700 = vsel %vm5683, %v5638, %v5639
        %v5701 = vsel %vm5685, %v5699, %v5700
        %v5702 = vsel %vm5687, %v5698, %v5701
        %v5703 = vsel %vm5675, %v4773, %v5640
        %v5704 = vsel %vm5677, %v5641, %v5642
        %v5705 = vsel %vm5679, %v5703, %v5704
        %v5706 = vsel %vm5681, %v5643, %v5644
        %v5707 = vsel %vm5683, %v5645, %v5646
        %v5708 = vsel %vm5685, %v5706, %v5707
        %v5709 = vsel %vm5687, %v5705, %v5708
        %v5710 = vsel %vm5675, %v4933, %v5647
        %v5711 = vsel %vm5677, %v5648, %v5649
        %v5712 = vsel %vm5679, %v5710, %v5711
        %v5713 = vsel %vm5681, %v5650, %v5651
        %v5714 = vsel %vm5683, %v5652, %v5653
        %v5715 = vsel %vm5685, %v5713, %v5714
        %v5716 = vsel %vm5687, %v5712, %v5715
        %v5717 = vsel %vm5675, %v5093, %v5654
        %v5718 = vsel %vm5677, %v5655, %v5656
        %v5719 = vsel %vm5679, %v5717, %v5718
        %v5720 = vsel %vm5681, %v5657, %v5658
        %v5721 = vsel %vm5683, %v5659, %v5660
        %v5722 = vsel %vm5685, %v5720, %v5721
        %v5723 = vsel %vm5687, %v5719, %v5722
        %v5724 = vsel %vm5675, %v5253, %v5661
        %v5725 = vsel %vm5677, %v5662, %v5663
        %v5726 = vsel %vm5679, %v5724, %v5725
        %v5727 = vsel %vm5681, %v5664, %v5665
        %v5728 = vsel %vm5683, %v5666, %v5667
        %v5729 = vsel %vm5685, %v5727, %v5728
        %v5730 = vsel %vm5687, %v5726, %v5729
        %v5731 = vsel %vm5675, %v5413, %v5668
        %v5732 = vsel %vm5677, %v5669, %v5670
        %v5733 = vsel %vm5679, %v5731, %v5732
        %v5734 = vsel %vm5681, %v5671, %v5672
        %v5735 = vsel %vm5683, %v5673, %v5674
        %v5736 = vsel %vm5685, %v5734, %v5735
        %v5737 = vsel %vm5687, %v5733, %v5736
        %5746 = vst [vmem:[%s165] sm:$0xff] %v5688
        %5747 = vst [vmem:[%s165 + $0x8] sm:$0xff] %v5695
        %5748 = vst [vmem:[%s165 + $0x10] sm:$0xff] %v5702
        %5749 = vst [vmem:[%s165 + $0x18] sm:$0xff] %v5709
        %5750 = vst [vmem:[%s165 + $0x20] sm:$0xff] %v5716
        %5751 = vst [vmem:[%s165 + $0x28] sm:$0xff] %v5723
        %5752 = vst [vmem:[%s165 + $0x30] sm:$0xff] %v5730
        %5753 = vst [vmem:[%s165 + $0x38] sm:$0xff] %v5737
        %s5754 = sand.u32 %s94, 1
        %s5755 = scalar_lea.sflag [#allocation4], %s5754
        %s5756 = sand.u32 %s94, 1
        %s5757 = smul.addr %s5756, 64
        %s5758 = scalar_lea.vmem [#allocation3], %s5757
        // Predicated region
        $region33: #{tpu_custom_call.1} parent=31 // pred_check
          %p5759 = pneg %p104
        $region34: #{tpu_custom_call.1} parent=31 // pred_check_branch
          %5761 = sbr.rel (%p5759) target = $region36
        $region35: #{tpu_custom_call.1} parent=31 // pred_region
          %5763 = vsyncadd %s5755, 0
          %s5764 = smul.addr %s18, 64
          %s5765 = scalar_lea.hbm %s3, %s5764
          %s5767 = sshll.u32 %s5758, 4
          %s5768 = int_to_ptr.vmem [resolvable:$true] %s5767
          %s5769 = sshll.u32 %s5765, 4
          %s5770 = int_to_ptr.hbm [resolvable:$true] %s5769
          %5772 = dma.vmem_to_hbm [thread:$0]  %s5768, 1024, %s5770, %s5755
        $region36: #{tpu_custom_call.1} parent=31 // pred_fallthru
          _
      $region32: #{tpu_custom_call.1} parent=5 // pred_fallthru
        _
      %p5773 = scmp.le.s32.totalorder 2, %s13
      // Predicated region
      $region37: #{tpu_custom_call.1} parent=5 // pred_check
        %p5774 = pneg %p5773
      $region38: #{tpu_custom_call.1} parent=5 // pred_check_branch
        %5776 = sbr.rel (%p5774) target = $region40
      $region39: #{tpu_custom_call.1} parent=5 // pred_region
        %s5777 = ssub.s32 %s13, 2
        // Predicated region
        $region41: #{tpu_custom_call.1} parent=39 // pred_check
          %p5778 = pneg %p110
        $region42: #{tpu_custom_call.1} parent=39 // pred_check_branch
          %5780 = sbr.rel (%p5778) target = $region44
        $region43: #{tpu_custom_call.1} parent=39 // pred_region
          %s5781 = sand.u32 %s95, 1
          %s5782 = scalar_lea.sflag [#allocation4], %s5781
          %s5783 = sand.u32 %s95, 1
          %s5784 = smul.addr %s5783, 64
          %s5785 = scalar_lea.vmem [#allocation3], %s5784
          %5787 = dma.done %s5782, 1024
        $region44: #{tpu_custom_call.1} parent=39 // pred_fallthru
          _
      $region40: #{tpu_custom_call.1} parent=5 // pred_fallthru
        _
    $region6: #{tpu_custom_call.1} parent=1 // loop_footer
      %s17 = sadd.s32 1, %s13
    $region7: #{tpu_custom_call.1} parent=1 // loop_footer_branch
      %12 = sbr.rel target = $region3
    $region8: #{tpu_custom_call.1} parent=1 // loop_exit
      _
    %5788 = vsyncpa [#allocation4], 1
    %s5789 = scalar_lea.sflag [#allocation4], 1
    %5790 = vsyncpa %s5789, 1

</llo_original>
